<compile_context>
chip_gen: v6e
topology: v6e:2x2x1
jax: 0.10.0
libtpu: 0.0.40
codegen_flags: <defaults>
</compile_context>

<pallas_src>
import functools

import jax
import jax.numpy as jnp
from jax.experimental import pallas as pl
from jax.experimental.pallas import tpu as pltpu

INPUT_DIM = 2      # cat([r, t], axis=1)
OUTPUT_DIM = 1
N_UNITS = 128
N_HIDDEN = 4       # lays - 1 = 5 - 1


def _mlp_kernel(x_ref, w_in_ref, b_in_ref, wh_ref, bh_ref, w_out_t_ref,
                o_ref, *, bf16_tanh):
    x = x_ref[...]                       # (TM, 2) f32, columns = [r | t]
    r = x[:, 0:1]
    t = x[:, 1:2]

    # Input layer Linear(2,128)+tanh: two VPU broadcast-FMAs instead of a
    # degenerate K=2 MXU matmul.  Kept f32 (tiny; v5e has no bf16 VPU).
    h = jnp.tanh(r * w_in_ref[0:1, :] + t * w_in_ref[1:2, :] + b_in_ref[...])
    h = h.astype(jnp.bfloat16)

    # 4 hidden Linear(128,128)+tanh: bf16 operands, f32 MXU accumulation.
    for i in range(N_HIDDEN):
        acc = jnp.dot(h, wh_ref[i], preferred_element_type=jnp.float32)
        acc = acc + bh_ref[i]
        if bf16_tanh:                    # v6e/v7x: bf16 EUP, half the pushes
            h = jnp.tanh(acc.astype(jnp.bfloat16))
        else:                            # v5e/older: keep tanh in f32
            h = jnp.tanh(acc).astype(jnp.bfloat16)

    # Output layer Linear(128,1): VPU multiply + lane reduction in f32
    # (no MXU pass wasted on a single output column).  b_out added in wrapper.
    o_ref[...] = jnp.sum(h.astype(jnp.float32) * w_out_t_ref[...],
                         axis=-1, keepdims=True)


def _round_up(x, m):
    return pl.cdiv(x, m) * m


def _default_bf16_tanh():
    try:
        kind = jax.devices()[0].device_kind.lower()
    except Exception:
        return False
    return ("v6" in kind) or ("v7" in kind)


def _choose_tile(n, tm):
    # Sublane-aligned tiles; never bigger than the (padded) batch.
    tm = max(8, min(_round_up(tm, 8), _round_up(n, 8)))
    # Keep >= 2 grid steps when the batch allows so dimension_semantics=
    # ("parallel",) actually shards the batch across both v7x TensorCores.
    if n > 256 and pl.cdiv(n, tm) < 2:
        tm = _round_up(pl.cdiv(n, 2), 128)
    return tm


def net_forward(r, t, params, *, tm=1024, bf16_tanh=None):
    """Pallas implementation of Net.forward(r, t).

    r, t: float32 arrays of shape (N, 1).  Returns (N, 1) float32.
    """
    if bf16_tanh is None:
        bf16_tanh = _default_bf16_tanh()

    r = r.astype(jnp.float32)
    t = t.astype(jnp.float32)
    n = r.shape[0]

    tm = _choose_tile(n, tm)
    n_pad = _round_up(n, tm)

    # Pack [r | t] into one (n_pad, 2) array: one lane-padded block and one
    # DMA per grid step.  Padded rows are computed and sliced off afterwards.
    x = jnp.concatenate([r, t], axis=1)
    if n_pad != n:
        x = jnp.pad(x, ((0, n_pad - n), (0, 0)))

    (w_in, b_in) = params[0]
    hidden = params[1:1 + N_HIDDEN]
    (w_out, b_out) = params[-1]

    w_in = w_in.astype(jnp.float32)                               # (2, 128)
    b_in = b_in.reshape(1, N_UNITS).astype(jnp.float32)           # (1, 128)
    wh = jnp.stack([w.astype(jnp.bfloat16) for w, _ in hidden])   # (4,128,128)
    bh = jnp.stack([b.reshape(1, N_UNITS).astype(jnp.float32)
                    for _, b in hidden])                          # (4,1,128)
    w_out_t = w_out.reshape(1, N_UNITS).astype(jnp.float32)       # (1, 128)
    b_out = b_out.reshape(1, OUTPUT_DIM).astype(jnp.float32)      # (1, 1)

    def resident(shape):
        # Full-array block, same block every grid step -> loaded once, stays hot.
        zeros = (0,) * len(shape)
        return pl.BlockSpec(shape, lambda i: zeros)

    in_specs = [
        pl.BlockSpec((tm, INPUT_DIM), lambda i: (i, 0)),   # packed [r|t] tile
        resident((INPUT_DIM, N_UNITS)),                    # w_in        (f32)
        resident((1, N_UNITS)),                            # b_in        (f32)
        resident((N_HIDDEN, N_UNITS, N_UNITS)),            # hidden W   (bf16)
        resident((N_HIDDEN, 1, N_UNITS)),                  # hidden b    (f32)
        resident((1, N_UNITS)),                            # w_out^T     (f32)
    ]
    out_spec = pl.BlockSpec((tm, OUTPUT_DIM), lambda i: (i, 0))

    weight_bytes = (2 * N_HIDDEN * N_UNITS * N_UNITS                 # bf16
                    + 4 * (INPUT_DIM * N_UNITS + N_UNITS
                           + N_HIDDEN * N_UNITS + N_UNITS))          # f32
    cost = pl.CostEstimate(
        flops=2 * n_pad * (INPUT_DIM * N_UNITS
                           + N_HIDDEN * N_UNITS * N_UNITS
                           + N_UNITS),
        transcendentals=(1 + N_HIDDEN) * n_pad * N_UNITS,
        bytes_accessed=weight_bytes + 4 * n_pad * (INPUT_DIM + OUTPUT_DIM),
    )

    kernel = functools.partial(_mlp_kernel, bf16_tanh=bf16_tanh)

    out = pl.pallas_call(
        kernel,
        out_shape=jax.ShapeDtypeStruct((n_pad, OUTPUT_DIM), jnp.float32),
        grid=(n_pad // tm,),
        in_specs=in_specs,
        out_specs=out_spec,
        compiler_params=pltpu.CompilerParams(
            dimension_semantics=("parallel",),
            # Explicit headroom for large tiles on v5e's 16 MiB default scope.
            vmem_limit_bytes=32 * 1024 * 1024,
        ),
        cost_estimate=cost,
    )(x, w_in, b_in, wh, bh, w_out_t)

    # b_out is 4 bytes — cheaper as a wrapper add than a (1,1) VMEM block.
    return out[:n] + b_out


def init_params(key):
    """Deterministic Xavier-normal weights, zero biases (matches Net.__init__)."""
    def xavier(k, fan_in, fan_out):
        std = (2.0 / (fan_in + fan_out)) ** 0.5
        return std * jax.random.normal(k, (fan_in, fan_out), dtype=jnp.float32)

    keys = jax.random.split(key, 1 + N_HIDDEN + 1)
    params = [(xavier(keys[0], INPUT_DIM, N_UNITS),
               jnp.zeros((1, N_UNITS), jnp.float32))]
    for i in range(N_HIDDEN):
        params.append((xavier(keys[1 + i], N_UNITS, N_UNITS),
                       jnp.zeros((1, N_UNITS), jnp.float32)))
    params.append((xavier(keys[1 + N_HIDDEN], N_UNITS, OUTPUT_DIM),
                   jnp.zeros((1, OUTPUT_DIM), jnp.float32)))
    return params


def reference_forward(r, t, params, *, bf16_dots=True, bf16_tanh=False):
    """Pure-JAX reference.  With bf16_dots/bf16_tanh it mirrors the kernel's
    mixed-precision recipe, so the comparison isolates kernel bugs from the
    expected bf16 rounding of the MXU path."""
    (w_in, b_in) = params[0]
    hidden = params[1:1 + N_HIDDEN]
    (w_out, b_out) = params[-1]
    r = r.astype(jnp.float32)
    t = t.astype(jnp.float32)
    h = jnp.tanh(r * w_in[0:1, :] + t * w_in[1:2, :] + b_in.reshape(1, -1))
    for w, b in hidden:
        if bf16_dots:
            acc = jnp.dot(h.astype(jnp.bfloat16), w.astype(jnp.bfloat16),
                          preferred_element_type=jnp.float32)
        else:
            acc = jnp.dot(h, w, preferred_element_type=jnp.float32)
        acc = acc + b.reshape(1, -1)
        if bf16_tanh:
            h = jnp.tanh(acc.astype(jnp.bfloat16)).astype(jnp.float32)
        else:
            h = jnp.tanh(acc)
    out = jnp.sum(h * w_out.reshape(1, -1), axis=-1, keepdims=True)
    return out + b_out.reshape(1, -1)


if __name__ == "__main__":
    key = jax.random.PRNGKey(0)
    k_params, k_r, k_t = jax.random.split(key, 3)

    params = init_params(k_params)

    # Collocation-point style batch: exercises padding plus a >=2-step grid
    # (tm auto-shrinks to 512 here so both v7x TensorCores get a tile).
    N = 1000
    r = jax.random.uniform(k_r, (N, 1), dtype=jnp.float32)
    t = jax.random.uniform(k_t, (N, 1), dtype=jnp.float32)

    bf16_tanh = _default_bf16_tanh()
    out = net_forward(r, t, params, tm=1024, bf16_tanh=bf16_tanh)
    out = jax.block_until_ready(out)

    # Compare against the same mixed-precision recipe in plain JAX; tolerance
    # covers bf16 tanh / accumulation-order differences between XLA and Mosaic.
    ref = reference_forward(r, t, params, bf16_dots=True, bf16_tanh=bf16_tanh)
    assert out.shape == (N, OUTPUT_DIM)
    assert bool(jnp.all(jnp.isfinite(out)))
    assert jnp.allclose(out, ref, atol=2e-2, rtol=2e-2), "mismatch vs reference"

    # TODO(synk): train_loop / phy_loss / rmax_cbounds need autograd
    # (torch.autograd.grad) and Adam; only the forward pass is a Pallas kernel.
    # TODO(synk): padded batch rows are computed and sliced off — mask them out
    # of any reduction if this kernel is reused inside a loss/autograd pipeline.
    print("KERNEL_OK")
</pallas_src>

<mosaic_0001>
module attributes {stable_mosaic.version = 11 : i64} {
  func.func @_mlp_kernel(%arg0: i32, %arg1: memref<512x2xf32, #tpu.memory_space<vmem>>, %arg2: memref<2x128xf32, #tpu.memory_space<vmem>>, %arg3: memref<1x128xf32, #tpu.memory_space<vmem>>, %arg4: memref<4x128x128xbf16, #tpu.memory_space<vmem>>, %arg5: memref<4x1x128xf32, #tpu.memory_space<vmem>>, %arg6: memref<1x128xf32, #tpu.memory_space<vmem>>, %arg7: memref<512x1xf32, #tpu.memory_space<vmem>>) attributes {dimension_semantics = [#tpu.dimension_semantics<parallel>], iteration_bounds = array<i64: 2>, scalar_prefetch = 0 : i64, scratch_operands = 0 : i64, tpu.core_type = #tpu.core_type<tc>, window_params = [{transform_indices = @transform_0, window_bounds = array<i64: 512, 2>}, {pipeline_mode = #tpu.pipeline_mode<synchronous>, transform_indices = @transform_1, window_bounds = array<i64: 2, 128>}, {pipeline_mode = #tpu.pipeline_mode<synchronous>, transform_indices = @transform_2, window_bounds = array<i64: 1, 128>}, {pipeline_mode = #tpu.pipeline_mode<synchronous>, transform_indices = @transform_3, window_bounds = array<i64: 4, 128, 128>}, {pipeline_mode = #tpu.pipeline_mode<synchronous>, transform_indices = @transform_4, window_bounds = array<i64: 4, 1, 128>}, {pipeline_mode = #tpu.pipeline_mode<synchronous>, transform_indices = @transform_5, window_bounds = array<i64: 1, 128>}, {transform_indices = @transform_6, window_bounds = array<i64: 512, 1>}]} {
    %c0 = arith.constant 0 : index
    %c0_0 = arith.constant 0 : index
    %0 = vector.load %arg1[%c0, %c0_0] : memref<512x2xf32, #tpu.memory_space<vmem>>, vector<512x2xf32>
    %1 = vector.extract_strided_slice %0 {offsets = [0, 0], sizes = [512, 1], strides = [1, 1]} : vector<512x2xf32> to vector<512x1xf32>
    %2 = vector.extract_strided_slice %0 {offsets = [0, 1], sizes = [512, 1], strides = [1, 1]} : vector<512x2xf32> to vector<512x1xf32>
    %c0_1 = arith.constant 0 : index
    %c0_2 = arith.constant 0 : index
    %3 = vector.load %arg2[%c0_1, %c0_2] : memref<2x128xf32, #tpu.memory_space<vmem>>, vector<1x128xf32>
    %4 = vector.broadcast %1 : vector<512x1xf32> to vector<512x128xf32>
    %5 = vector.broadcast %3 : vector<1x128xf32> to vector<512x128xf32>
    %6 = arith.mulf %4, %5 : vector<512x128xf32>
    %c1 = arith.constant 1 : index
    %c0_3 = arith.constant 0 : index
    %7 = vector.load %arg2[%c1, %c0_3] : memref<2x128xf32, #tpu.memory_space<vmem>>, vector<1x128xf32>
    %8 = vector.broadcast %2 : vector<512x1xf32> to vector<512x128xf32>
    %9 = vector.broadcast %7 : vector<1x128xf32> to vector<512x128xf32>
    %10 = arith.mulf %8, %9 : vector<512x128xf32>
    %11 = arith.addf %6, %10 : vector<512x128xf32>
    %c0_4 = arith.constant 0 : index
    %c0_5 = arith.constant 0 : index
    %12 = vector.load %arg3[%c0_4, %c0_5] : memref<1x128xf32, #tpu.memory_space<vmem>>, vector<1x128xf32>
    %13 = vector.broadcast %12 : vector<1x128xf32> to vector<512x128xf32>
    %14 = arith.addf %11, %13 : vector<512x128xf32>
    %15 = math.tanh %14 : vector<512x128xf32>
    %16 = arith.truncf %15 : vector<512x128xf32> to vector<512x128xbf16>
    %c0_6 = arith.constant 0 : index
    %c0_7 = arith.constant 0 : index
    %c0_8 = arith.constant 0 : index
    %17 = vector.load %arg4[%c0_6, %c0_7, %c0_8] : memref<4x128x128xbf16, #tpu.memory_space<vmem>>, vector<1x128x128xbf16>
    %18 = vector.shape_cast %17 : vector<1x128x128xbf16> to vector<128x128xbf16>
    %cst = arith.constant dense<0.000000e+00> : vector<512x128xf32>
    %19 = tpu.matmul %16, %18, %cst {dimension_numbers = #tpu.dot_dimension_numbers<[1], [0], [0], [1], [0, 0, 1, 1], [], []>} : vector<512x128xbf16>, vector<128x128xbf16>, vector<512x128xf32> -> vector<512x128xf32>
    %c0_9 = arith.constant 0 : index
    %c0_10 = arith.constant 0 : index
    %c0_11 = arith.constant 0 : index
    %20 = vector.load %arg5[%c0_9, %c0_10, %c0_11] : memref<4x1x128xf32, #tpu.memory_space<vmem>>, vector<1x1x128xf32>
    %21 = vector.shape_cast %20 : vector<1x1x128xf32> to vector<1x128xf32>
    %22 = vector.broadcast %21 : vector<1x128xf32> to vector<512x128xf32>
    %23 = arith.addf %19, %22 : vector<512x128xf32>
    %24 = math.tanh %23 : vector<512x128xf32>
    %25 = arith.truncf %24 : vector<512x128xf32> to vector<512x128xbf16>
    %c1_12 = arith.constant 1 : index
    %c0_13 = arith.constant 0 : index
    %c0_14 = arith.constant 0 : index
    %26 = vector.load %arg4[%c1_12, %c0_13, %c0_14] : memref<4x128x128xbf16, #tpu.memory_space<vmem>>, vector<1x128x128xbf16>
    %27 = vector.shape_cast %26 : vector<1x128x128xbf16> to vector<128x128xbf16>
    %cst_15 = arith.constant dense<0.000000e+00> : vector<512x128xf32>
    %28 = tpu.matmul %25, %27, %cst_15 {dimension_numbers = #tpu.dot_dimension_numbers<[1], [0], [0], [1], [0, 0, 1, 1], [], []>} : vector<512x128xbf16>, vector<128x128xbf16>, vector<512x128xf32> -> vector<512x128xf32>
    %c1_16 = arith.constant 1 : index
    %c0_17 = arith.constant 0 : index
    %c0_18 = arith.constant 0 : index
    %29 = vector.load %arg5[%c1_16, %c0_17, %c0_18] : memref<4x1x128xf32, #tpu.memory_space<vmem>>, vector<1x1x128xf32>
    %30 = vector.shape_cast %29 : vector<1x1x128xf32> to vector<1x128xf32>
    %31 = vector.broadcast %30 : vector<1x128xf32> to vector<512x128xf32>
    %32 = arith.addf %28, %31 : vector<512x128xf32>
    %33 = math.tanh %32 : vector<512x128xf32>
    %34 = arith.truncf %33 : vector<512x128xf32> to vector<512x128xbf16>
    %c2 = arith.constant 2 : index
    %c0_19 = arith.constant 0 : index
    %c0_20 = arith.constant 0 : index
    %35 = vector.load %arg4[%c2, %c0_19, %c0_20] : memref<4x128x128xbf16, #tpu.memory_space<vmem>>, vector<1x128x128xbf16>
    %36 = vector.shape_cast %35 : vector<1x128x128xbf16> to vector<128x128xbf16>
    %cst_21 = arith.constant dense<0.000000e+00> : vector<512x128xf32>
    %37 = tpu.matmul %34, %36, %cst_21 {dimension_numbers = #tpu.dot_dimension_numbers<[1], [0], [0], [1], [0, 0, 1, 1], [], []>} : vector<512x128xbf16>, vector<128x128xbf16>, vector<512x128xf32> -> vector<512x128xf32>
    %c2_22 = arith.constant 2 : index
    %c0_23 = arith.constant 0 : index
    %c0_24 = arith.constant 0 : index
    %38 = vector.load %arg5[%c2_22, %c0_23, %c0_24] : memref<4x1x128xf32, #tpu.memory_space<vmem>>, vector<1x1x128xf32>
    %39 = vector.shape_cast %38 : vector<1x1x128xf32> to vector<1x128xf32>
    %40 = vector.broadcast %39 : vector<1x128xf32> to vector<512x128xf32>
    %41 = arith.addf %37, %40 : vector<512x128xf32>
    %42 = math.tanh %41 : vector<512x128xf32>
    %43 = arith.truncf %42 : vector<512x128xf32> to vector<512x128xbf16>
    %c3 = arith.constant 3 : index
    %c0_25 = arith.constant 0 : index
    %c0_26 = arith.constant 0 : index
    %44 = vector.load %arg4[%c3, %c0_25, %c0_26] : memref<4x128x128xbf16, #tpu.memory_space<vmem>>, vector<1x128x128xbf16>
    %45 = vector.shape_cast %44 : vector<1x128x128xbf16> to vector<128x128xbf16>
    %cst_27 = arith.constant dense<0.000000e+00> : vector<512x128xf32>
    %46 = tpu.matmul %43, %45, %cst_27 {dimension_numbers = #tpu.dot_dimension_numbers<[1], [0], [0], [1], [0, 0, 1, 1], [], []>} : vector<512x128xbf16>, vector<128x128xbf16>, vector<512x128xf32> -> vector<512x128xf32>
    %c3_28 = arith.constant 3 : index
    %c0_29 = arith.constant 0 : index
    %c0_30 = arith.constant 0 : index
    %47 = vector.load %arg5[%c3_28, %c0_29, %c0_30] : memref<4x1x128xf32, #tpu.memory_space<vmem>>, vector<1x1x128xf32>
    %48 = vector.shape_cast %47 : vector<1x1x128xf32> to vector<1x128xf32>
    %49 = vector.broadcast %48 : vector<1x128xf32> to vector<512x128xf32>
    %50 = arith.addf %46, %49 : vector<512x128xf32>
    %51 = math.tanh %50 : vector<512x128xf32>
    %52 = arith.truncf %51 : vector<512x128xf32> to vector<512x128xbf16>
    %53 = arith.extf %52 : vector<512x128xbf16> to vector<512x128xf32>
    %c0_31 = arith.constant 0 : index
    %c0_32 = arith.constant 0 : index
    %54 = vector.load %arg6[%c0_31, %c0_32] : memref<1x128xf32, #tpu.memory_space<vmem>>, vector<1x128xf32>
    %55 = vector.broadcast %54 : vector<1x128xf32> to vector<512x128xf32>
    %56 = arith.mulf %53, %55 : vector<512x128xf32>
    %cst_33 = arith.constant dense<0.000000e+00> : vector<512xf32>
    %57 = vector.multi_reduction <add>, %56, %cst_33 [1] : vector<512x128xf32> to vector<512xf32>
    %58 = vector.shape_cast %57 : vector<512xf32> to vector<512x1xf32>
    %c0_34 = arith.constant 0 : index
    %c0_35 = arith.constant 0 : index
    %59 = vector.load %arg7[%c0_34, %c0_35] : memref<512x1xf32, #tpu.memory_space<vmem>>, vector<512x1xf32>
    tpu.vector_store %arg7[%c0_34, %c0_35], %58 {strides = array<i32>} : memref<512x1xf32, #tpu.memory_space<vmem>>, vector<512x1xf32>,
    return
  }
  func.func @transform_0(%arg0: i32) -> (i32, i32) {
    %c0_i32 = arith.constant 0 : i32
    %c0_i32_0 = arith.constant 0 : i32
    return %arg0, %c0_i32 : i32, i32
  }
  func.func @transform_1(%arg0: i32) -> (i32, i32) {
    %c0_i32 = arith.constant 0 : i32
    %c0_i32_0 = arith.constant 0 : i32
    %c0_i32_1 = arith.constant 0 : i32
    return %c0_i32, %c0_i32_0 : i32, i32
  }
  func.func @transform_2(%arg0: i32) -> (i32, i32) {
    %c0_i32 = arith.constant 0 : i32
    %c0_i32_0 = arith.constant 0 : i32
    %c0_i32_1 = arith.constant 0 : i32
    return %c0_i32, %c0_i32_0 : i32, i32
  }
  func.func @transform_3(%arg0: i32) -> (i32, i32, i32) {
    %c0_i32 = arith.constant 0 : i32
    %c0_i32_0 = arith.constant 0 : i32
    %c0_i32_1 = arith.constant 0 : i32
    %c0_i32_2 = arith.constant 0 : i32
    return %c0_i32, %c0_i32_0, %c0_i32_1 : i32, i32, i32
  }
  func.func @transform_4(%arg0: i32) -> (i32, i32, i32) {
    %c0_i32 = arith.constant 0 : i32
    %c0_i32_0 = arith.constant 0 : i32
    %c0_i32_1 = arith.constant 0 : i32
    %c0_i32_2 = arith.constant 0 : i32
    return %c0_i32, %c0_i32_0, %c0_i32_1 : i32, i32, i32
  }
  func.func @transform_5(%arg0: i32) -> (i32, i32) {
    %c0_i32 = arith.constant 0 : i32
    %c0_i32_0 = arith.constant 0 : i32
    %c0_i32_1 = arith.constant 0 : i32
    return %c0_i32, %c0_i32_0 : i32, i32
  }
  func.func @transform_6(%arg0: i32) -> (i32, i32) {
    %c0_i32 = arith.constant 0 : i32
    %c0_i32_0 = arith.constant 0 : i32
    return %arg0, %c0_i32 : i32, i32
  }
}

</mosaic_0001>

<llo_original>
// kernel: tpu_custom_call.1
$region0: #{tpu_custom_call.1}
  #allocation0 [shape = 'u32[]', space=smem, size = 0x4, offset = 0x4, fixed_abs, tag = 'smem constant byte address 0x4 - core index']
  #allocation1 [shape = 'u32[144,128]{1,0:T(1,128)}', space=vmem, size = 0x12000, scoped, tag = 'internal scratch']
  %s0 = inlined_call_operand.vmem [shape: f32[1024,2], index: 0, kind: input, shape index: {}]
  %s1 = inlined_call_operand.vmem [shape: f32[2,128], index: 1, kind: input, shape index: {}]
  %s2 = inlined_call_operand.vmem [shape: f32[1,128], index: 2, kind: input, shape index: {}]
  %s3 = inlined_call_operand.vmem [shape: bf16[4,128,128], index: 3, kind: input, shape index: {}]
  %s4 = inlined_call_operand.vmem [shape: f32[4,1,128], index: 4, kind: input, shape index: {}]
  %s5 = inlined_call_operand.vmem [shape: f32[1,128], index: 5, kind: input, shape index: {}]
  %s6 = inlined_call_operand.vmem [shape: f32[1024,1], index: 6, kind: output, shape index: {}]
  %s7 = sld [smem:[#allocation0]]
  $region57: #{tpu_custom_call.1} parent=0
    _
  %s9 = ssub.s32 1, %s7
  %s10 = scalar_select 0, %s9, %s7
  loop: start=0, step=1, limit=4
  $region2: #{tpu_custom_call.1} parent=0 // loop_pre_header
    _
  $region3: #{tpu_custom_call.1} parent=0 // loop_header
    %s12 = sphi 0, %s16
    %p13 = scmp.ge.s32.totalorder %s12, 4
    %s22 = sphi 0, %s24
    %s25 = sphi 0, %s22
    %s26 = sphi 0, %s25
    %s42 = sphi 0, %s26
    %s46 = sphi 0, %s46
    %s48 = sphi 0, %s46
    %s49 = sphi 0, %s48
    %s63 = sphi 0, %s49
    %s67 = sphi 0, %s67
    %s69 = sphi 0, %s67
    %s70 = sphi 0, %s69
    %s84 = sphi 0, %s70
    %s88 = sphi 0, %s88
    %s90 = sphi 0, %s88
    %s91 = sphi 0, %s90
    %s105 = sphi 0, %s91
    %s109 = sphi 0, %s109
    %s111 = sphi 0, %s109
    %s112 = sphi 0, %s111
    %s126 = sphi 0, %s112
    %s130 = sphi 0, %s130
    %s132 = sphi 0, %s130
    %s133 = sphi 0, %s132
    %s147 = sphi 0, %s133
    %s153 = sphi 0, %s155
    %s156 = sphi 0, %s153
    %s157 = sphi 0, %s156
    %s173 = sphi 0, %s157
  $region4: #{tpu_custom_call.1} parent=0 // loop_header_branch
    %15 = sbr.rel (%p13) target = $region8
  $region5: #{tpu_custom_call.1} parent=0 // loop_body
    %s17 = ssub.s32 %s12, 1
    %s18 = ssub.s32 %s12, 2
    %s19 = sadd.s32 %s12, 1
    %s20 = ssub.s32 %s12, %s19
    %p21 = scmp.eq.s32.totalorder %s20, 0
    %s23 = sadd.s32 %s22, 1
    %s24 = scalar_select %p21, %s22, %s23
    %p27 = pneg %p21
    %p28 = scmp.eq.s32.totalorder %s12, 1
    %p29 = por %p27, %p28
    %p30 = scmp.ne.s32.totalorder %s22, %s25
    %p31 = scmp.eq.s32.totalorder %s12, 0
    %p32 = por %p30, %p31
    %p33 = scmp.ne.s32.totalorder %s22, %s25
    %p34 = scmp.eq.s32.totalorder %s17, 1
    %p35 = por %p33, %p34
    %p36 = scmp.ne.s32.totalorder %s25, %s26
    %p37 = scmp.eq.s32.totalorder %s17, 0
    %p38 = por %p36, %p37
    %p39 = scmp.ne.s32.totalorder %s25, %s26
    %p40 = scmp.eq.s32.totalorder %s18, 1
    %p41 = por %p39, %p40
    %p43 = scmp.ne.s32.totalorder %s26, %s42
    %p44 = scmp.eq.s32.totalorder %s18, 0
    %p45 = por %p43, %p44
    %s47 = sadd.s32 %s46, 1
    %p50 = scmp.eq.s32.totalorder %s12, 1
    %p51 = scmp.ne.s32.totalorder %s46, %s48
    %p52 = scmp.eq.s32.totalorder %s12, 0
    %p53 = por %p51, %p52
    %p54 = scmp.ne.s32.totalorder %s46, %s48
    %p55 = scmp.eq.s32.totalorder %s17, 1
    %p56 = por %p54, %p55
    %p57 = scmp.ne.s32.totalorder %s48, %s49
    %p58 = scmp.eq.s32.totalorder %s17, 0
    %p59 = por %p57, %p58
    %p60 = scmp.ne.s32.totalorder %s48, %s49
    %p61 = scmp.eq.s32.totalorder %s18, 1
    %p62 = por %p60, %p61
    %p64 = scmp.ne.s32.totalorder %s49, %s63
    %p65 = scmp.eq.s32.totalorder %s18, 0
    %p66 = por %p64, %p65
    %s68 = sadd.s32 %s67, 1
    %p71 = scmp.eq.s32.totalorder %s12, 1
    %p72 = scmp.ne.s32.totalorder %s67, %s69
    %p73 = scmp.eq.s32.totalorder %s12, 0
    %p74 = por %p72, %p73
    %p75 = scmp.ne.s32.totalorder %s67, %s69
    %p76 = scmp.eq.s32.totalorder %s17, 1
    %p77 = por %p75, %p76
    %p78 = scmp.ne.s32.totalorder %s69, %s70
    %p79 = scmp.eq.s32.totalorder %s17, 0
    %p80 = por %p78, %p79
    %p81 = scmp.ne.s32.totalorder %s69, %s70
    %p82 = scmp.eq.s32.totalorder %s18, 1
    %p83 = por %p81, %p82
    %p85 = scmp.ne.s32.totalorder %s70, %s84
    %p86 = scmp.eq.s32.totalorder %s18, 0
    %p87 = por %p85, %p86
    %s89 = sadd.s32 %s88, 1
    %p92 = scmp.eq.s32.totalorder %s12, 1
    %p93 = scmp.ne.s32.totalorder %s88, %s90
    %p94 = scmp.eq.s32.totalorder %s12, 0
    %p95 = por %p93, %p94
    %p96 = scmp.ne.s32.totalorder %s88, %s90
    %p97 = scmp.eq.s32.totalorder %s17, 1
    %p98 = por %p96, %p97
    %p99 = scmp.ne.s32.totalorder %s90, %s91
    %p100 = scmp.eq.s32.totalorder %s17, 0
    %p101 = por %p99, %p100
    %p102 = scmp.ne.s32.totalorder %s90, %s91
    %p103 = scmp.eq.s32.totalorder %s18, 1
    %p104 = por %p102, %p103
    %p106 = scmp.ne.s32.totalorder %s91, %s105
    %p107 = scmp.eq.s32.totalorder %s18, 0
    %p108 = por %p106, %p107
    %s110 = sadd.s32 %s109, 1
    %p113 = scmp.eq.s32.totalorder %s12, 1
    %p114 = scmp.ne.s32.totalorder %s109, %s111
    %p115 = scmp.eq.s32.totalorder %s12, 0
    %p116 = por %p114, %p115
    %p117 = scmp.ne.s32.totalorder %s109, %s111
    %p118 = scmp.eq.s32.totalorder %s17, 1
    %p119 = por %p117, %p118
    %p120 = scmp.ne.s32.totalorder %s111, %s112
    %p121 = scmp.eq.s32.totalorder %s17, 0
    %p122 = por %p120, %p121
    %p123 = scmp.ne.s32.totalorder %s111, %s112
    %p124 = scmp.eq.s32.totalorder %s18, 1
    %p125 = por %p123, %p124
    %p127 = scmp.ne.s32.totalorder %s112, %s126
    %p128 = scmp.eq.s32.totalorder %s18, 0
    %p129 = por %p127, %p128
    %s131 = sadd.s32 %s130, 1
    %p134 = scmp.eq.s32.totalorder %s12, 1
    %p135 = scmp.ne.s32.totalorder %s130, %s132
    %p136 = scmp.eq.s32.totalorder %s12, 0
    %p137 = por %p135, %p136
    %p138 = scmp.ne.s32.totalorder %s130, %s132
    %p139 = scmp.eq.s32.totalorder %s17, 1
    %p140 = por %p138, %p139
    %p141 = scmp.ne.s32.totalorder %s132, %s133
    %p142 = scmp.eq.s32.totalorder %s17, 0
    %p143 = por %p141, %p142
    %p144 = scmp.ne.s32.totalorder %s132, %s133
    %p145 = scmp.eq.s32.totalorder %s18, 1
    %p146 = por %p144, %p145
    %p148 = scmp.ne.s32.totalorder %s133, %s147
    %p149 = scmp.eq.s32.totalorder %s18, 0
    %p150 = por %p148, %p149
    %s151 = ssub.s32 %s12, %s19
    %p152 = scmp.eq.s32.totalorder %s151, 0
    %s154 = sadd.s32 %s153, 1
    %s155 = scalar_select %p152, %s153, %s154
    %p158 = pneg %p152
    %p159 = scmp.eq.s32.totalorder %s12, 1
    %p160 = por %p158, %p159
    %p161 = scmp.ne.s32.totalorder %s153, %s156
    %p162 = scmp.eq.s32.totalorder %s12, 0
    %p163 = por %p161, %p162
    %p164 = scmp.ne.s32.totalorder %s153, %s156
    %p165 = scmp.eq.s32.totalorder %s17, 1
    %p166 = por %p164, %p165
    %p167 = scmp.ne.s32.totalorder %s156, %s157
    %p168 = scmp.eq.s32.totalorder %s17, 0
    %p169 = por %p167, %p168
    %p170 = scmp.ne.s32.totalorder %s156, %s157
    %p171 = scmp.eq.s32.totalorder %s18, 1
    %p172 = por %p170, %p171
    %p174 = scmp.ne.s32.totalorder %s157, %s173
    %p175 = scmp.eq.s32.totalorder %s18, 0
    %p176 = por %p174, %p175
    %p177 = scmp.le.s32.totalorder 1, %s12
    %p178 = scmp.lt.s32.totalorder %s12, 3
    %p179 = pnand %p177, %p178
    %p180 = pneg %p179
    // Predicated region
    $region9: #{tpu_custom_call.1} parent=5 // pred_check
      _
    $region10: #{tpu_custom_call.1} parent=5 // pred_check_branch
      %182 = sbr.rel (%p179) target = $region12
    $region11: #{tpu_custom_call.1} parent=5 // pred_region
      %s183 = ssub.s32 %s12, 1
      // Predicated region
      $region13: #{tpu_custom_call.1} parent=11 // pred_check
        %p184 = pneg %p59
      $region14: #{tpu_custom_call.1} parent=11 // pred_check_branch
        %186 = sbr.rel (%p184) target = $region16
      $region15: #{tpu_custom_call.1} parent=11 // pred_region
        _
      $region16: #{tpu_custom_call.1} parent=11 // pred_fallthru
        _
      // Predicated region
      $region17: #{tpu_custom_call.1} parent=11 // pred_check
        %p187 = pneg %p80
      $region18: #{tpu_custom_call.1} parent=11 // pred_check_branch
        %189 = sbr.rel (%p187) target = $region20
      $region19: #{tpu_custom_call.1} parent=11 // pred_region
        _
      $region20: #{tpu_custom_call.1} parent=11 // pred_fallthru
        _
      // Predicated region
      $region21: #{tpu_custom_call.1} parent=11 // pred_check
        %p190 = pneg %p101
      $region22: #{tpu_custom_call.1} parent=11 // pred_check_branch
        %192 = sbr.rel (%p190) target = $region24
      $region23: #{tpu_custom_call.1} parent=11 // pred_region
        _
      $region24: #{tpu_custom_call.1} parent=11 // pred_fallthru
        _
      // Predicated region
      $region25: #{tpu_custom_call.1} parent=11 // pred_check
        %p193 = pneg %p122
      $region26: #{tpu_custom_call.1} parent=11 // pred_check_branch
        %195 = sbr.rel (%p193) target = $region28
      $region27: #{tpu_custom_call.1} parent=11 // pred_region
        _
      $region28: #{tpu_custom_call.1} parent=11 // pred_fallthru
        _
      // Predicated region
      $region29: #{tpu_custom_call.1} parent=11 // pred_check
        %p196 = pneg %p143
      $region30: #{tpu_custom_call.1} parent=11 // pred_check_branch
        %198 = sbr.rel (%p196) target = $region32
      $region31: #{tpu_custom_call.1} parent=11 // pred_region
        _
      $region32: #{tpu_custom_call.1} parent=11 // pred_fallthru
        _
    $region12: #{tpu_custom_call.1} parent=5 // pred_fallthru
      _
    %p199 = scmp.lt.s32.totalorder %s12, 2
    // Predicated region
    $region33: #{tpu_custom_call.1} parent=5 // pred_check
      %p200 = pneg %p199
    $region34: #{tpu_custom_call.1} parent=5 // pred_check_branch
      %202 = sbr.rel (%p200) target = $region36
    $region35: #{tpu_custom_call.1} parent=5 // pred_region
      // Predicated region
      $region37: #{tpu_custom_call.1} parent=35 // pred_check
        %p203 = pneg %p32
      $region38: #{tpu_custom_call.1} parent=35 // pred_check_branch
        %205 = sbr.rel (%p203) target = $region40
      $region39: #{tpu_custom_call.1} parent=35 // pred_region
        %s206 = smul.u32 64, %s12
        %p207 = scmp.lt.s32.totalorder %s206, 127
        %s208 = scalar_select %p207, %s206, 127
        %s209 = smul.addr %s208, 8
        %s210 = scalar_lea.vmem %s0, %s209
        %s211 = smul.u32 64, %s12
      $region40: #{tpu_custom_call.1} parent=35 // pred_fallthru
        _
    $region36: #{tpu_custom_call.1} parent=5 // pred_fallthru
      _
    %p212 = scmp.le.s32.totalorder 1, %s12
    %p213 = scmp.lt.s32.totalorder %s12, 3
    %p214 = pnand %p212, %p213
    %p215 = pneg %p214
    // Predicated region
    $region41: #{tpu_custom_call.1} parent=5 // pred_check
      _
    $region42: #{tpu_custom_call.1} parent=5 // pred_check_branch
      %217 = sbr.rel (%p214) target = $region44
    $region43: #{tpu_custom_call.1} parent=5 // pred_region
      %s218 = ssub.s32 %s12, 1
      %s219 = smul.u32 64, %s17
      %p220 = scmp.lt.s32.totalorder %s219, 127
      %s221 = scalar_select %p220, %s219, 127
      %s222 = smul.addr %s221, 8
      %s223 = scalar_lea.vmem %s0, %s222
      %p224 = pneg %p38
      %p225 = pneg %p35
      %p226 = pneg %p59
      %p227 = pneg %p56
      %p228 = pneg %p80
      %p229 = pneg %p77
      %p230 = pneg %p101
      %p231 = pneg %p98
      %p232 = pneg %p122
      %p233 = pneg %p119
      %p234 = pneg %p143
      %p235 = pneg %p140
      %p236 = pneg %p169
      %p237 = pneg %p166
      %s238 = smul.u32 64, %s17
      %p239 = scmp.lt.s32.totalorder %s238, 127
      %s240 = scalar_select %p239, %s238, 127
      %s241 = smul.addr %s240, 8
      %s242 = scalar_lea.vmem %s6, %s241
      %s243 = smul.u32 64, %s17
      %p244 = scmp.lt.s32.totalorder %s243, 127
      %s245 = scalar_select %p244, %s243, 127
      %s246 = smul.addr %s245, 8
      %s247 = scalar_lea.vmem %s0, %s246
      %s248 = smul.u32 64, %s17
      %s249 = smul.u32 64, %s17
      %p250 = scmp.lt.s32.totalorder %s249, 127
      %s251 = scalar_select %p250, %s249, 127
      %s252 = smul.addr %s251, 8
      %s253 = scalar_lea.vmem %s6, %s252
      %s254 = smul.u32 64, %s17
      %v256 = vld [vmem:[%s247] sm:$0xff]
      %v257 = vld [vmem:[%s247 + $0x8] sm:$0xff]
      %v258 = vld [vmem:[%s247 + $0x10] sm:$0xff]
      %v259 = vld [vmem:[%s247 + $0x18] sm:$0xff]
      %v260 = vld [vmem:[%s247 + $0x20] sm:$0xff]
      %v261 = vld [vmem:[%s247 + $0x28] sm:$0xff]
      %v262 = vld [vmem:[%s247 + $0x30] sm:$0xff]
      %v263 = vld [vmem:[%s247 + $0x38] sm:$0xff]
      %v264 = vld [vmem:[%s247 + $0x40] sm:$0xff]
      %v265 = vld [vmem:[%s247 + $0x48] sm:$0xff]
      %v266 = vld [vmem:[%s247 + $0x50] sm:$0xff]
      %v267 = vld [vmem:[%s247 + $0x58] sm:$0xff]
      %v268 = vld [vmem:[%s247 + $0x60] sm:$0xff]
      %v269 = vld [vmem:[%s247 + $0x68] sm:$0xff]
      %v270 = vld [vmem:[%s247 + $0x70] sm:$0xff]
      %v271 = vld [vmem:[%s247 + $0x78] sm:$0xff]
      %v272 = vld [vmem:[%s247 + $0x80] sm:$0xff]
      %v273 = vld [vmem:[%s247 + $0x88] sm:$0xff]
      %v274 = vld [vmem:[%s247 + $0x90] sm:$0xff]
      %v275 = vld [vmem:[%s247 + $0x98] sm:$0xff]
      %v276 = vld [vmem:[%s247 + $0xa0] sm:$0xff]
      %v277 = vld [vmem:[%s247 + $0xa8] sm:$0xff]
      %v278 = vld [vmem:[%s247 + $0xb0] sm:$0xff]
      %v279 = vld [vmem:[%s247 + $0xb8] sm:$0xff]
      %v280 = vld [vmem:[%s247 + $0xc0] sm:$0xff]
      %v281 = vld [vmem:[%s247 + $0xc8] sm:$0xff]
      %v282 = vld [vmem:[%s247 + $0xd0] sm:$0xff]
      %v283 = vld [vmem:[%s247 + $0xd8] sm:$0xff]
      %v284 = vld [vmem:[%s247 + $0xe0] sm:$0xff]
      %v285 = vld [vmem:[%s247 + $0xe8] sm:$0xff]
      %v286 = vld [vmem:[%s247 + $0xf0] sm:$0xff]
      %v287 = vld [vmem:[%s247 + $0xf8] sm:$0xff]
      %v288 = vld [vmem:[%s247 + $0x100] sm:$0xff]
      %v289 = vld [vmem:[%s247 + $0x108] sm:$0xff]
      %v290 = vld [vmem:[%s247 + $0x110] sm:$0xff]
      %v291 = vld [vmem:[%s247 + $0x118] sm:$0xff]
      %v292 = vld [vmem:[%s247 + $0x120] sm:$0xff]
      %v293 = vld [vmem:[%s247 + $0x128] sm:$0xff]
      %v294 = vld [vmem:[%s247 + $0x130] sm:$0xff]
      %v295 = vld [vmem:[%s247 + $0x138] sm:$0xff]
      %v296 = vld [vmem:[%s247 + $0x140] sm:$0xff]
      %v297 = vld [vmem:[%s247 + $0x148] sm:$0xff]
      %v298 = vld [vmem:[%s247 + $0x150] sm:$0xff]
      %v299 = vld [vmem:[%s247 + $0x158] sm:$0xff]
      %v300 = vld [vmem:[%s247 + $0x160] sm:$0xff]
      %v301 = vld [vmem:[%s247 + $0x168] sm:$0xff]
      %v302 = vld [vmem:[%s247 + $0x170] sm:$0xff]
      %v303 = vld [vmem:[%s247 + $0x178] sm:$0xff]
      %v304 = vld [vmem:[%s247 + $0x180] sm:$0xff]
      %v305 = vld [vmem:[%s247 + $0x188] sm:$0xff]
      %v306 = vld [vmem:[%s247 + $0x190] sm:$0xff]
      %v307 = vld [vmem:[%s247 + $0x198] sm:$0xff]
      %v308 = vld [vmem:[%s247 + $0x1a0] sm:$0xff]
      %v309 = vld [vmem:[%s247 + $0x1a8] sm:$0xff]
      %v310 = vld [vmem:[%s247 + $0x1b0] sm:$0xff]
      %v311 = vld [vmem:[%s247 + $0x1b8] sm:$0xff]
      %v312 = vld [vmem:[%s247 + $0x1c0] sm:$0xff]
      %v313 = vld [vmem:[%s247 + $0x1c8] sm:$0xff]
      %v314 = vld [vmem:[%s247 + $0x1d0] sm:$0xff]
      %v315 = vld [vmem:[%s247 + $0x1d8] sm:$0xff]
      %v316 = vld [vmem:[%s247 + $0x1e0] sm:$0xff]
      %v317 = vld [vmem:[%s247 + $0x1e8] sm:$0xff]
      %v318 = vld [vmem:[%s247 + $0x1f0] sm:$0xff]
      %v319 = vld [vmem:[%s247 + $0x1f8] sm:$0xff]
      %v320 = vld [vmem:[%s1] sm:$0x1]
      %322 = vset.pattern.permute.xlu0 0
      %323 = vperm.xlu0 %322, %v256
      %v324 = vpop.permute.xlu0 %323
      %327 = vset.pattern.permute.xlu0 0
      %328 = vperm.xlu0 %327, %v257
      %v329 = vpop.permute.xlu0 %328
      %332 = vset.pattern.permute.xlu0 0
      %333 = vperm.xlu0 %332, %v258
      %v334 = vpop.permute.xlu0 %333
      %337 = vset.pattern.permute.xlu0 0
      %338 = vperm.xlu0 %337, %v259
      %v339 = vpop.permute.xlu0 %338
      %342 = vset.pattern.permute.xlu0 0
      %343 = vperm.xlu0 %342, %v260
      %v344 = vpop.permute.xlu0 %343
      %347 = vset.pattern.permute.xlu0 0
      %348 = vperm.xlu0 %347, %v261
      %v349 = vpop.permute.xlu0 %348
      %352 = vset.pattern.permute.xlu0 0
      %353 = vperm.xlu0 %352, %v262
      %v354 = vpop.permute.xlu0 %353
      %357 = vset.pattern.permute.xlu0 0
      %358 = vperm.xlu0 %357, %v263
      %v359 = vpop.permute.xlu0 %358
      %362 = vset.pattern.permute.xlu0 0
      %363 = vperm.xlu0 %362, %v264
      %v364 = vpop.permute.xlu0 %363
      %367 = vset.pattern.permute.xlu0 0
      %368 = vperm.xlu0 %367, %v265
      %v369 = vpop.permute.xlu0 %368
      %372 = vset.pattern.permute.xlu0 0
      %373 = vperm.xlu0 %372, %v266
      %v374 = vpop.permute.xlu0 %373
      %377 = vset.pattern.permute.xlu0 0
      %378 = vperm.xlu0 %377, %v267
      %v379 = vpop.permute.xlu0 %378
      %382 = vset.pattern.permute.xlu0 0
      %383 = vperm.xlu0 %382, %v268
      %v384 = vpop.permute.xlu0 %383
      %387 = vset.pattern.permute.xlu0 0
      %388 = vperm.xlu0 %387, %v269
      %v389 = vpop.permute.xlu0 %388
      %392 = vset.pattern.permute.xlu0 0
      %393 = vperm.xlu0 %392, %v270
      %v394 = vpop.permute.xlu0 %393
      %397 = vset.pattern.permute.xlu0 0
      %398 = vperm.xlu0 %397, %v271
      %v399 = vpop.permute.xlu0 %398
      %402 = vset.pattern.permute.xlu0 0
      %403 = vperm.xlu0 %402, %v272
      %v404 = vpop.permute.xlu0 %403
      %407 = vset.pattern.permute.xlu0 0
      %408 = vperm.xlu0 %407, %v273
      %v409 = vpop.permute.xlu0 %408
      %412 = vset.pattern.permute.xlu0 0
      %413 = vperm.xlu0 %412, %v274
      %v414 = vpop.permute.xlu0 %413
      %417 = vset.pattern.permute.xlu0 0
      %418 = vperm.xlu0 %417, %v275
      %v419 = vpop.permute.xlu0 %418
      %422 = vset.pattern.permute.xlu0 0
      %423 = vperm.xlu0 %422, %v276
      %v424 = vpop.permute.xlu0 %423
      %427 = vset.pattern.permute.xlu0 0
      %428 = vperm.xlu0 %427, %v277
      %v429 = vpop.permute.xlu0 %428
      %432 = vset.pattern.permute.xlu0 0
      %433 = vperm.xlu0 %432, %v278
      %v434 = vpop.permute.xlu0 %433
      %437 = vset.pattern.permute.xlu0 0
      %438 = vperm.xlu0 %437, %v279
      %v439 = vpop.permute.xlu0 %438
      %442 = vset.pattern.permute.xlu0 0
      %443 = vperm.xlu0 %442, %v280
      %v444 = vpop.permute.xlu0 %443
      %447 = vset.pattern.permute.xlu0 0
      %448 = vperm.xlu0 %447, %v281
      %v449 = vpop.permute.xlu0 %448
      %452 = vset.pattern.permute.xlu0 0
      %453 = vperm.xlu0 %452, %v282
      %v454 = vpop.permute.xlu0 %453
      %457 = vset.pattern.permute.xlu0 0
      %458 = vperm.xlu0 %457, %v283
      %v459 = vpop.permute.xlu0 %458
      %462 = vset.pattern.permute.xlu0 0
      %463 = vperm.xlu0 %462, %v284
      %v464 = vpop.permute.xlu0 %463
      %467 = vset.pattern.permute.xlu0 0
      %468 = vperm.xlu0 %467, %v285
      %v469 = vpop.permute.xlu0 %468
      %472 = vset.pattern.permute.xlu0 0
      %473 = vperm.xlu0 %472, %v286
      %v474 = vpop.permute.xlu0 %473
      %477 = vset.pattern.permute.xlu0 0
      %478 = vperm.xlu0 %477, %v287
      %v479 = vpop.permute.xlu0 %478
      %482 = vset.pattern.permute.xlu0 0
      %483 = vperm.xlu0 %482, %v288
      %v484 = vpop.permute.xlu0 %483
      %487 = vset.pattern.permute.xlu0 0
      %488 = vperm.xlu0 %487, %v289
      %v489 = vpop.permute.xlu0 %488
      %492 = vset.pattern.permute.xlu0 0
      %493 = vperm.xlu0 %492, %v290
      %v494 = vpop.permute.xlu0 %493
      %497 = vset.pattern.permute.xlu0 0
      %498 = vperm.xlu0 %497, %v291
      %v499 = vpop.permute.xlu0 %498
      %502 = vset.pattern.permute.xlu0 0
      %503 = vperm.xlu0 %502, %v292
      %v504 = vpop.permute.xlu0 %503
      %507 = vset.pattern.permute.xlu0 0
      %508 = vperm.xlu0 %507, %v293
      %v509 = vpop.permute.xlu0 %508
      %512 = vset.pattern.permute.xlu0 0
      %513 = vperm.xlu0 %512, %v294
      %v514 = vpop.permute.xlu0 %513
      %517 = vset.pattern.permute.xlu0 0
      %518 = vperm.xlu0 %517, %v295
      %v519 = vpop.permute.xlu0 %518
      %522 = vset.pattern.permute.xlu0 0
      %523 = vperm.xlu0 %522, %v296
      %v524 = vpop.permute.xlu0 %523
      %527 = vset.pattern.permute.xlu0 0
      %528 = vperm.xlu0 %527, %v297
      %v529 = vpop.permute.xlu0 %528
      %532 = vset.pattern.permute.xlu0 0
      %533 = vperm.xlu0 %532, %v298
      %v534 = vpop.permute.xlu0 %533
      %537 = vset.pattern.permute.xlu0 0
      %538 = vperm.xlu0 %537, %v299
      %v539 = vpop.permute.xlu0 %538
      %542 = vset.pattern.permute.xlu0 0
      %543 = vperm.xlu0 %542, %v300
      %v544 = vpop.permute.xlu0 %543
      %547 = vset.pattern.permute.xlu0 0
      %548 = vperm.xlu0 %547, %v301
      %v549 = vpop.permute.xlu0 %548
      %552 = vset.pattern.permute.xlu0 0
      %553 = vperm.xlu0 %552, %v302
      %v554 = vpop.permute.xlu0 %553
      %557 = vset.pattern.permute.xlu0 0
      %558 = vperm.xlu0 %557, %v303
      %v559 = vpop.permute.xlu0 %558
      %562 = vset.pattern.permute.xlu0 0
      %563 = vperm.xlu0 %562, %v304
      %v564 = vpop.permute.xlu0 %563
      %567 = vset.pattern.permute.xlu0 0
      %568 = vperm.xlu0 %567, %v305
      %v569 = vpop.permute.xlu0 %568
      %572 = vset.pattern.permute.xlu0 0
      %573 = vperm.xlu0 %572, %v306
      %v574 = vpop.permute.xlu0 %573
      %577 = vset.pattern.permute.xlu0 0
      %578 = vperm.xlu0 %577, %v307
      %v579 = vpop.permute.xlu0 %578
      %582 = vset.pattern.permute.xlu0 0
      %583 = vperm.xlu0 %582, %v308
      %v584 = vpop.permute.xlu0 %583
      %587 = vset.pattern.permute.xlu0 0
      %588 = vperm.xlu0 %587, %v309
      %v589 = vpop.permute.xlu0 %588
      %592 = vset.pattern.permute.xlu0 0
      %593 = vperm.xlu0 %592, %v310
      %v594 = vpop.permute.xlu0 %593
      %597 = vset.pattern.permute.xlu0 0
      %598 = vperm.xlu0 %597, %v311
      %v599 = vpop.permute.xlu0 %598
      %602 = vset.pattern.permute.xlu0 0
      %603 = vperm.xlu0 %602, %v312
      %v604 = vpop.permute.xlu0 %603
      %607 = vset.pattern.permute.xlu0 0
      %608 = vperm.xlu0 %607, %v313
      %v609 = vpop.permute.xlu0 %608
      %612 = vset.pattern.permute.xlu0 0
      %613 = vperm.xlu0 %612, %v314
      %v614 = vpop.permute.xlu0 %613
      %617 = vset.pattern.permute.xlu0 0
      %618 = vperm.xlu0 %617, %v315
      %v619 = vpop.permute.xlu0 %618
      %622 = vset.pattern.permute.xlu0 0
      %623 = vperm.xlu0 %622, %v316
      %v624 = vpop.permute.xlu0 %623
      %627 = vset.pattern.permute.xlu0 0
      %628 = vperm.xlu0 %627, %v317
      %v629 = vpop.permute.xlu0 %628
      %632 = vset.pattern.permute.xlu0 0
      %633 = vperm.xlu0 %632, %v318
      %v634 = vpop.permute.xlu0 %633
      %637 = vset.pattern.permute.xlu0 0
      %638 = vperm.xlu0 %637, %v319
      %v639 = vpop.permute.xlu0 %638
      %v641 = vlaneseq
      %v642 = vshrl.u32 %v641, 7
      %v643 = vsub.s32 0, %v642
      %v644 = vrot.slane %v320, %v643
      %v645 = vmul.f32 %v324, %v644
      %v646 = vmul.f32 %v329, %v644
      %v647 = vmul.f32 %v334, %v644
      %v648 = vmul.f32 %v339, %v644
      %v649 = vmul.f32 %v344, %v644
      %v650 = vmul.f32 %v349, %v644
      %v651 = vmul.f32 %v354, %v644
      %v652 = vmul.f32 %v359, %v644
      %v653 = vmul.f32 %v364, %v644
      %v654 = vmul.f32 %v369, %v644
      %v655 = vmul.f32 %v374, %v644
      %v656 = vmul.f32 %v379, %v644
      %v657 = vmul.f32 %v384, %v644
      %v658 = vmul.f32 %v389, %v644
      %v659 = vmul.f32 %v394, %v644
      %v660 = vmul.f32 %v399, %v644
      %v661 = vmul.f32 %v404, %v644
      %v662 = vmul.f32 %v409, %v644
      %v663 = vmul.f32 %v414, %v644
      %v664 = vmul.f32 %v419, %v644
      %v665 = vmul.f32 %v424, %v644
      %v666 = vmul.f32 %v429, %v644
      %v667 = vmul.f32 %v434, %v644
      %v668 = vmul.f32 %v439, %v644
      %v669 = vmul.f32 %v444, %v644
      %v670 = vmul.f32 %v449, %v644
      %v671 = vmul.f32 %v454, %v644
      %v672 = vmul.f32 %v459, %v644
      %v673 = vmul.f32 %v464, %v644
      %v674 = vmul.f32 %v469, %v644
      %v675 = vmul.f32 %v474, %v644
      %v676 = vmul.f32 %v479, %v644
      %v677 = vmul.f32 %v484, %v644
      %v678 = vmul.f32 %v489, %v644
      %v679 = vmul.f32 %v494, %v644
      %v680 = vmul.f32 %v499, %v644
      %v681 = vmul.f32 %v504, %v644
      %v682 = vmul.f32 %v509, %v644
      %v683 = vmul.f32 %v514, %v644
      %v684 = vmul.f32 %v519, %v644
      %v685 = vmul.f32 %v524, %v644
      %v686 = vmul.f32 %v529, %v644
      %v687 = vmul.f32 %v534, %v644
      %v688 = vmul.f32 %v539, %v644
      %v689 = vmul.f32 %v544, %v644
      %v690 = vmul.f32 %v549, %v644
      %v691 = vmul.f32 %v554, %v644
      %v692 = vmul.f32 %v559, %v644
      %v693 = vmul.f32 %v564, %v644
      %v694 = vmul.f32 %v569, %v644
      %v695 = vmul.f32 %v574, %v644
      %v696 = vmul.f32 %v579, %v644
      %v697 = vmul.f32 %v584, %v644
      %v698 = vmul.f32 %v589, %v644
      %v699 = vmul.f32 %v594, %v644
      %v700 = vmul.f32 %v599, %v644
      %v701 = vmul.f32 %v604, %v644
      %v702 = vmul.f32 %v609, %v644
      %v703 = vmul.f32 %v614, %v644
      %v704 = vmul.f32 %v619, %v644
      %v705 = vmul.f32 %v624, %v644
      %v706 = vmul.f32 %v629, %v644
      %v707 = vmul.f32 %v634, %v644
      %v708 = vmul.f32 %v639, %v644
      %v709 = vld [vmem:[%s1 + $0x1] sm:$0x1]
      %710 = vset.pattern.permute.xlu0 1
      %711 = vperm.xlu0 %710, %v256
      %v712 = vpop.permute.xlu0 %711
      %714 = vset.pattern.permute.xlu0 1
      %715 = vperm.xlu0 %714, %v257
      %v716 = vpop.permute.xlu0 %715
      %718 = vset.pattern.permute.xlu0 1
      %719 = vperm.xlu0 %718, %v258
      %v720 = vpop.permute.xlu0 %719
      %722 = vset.pattern.permute.xlu0 1
      %723 = vperm.xlu0 %722, %v259
      %v724 = vpop.permute.xlu0 %723
      %726 = vset.pattern.permute.xlu0 1
      %727 = vperm.xlu0 %726, %v260
      %v728 = vpop.permute.xlu0 %727
      %730 = vset.pattern.permute.xlu0 1
      %731 = vperm.xlu0 %730, %v261
      %v732 = vpop.permute.xlu0 %731
      %734 = vset.pattern.permute.xlu0 1
      %735 = vperm.xlu0 %734, %v262
      %v736 = vpop.permute.xlu0 %735
      %738 = vset.pattern.permute.xlu0 1
      %739 = vperm.xlu0 %738, %v263
      %v740 = vpop.permute.xlu0 %739
      %742 = vset.pattern.permute.xlu0 1
      %743 = vperm.xlu0 %742, %v264
      %v744 = vpop.permute.xlu0 %743
      %746 = vset.pattern.permute.xlu0 1
      %747 = vperm.xlu0 %746, %v265
      %v748 = vpop.permute.xlu0 %747
      %750 = vset.pattern.permute.xlu0 1
      %751 = vperm.xlu0 %750, %v266
      %v752 = vpop.permute.xlu0 %751
      %754 = vset.pattern.permute.xlu0 1
      %755 = vperm.xlu0 %754, %v267
      %v756 = vpop.permute.xlu0 %755
      %758 = vset.pattern.permute.xlu0 1
      %759 = vperm.xlu0 %758, %v268
      %v760 = vpop.permute.xlu0 %759
      %762 = vset.pattern.permute.xlu0 1
      %763 = vperm.xlu0 %762, %v269
      %v764 = vpop.permute.xlu0 %763
      %766 = vset.pattern.permute.xlu0 1
      %767 = vperm.xlu0 %766, %v270
      %v768 = vpop.permute.xlu0 %767
      %770 = vset.pattern.permute.xlu0 1
      %771 = vperm.xlu0 %770, %v271
      %v772 = vpop.permute.xlu0 %771
      %774 = vset.pattern.permute.xlu0 1
      %775 = vperm.xlu0 %774, %v272
      %v776 = vpop.permute.xlu0 %775
      %778 = vset.pattern.permute.xlu0 1
      %779 = vperm.xlu0 %778, %v273
      %v780 = vpop.permute.xlu0 %779
      %782 = vset.pattern.permute.xlu0 1
      %783 = vperm.xlu0 %782, %v274
      %v784 = vpop.permute.xlu0 %783
      %786 = vset.pattern.permute.xlu0 1
      %787 = vperm.xlu0 %786, %v275
      %v788 = vpop.permute.xlu0 %787
      %790 = vset.pattern.permute.xlu0 1
      %791 = vperm.xlu0 %790, %v276
      %v792 = vpop.permute.xlu0 %791
      %794 = vset.pattern.permute.xlu0 1
      %795 = vperm.xlu0 %794, %v277
      %v796 = vpop.permute.xlu0 %795
      %798 = vset.pattern.permute.xlu0 1
      %799 = vperm.xlu0 %798, %v278
      %v800 = vpop.permute.xlu0 %799
      %802 = vset.pattern.permute.xlu0 1
      %803 = vperm.xlu0 %802, %v279
      %v804 = vpop.permute.xlu0 %803
      %806 = vset.pattern.permute.xlu0 1
      %807 = vperm.xlu0 %806, %v280
      %v808 = vpop.permute.xlu0 %807
      %810 = vset.pattern.permute.xlu0 1
      %811 = vperm.xlu0 %810, %v281
      %v812 = vpop.permute.xlu0 %811
      %814 = vset.pattern.permute.xlu0 1
      %815 = vperm.xlu0 %814, %v282
      %v816 = vpop.permute.xlu0 %815
      %818 = vset.pattern.permute.xlu0 1
      %819 = vperm.xlu0 %818, %v283
      %v820 = vpop.permute.xlu0 %819
      %822 = vset.pattern.permute.xlu0 1
      %823 = vperm.xlu0 %822, %v284
      %v824 = vpop.permute.xlu0 %823
      %826 = vset.pattern.permute.xlu0 1
      %827 = vperm.xlu0 %826, %v285
      %v828 = vpop.permute.xlu0 %827
      %830 = vset.pattern.permute.xlu0 1
      %831 = vperm.xlu0 %830, %v286
      %v832 = vpop.permute.xlu0 %831
      %834 = vset.pattern.permute.xlu0 1
      %835 = vperm.xlu0 %834, %v287
      %v836 = vpop.permute.xlu0 %835
      %838 = vset.pattern.permute.xlu0 1
      %839 = vperm.xlu0 %838, %v288
      %v840 = vpop.permute.xlu0 %839
      %842 = vset.pattern.permute.xlu0 1
      %843 = vperm.xlu0 %842, %v289
      %v844 = vpop.permute.xlu0 %843
      %846 = vset.pattern.permute.xlu0 1
      %847 = vperm.xlu0 %846, %v290
      %v848 = vpop.permute.xlu0 %847
      %850 = vset.pattern.permute.xlu0 1
      %851 = vperm.xlu0 %850, %v291
      %v852 = vpop.permute.xlu0 %851
      %854 = vset.pattern.permute.xlu0 1
      %855 = vperm.xlu0 %854, %v292
      %v856 = vpop.permute.xlu0 %855
      %858 = vset.pattern.permute.xlu0 1
      %859 = vperm.xlu0 %858, %v293
      %v860 = vpop.permute.xlu0 %859
      %862 = vset.pattern.permute.xlu0 1
      %863 = vperm.xlu0 %862, %v294
      %v864 = vpop.permute.xlu0 %863
      %866 = vset.pattern.permute.xlu0 1
      %867 = vperm.xlu0 %866, %v295
      %v868 = vpop.permute.xlu0 %867
      %870 = vset.pattern.permute.xlu0 1
      %871 = vperm.xlu0 %870, %v296
      %v872 = vpop.permute.xlu0 %871
      %874 = vset.pattern.permute.xlu0 1
      %875 = vperm.xlu0 %874, %v297
      %v876 = vpop.permute.xlu0 %875
      %878 = vset.pattern.permute.xlu0 1
      %879 = vperm.xlu0 %878, %v298
      %v880 = vpop.permute.xlu0 %879
      %882 = vset.pattern.permute.xlu0 1
      %883 = vperm.xlu0 %882, %v299
      %v884 = vpop.permute.xlu0 %883
      %886 = vset.pattern.permute.xlu0 1
      %887 = vperm.xlu0 %886, %v300
      %v888 = vpop.permute.xlu0 %887
      %890 = vset.pattern.permute.xlu0 1
      %891 = vperm.xlu0 %890, %v301
      %v892 = vpop.permute.xlu0 %891
      %894 = vset.pattern.permute.xlu0 1
      %895 = vperm.xlu0 %894, %v302
      %v896 = vpop.permute.xlu0 %895
      %898 = vset.pattern.permute.xlu0 1
      %899 = vperm.xlu0 %898, %v303
      %v900 = vpop.permute.xlu0 %899
      %902 = vset.pattern.permute.xlu0 1
      %903 = vperm.xlu0 %902, %v304
      %v904 = vpop.permute.xlu0 %903
      %906 = vset.pattern.permute.xlu0 1
      %907 = vperm.xlu0 %906, %v305
      %v908 = vpop.permute.xlu0 %907
      %910 = vset.pattern.permute.xlu0 1
      %911 = vperm.xlu0 %910, %v306
      %v912 = vpop.permute.xlu0 %911
      %914 = vset.pattern.permute.xlu0 1
      %915 = vperm.xlu0 %914, %v307
      %v916 = vpop.permute.xlu0 %915
      %918 = vset.pattern.permute.xlu0 1
      %919 = vperm.xlu0 %918, %v308
      %v920 = vpop.permute.xlu0 %919
      %922 = vset.pattern.permute.xlu0 1
      %923 = vperm.xlu0 %922, %v309
      %v924 = vpop.permute.xlu0 %923
      %926 = vset.pattern.permute.xlu0 1
      %927 = vperm.xlu0 %926, %v310
      %v928 = vpop.permute.xlu0 %927
      %930 = vset.pattern.permute.xlu0 1
      %931 = vperm.xlu0 %930, %v311
      %v932 = vpop.permute.xlu0 %931
      %934 = vset.pattern.permute.xlu0 1
      %935 = vperm.xlu0 %934, %v312
      %v936 = vpop.permute.xlu0 %935
      %938 = vset.pattern.permute.xlu0 1
      %939 = vperm.xlu0 %938, %v313
      %v940 = vpop.permute.xlu0 %939
      %942 = vset.pattern.permute.xlu0 1
      %943 = vperm.xlu0 %942, %v314
      %v944 = vpop.permute.xlu0 %943
      %946 = vset.pattern.permute.xlu0 1
      %947 = vperm.xlu0 %946, %v315
      %v948 = vpop.permute.xlu0 %947
      %950 = vset.pattern.permute.xlu0 1
      %951 = vperm.xlu0 %950, %v316
      %v952 = vpop.permute.xlu0 %951
      %954 = vset.pattern.permute.xlu0 1
      %955 = vperm.xlu0 %954, %v317
      %v956 = vpop.permute.xlu0 %955
      %958 = vset.pattern.permute.xlu0 1
      %959 = vperm.xlu0 %958, %v318
      %v960 = vpop.permute.xlu0 %959
      %962 = vset.pattern.permute.xlu0 1
      %963 = vperm.xlu0 %962, %v319
      %v964 = vpop.permute.xlu0 %963
      %v966 = vlaneseq
      %v967 = vshrl.u32 %v966, 7
      %v968 = vsub.s32 0, %v967
      %v969 = vrot.slane %v709, %v968
      %v970 = vmul.f32 %v712, %v969
      %v971 = vmul.f32 %v716, %v969
      %v972 = vmul.f32 %v720, %v969
      %v973 = vmul.f32 %v724, %v969
      %v974 = vmul.f32 %v728, %v969
      %v975 = vmul.f32 %v732, %v969
      %v976 = vmul.f32 %v736, %v969
      %v977 = vmul.f32 %v740, %v969
      %v978 = vmul.f32 %v744, %v969
      %v979 = vmul.f32 %v748, %v969
      %v980 = vmul.f32 %v752, %v969
      %v981 = vmul.f32 %v756, %v969
      %v982 = vmul.f32 %v760, %v969
      %v983 = vmul.f32 %v764, %v969
      %v984 = vmul.f32 %v768, %v969
      %v985 = vmul.f32 %v772, %v969
      %v986 = vmul.f32 %v776, %v969
      %v987 = vmul.f32 %v780, %v969
      %v988 = vmul.f32 %v784, %v969
      %v989 = vmul.f32 %v788, %v969
      %v990 = vmul.f32 %v792, %v969
      %v991 = vmul.f32 %v796, %v969
      %v992 = vmul.f32 %v800, %v969
      %v993 = vmul.f32 %v804, %v969
      %v994 = vmul.f32 %v808, %v969
      %v995 = vmul.f32 %v812, %v969
      %v996 = vmul.f32 %v816, %v969
      %v997 = vmul.f32 %v820, %v969
      %v998 = vmul.f32 %v824, %v969
      %v999 = vmul.f32 %v828, %v969
      %v1000 = vmul.f32 %v832, %v969
      %v1001 = vmul.f32 %v836, %v969
      %v1002 = vmul.f32 %v840, %v969
      %v1003 = vmul.f32 %v844, %v969
      %v1004 = vmul.f32 %v848, %v969
      %v1005 = vmul.f32 %v852, %v969
      %v1006 = vmul.f32 %v856, %v969
      %v1007 = vmul.f32 %v860, %v969
      %v1008 = vmul.f32 %v864, %v969
      %v1009 = vmul.f32 %v868, %v969
      %v1010 = vmul.f32 %v872, %v969
      %v1011 = vmul.f32 %v876, %v969
      %v1012 = vmul.f32 %v880, %v969
      %v1013 = vmul.f32 %v884, %v969
      %v1014 = vmul.f32 %v888, %v969
      %v1015 = vmul.f32 %v892, %v969
      %v1016 = vmul.f32 %v896, %v969
      %v1017 = vmul.f32 %v900, %v969
      %v1018 = vmul.f32 %v904, %v969
      %v1019 = vmul.f32 %v908, %v969
      %v1020 = vmul.f32 %v912, %v969
      %v1021 = vmul.f32 %v916, %v969
      %v1022 = vmul.f32 %v920, %v969
      %v1023 = vmul.f32 %v924, %v969
      %v1024 = vmul.f32 %v928, %v969
      %v1025 = vmul.f32 %v932, %v969
      %v1026 = vmul.f32 %v936, %v969
      %v1027 = vmul.f32 %v940, %v969
      %v1028 = vmul.f32 %v944, %v969
      %v1029 = vmul.f32 %v948, %v969
      %v1030 = vmul.f32 %v952, %v969
      %v1031 = vmul.f32 %v956, %v969
      %v1032 = vmul.f32 %v960, %v969
      %v1033 = vmul.f32 %v964, %v969
      %v1034 = vadd.f32 %v645, %v970
      %v1035 = vadd.f32 %v646, %v971
      %v1036 = vadd.f32 %v647, %v972
      %v1037 = vadd.f32 %v648, %v973
      %v1038 = vadd.f32 %v649, %v974
      %v1039 = vadd.f32 %v650, %v975
      %v1040 = vadd.f32 %v651, %v976
      %v1041 = vadd.f32 %v652, %v977
      %v1042 = vadd.f32 %v653, %v978
      %v1043 = vadd.f32 %v654, %v979
      %v1044 = vadd.f32 %v655, %v980
      %v1045 = vadd.f32 %v656, %v981
      %v1046 = vadd.f32 %v657, %v982
      %v1047 = vadd.f32 %v658, %v983
      %v1048 = vadd.f32 %v659, %v984
      %v1049 = vadd.f32 %v660, %v985
      %v1050 = vadd.f32 %v661, %v986
      %v1051 = vadd.f32 %v662, %v987
      %v1052 = vadd.f32 %v663, %v988
      %v1053 = vadd.f32 %v664, %v989
      %v1054 = vadd.f32 %v665, %v990
      %v1055 = vadd.f32 %v666, %v991
      %v1056 = vadd.f32 %v667, %v992
      %v1057 = vadd.f32 %v668, %v993
      %v1058 = vadd.f32 %v669, %v994
      %v1059 = vadd.f32 %v670, %v995
      %v1060 = vadd.f32 %v671, %v996
      %v1061 = vadd.f32 %v672, %v997
      %v1062 = vadd.f32 %v673, %v998
      %v1063 = vadd.f32 %v674, %v999
      %v1064 = vadd.f32 %v675, %v1000
      %v1065 = vadd.f32 %v676, %v1001
      %v1066 = vadd.f32 %v677, %v1002
      %v1067 = vadd.f32 %v678, %v1003
      %v1068 = vadd.f32 %v679, %v1004
      %v1069 = vadd.f32 %v680, %v1005
      %v1070 = vadd.f32 %v681, %v1006
      %v1071 = vadd.f32 %v682, %v1007
      %v1072 = vadd.f32 %v683, %v1008
      %v1073 = vadd.f32 %v684, %v1009
      %v1074 = vadd.f32 %v685, %v1010
      %v1075 = vadd.f32 %v686, %v1011
      %v1076 = vadd.f32 %v687, %v1012
      %v1077 = vadd.f32 %v688, %v1013
      %v1078 = vadd.f32 %v689, %v1014
      %v1079 = vadd.f32 %v690, %v1015
      %v1080 = vadd.f32 %v691, %v1016
      %v1081 = vadd.f32 %v692, %v1017
      %v1082 = vadd.f32 %v693, %v1018
      %v1083 = vadd.f32 %v694, %v1019
      %v1084 = vadd.f32 %v695, %v1020
      %v1085 = vadd.f32 %v696, %v1021
      %v1086 = vadd.f32 %v697, %v1022
      %v1087 = vadd.f32 %v698, %v1023
      %v1088 = vadd.f32 %v699, %v1024
      %v1089 = vadd.f32 %v700, %v1025
      %v1090 = vadd.f32 %v701, %v1026
      %v1091 = vadd.f32 %v702, %v1027
      %v1092 = vadd.f32 %v703, %v1028
      %v1093 = vadd.f32 %v704, %v1029
      %v1094 = vadd.f32 %v705, %v1030
      %v1095 = vadd.f32 %v706, %v1031
      %v1096 = vadd.f32 %v707, %v1032
      %v1097 = vadd.f32 %v708, %v1033
      %v1098 = vld [vmem:[%s2] sm:$0x1]
      %v1100 = vlaneseq
      %v1101 = vshrl.u32 %v1100, 7
      %v1102 = vsub.s32 0, %v1101
      %v1103 = vrot.slane %v1098, %v1102
      %v1105 = vadd.f32 %v1034, %v1103
      %v1106 = vadd.f32 %v1035, %v1103
      %v1107 = vadd.f32 %v1036, %v1103
      %v1108 = vadd.f32 %v1037, %v1103
      %v1109 = vadd.f32 %v1038, %v1103
      %v1110 = vadd.f32 %v1039, %v1103
      %v1111 = vadd.f32 %v1040, %v1103
      %v1112 = vadd.f32 %v1041, %v1103
      %v1113 = vadd.f32 %v1042, %v1103
      %v1114 = vadd.f32 %v1043, %v1103
      %v1115 = vadd.f32 %v1044, %v1103
      %v1116 = vadd.f32 %v1045, %v1103
      %v1117 = vadd.f32 %v1046, %v1103
      %v1118 = vadd.f32 %v1047, %v1103
      %v1119 = vadd.f32 %v1048, %v1103
      %v1120 = vadd.f32 %v1049, %v1103
      %v1121 = vadd.f32 %v1050, %v1103
      %v1122 = vadd.f32 %v1051, %v1103
      %v1123 = vadd.f32 %v1052, %v1103
      %v1124 = vadd.f32 %v1053, %v1103
      %v1125 = vadd.f32 %v1054, %v1103
      %v1126 = vadd.f32 %v1055, %v1103
      %v1127 = vadd.f32 %v1056, %v1103
      %v1128 = vadd.f32 %v1057, %v1103
      %v1129 = vadd.f32 %v1058, %v1103
      %v1130 = vadd.f32 %v1059, %v1103
      %v1131 = vadd.f32 %v1060, %v1103
      %v1132 = vadd.f32 %v1061, %v1103
      %v1133 = vadd.f32 %v1062, %v1103
      %v1134 = vadd.f32 %v1063, %v1103
      %v1135 = vadd.f32 %v1064, %v1103
      %v1136 = vadd.f32 %v1065, %v1103
      %v1137 = vadd.f32 %v1066, %v1103
      %v1138 = vadd.f32 %v1067, %v1103
      %v1139 = vadd.f32 %v1068, %v1103
      %v1140 = vadd.f32 %v1069, %v1103
      %v1141 = vadd.f32 %v1070, %v1103
      %v1142 = vadd.f32 %v1071, %v1103
      %v1143 = vadd.f32 %v1072, %v1103
      %v1144 = vadd.f32 %v1073, %v1103
      %v1145 = vadd.f32 %v1074, %v1103
      %v1146 = vadd.f32 %v1075, %v1103
      %v1147 = vadd.f32 %v1076, %v1103
      %v1148 = vadd.f32 %v1077, %v1103
      %v1149 = vadd.f32 %v1078, %v1103
      %v1150 = vadd.f32 %v1079, %v1103
      %v1151 = vadd.f32 %v1080, %v1103
      %v1152 = vadd.f32 %v1081, %v1103
      %v1153 = vadd.f32 %v1082, %v1103
      %v1154 = vadd.f32 %v1083, %v1103
      %v1155 = vadd.f32 %v1084, %v1103
      %v1156 = vadd.f32 %v1085, %v1103
      %v1157 = vadd.f32 %v1086, %v1103
      %v1158 = vadd.f32 %v1087, %v1103
      %v1159 = vadd.f32 %v1088, %v1103
      %v1160 = vadd.f32 %v1089, %v1103
      %v1161 = vadd.f32 %v1090, %v1103
      %v1162 = vadd.f32 %v1091, %v1103
      %v1163 = vadd.f32 %v1092, %v1103
      %v1164 = vadd.f32 %v1093, %v1103
      %v1165 = vadd.f32 %v1094, %v1103
      %v1166 = vadd.f32 %v1095, %v1103
      %v1167 = vadd.f32 %v1096, %v1103
      %v1168 = vadd.f32 %v1097, %v1103
      %v1169 = vtanh.pop %v1105
      %v1170 = vtanh.pop %v1106
      %v1171 = vtanh.pop %v1107
      %v1172 = vtanh.pop %v1108
      %v1173 = vtanh.pop %v1109
      %v1174 = vtanh.pop %v1110
      %v1175 = vtanh.pop %v1111
      %v1176 = vtanh.pop %v1112
      %v1177 = vtanh.pop %v1113
      %v1178 = vtanh.pop %v1114
      %v1179 = vtanh.pop %v1115
      %v1180 = vtanh.pop %v1116
      %v1181 = vtanh.pop %v1117
      %v1182 = vtanh.pop %v1118
      %v1183 = vtanh.pop %v1119
      %v1184 = vtanh.pop %v1120
      %v1185 = vtanh.pop %v1121
      %v1186 = vtanh.pop %v1122
      %v1187 = vtanh.pop %v1123
      %v1188 = vtanh.pop %v1124
      %v1189 = vtanh.pop %v1125
      %v1190 = vtanh.pop %v1126
      %v1191 = vtanh.pop %v1127
      %v1192 = vtanh.pop %v1128
      %v1193 = vtanh.pop %v1129
      %v1194 = vtanh.pop %v1130
      %v1195 = vtanh.pop %v1131
      %v1196 = vtanh.pop %v1132
      %v1197 = vtanh.pop %v1133
      %v1198 = vtanh.pop %v1134
      %v1199 = vtanh.pop %v1135
      %v1200 = vtanh.pop %v1136
      %v1201 = vtanh.pop %v1137
      %v1202 = vtanh.pop %v1138
      %v1203 = vtanh.pop %v1139
      %v1204 = vtanh.pop %v1140
      %v1205 = vtanh.pop %v1141
      %v1206 = vtanh.pop %v1142
      %v1207 = vtanh.pop %v1143
      %v1208 = vtanh.pop %v1144
      %v1209 = vtanh.pop %v1145
      %v1210 = vtanh.pop %v1146
      %v1211 = vtanh.pop %v1147
      %v1212 = vtanh.pop %v1148
      %v1213 = vtanh.pop %v1149
      %v1214 = vtanh.pop %v1150
      %v1215 = vtanh.pop %v1151
      %v1216 = vtanh.pop %v1152
      %v1217 = vtanh.pop %v1153
      %v1218 = vtanh.pop %v1154
      %v1219 = vtanh.pop %v1155
      %v1220 = vtanh.pop %v1156
      %v1221 = vtanh.pop %v1157
      %v1222 = vtanh.pop %v1158
      %v1223 = vtanh.pop %v1159
      %v1224 = vtanh.pop %v1160
      %v1225 = vtanh.pop %v1161
      %v1226 = vtanh.pop %v1162
      %v1227 = vtanh.pop %v1163
      %v1228 = vtanh.pop %v1164
      %v1229 = vtanh.pop %v1165
      %v1230 = vtanh.pop %v1166
      %v1231 = vtanh.pop %v1167
      %v1232 = vtanh.pop %v1168
      %v1233 = vpack.c.bf16 %v1170, %v1169
      %v1234 = vpack.c.bf16 %v1172, %v1171
      %v1235 = vpack.c.bf16 %v1174, %v1173
      %v1236 = vpack.c.bf16 %v1176, %v1175
      %v1237 = vpack.c.bf16 %v1178, %v1177
      %v1238 = vpack.c.bf16 %v1180, %v1179
      %v1239 = vpack.c.bf16 %v1182, %v1181
      %v1240 = vpack.c.bf16 %v1184, %v1183
      %v1241 = vpack.c.bf16 %v1186, %v1185
      %v1242 = vpack.c.bf16 %v1188, %v1187
      %v1243 = vpack.c.bf16 %v1190, %v1189
      %v1244 = vpack.c.bf16 %v1192, %v1191
      %v1245 = vpack.c.bf16 %v1194, %v1193
      %v1246 = vpack.c.bf16 %v1196, %v1195
      %v1247 = vpack.c.bf16 %v1198, %v1197
      %v1248 = vpack.c.bf16 %v1200, %v1199
      %v1249 = vpack.c.bf16 %v1202, %v1201
      %v1250 = vpack.c.bf16 %v1204, %v1203
      %v1251 = vpack.c.bf16 %v1206, %v1205
      %v1252 = vpack.c.bf16 %v1208, %v1207
      %v1253 = vpack.c.bf16 %v1210, %v1209
      %v1254 = vpack.c.bf16 %v1212, %v1211
      %v1255 = vpack.c.bf16 %v1214, %v1213
      %v1256 = vpack.c.bf16 %v1216, %v1215
      %v1257 = vpack.c.bf16 %v1218, %v1217
      %v1258 = vpack.c.bf16 %v1220, %v1219
      %v1259 = vpack.c.bf16 %v1222, %v1221
      %v1260 = vpack.c.bf16 %v1224, %v1223
      %v1261 = vpack.c.bf16 %v1226, %v1225
      %v1262 = vpack.c.bf16 %v1228, %v1227
      %v1263 = vpack.c.bf16 %v1230, %v1229
      %v1264 = vpack.c.bf16 %v1232, %v1231
      %v1265 = vld [vmem:[%s3] sm:$0xf]
      %v1266 = vld [vmem:[%s3 + $0x4] sm:$0xf]
      %v1267 = vld [vmem:[%s3 + $0x8] sm:$0xf]
      %v1268 = vld [vmem:[%s3 + $0xc] sm:$0xf]
      %v1269 = vld [vmem:[%s3 + $0x10] sm:$0xf]
      %v1270 = vld [vmem:[%s3 + $0x14] sm:$0xf]
      %v1271 = vld [vmem:[%s3 + $0x18] sm:$0xf]
      %v1272 = vld [vmem:[%s3 + $0x1c] sm:$0xf]
      %v1273 = vld [vmem:[%s3 + $0x20] sm:$0xf]
      %v1274 = vld [vmem:[%s3 + $0x24] sm:$0xf]
      %v1275 = vld [vmem:[%s3 + $0x28] sm:$0xf]
      %v1276 = vld [vmem:[%s3 + $0x2c] sm:$0xf]
      %v1277 = vld [vmem:[%s3 + $0x30] sm:$0xf]
      %v1278 = vld [vmem:[%s3 + $0x34] sm:$0xf]
      %v1279 = vld [vmem:[%s3 + $0x38] sm:$0xf]
      %v1280 = vld [vmem:[%s3 + $0x3c] sm:$0xf]
      %v1281 = vld [vmem:[%s4] sm:$0x1]
      %v1283 = vlaneseq
      %v1284 = vshrl.u32 %v1283, 7
      %v1285 = vsub.s32 0, %v1284
      %v1286 = vrot.slane %v1281, %v1285
      %v1304 = vunpack.c.l.b16 %v1265
      %v1305 = vunpack.c.l.b16 %v1266
      %v1306 = vunpack.c.l.b16 %v1267
      %v1307 = vunpack.c.l.b16 %v1268
      %v1308 = vunpack.c.l.b16 %v1269
      %v1309 = vunpack.c.l.b16 %v1270
      %v1310 = vunpack.c.l.b16 %v1271
      %v1311 = vunpack.c.l.b16 %v1272
      %v1312 = vunpack.c.l.b16 %v1273
      %v1313 = vunpack.c.l.b16 %v1274
      %v1314 = vunpack.c.l.b16 %v1275
      %v1315 = vunpack.c.l.b16 %v1276
      %v1316 = vunpack.c.l.b16 %v1277
      %v1317 = vunpack.c.l.b16 %v1278
      %v1318 = vunpack.c.l.b16 %v1279
      %v1319 = vunpack.c.l.b16 %v1280
      %v1320 = vpack.c.b16 %v1305, %v1304
      %v1321 = vpack.c.b16 %v1307, %v1306
      %v1322 = vpack.c.b16 %v1309, %v1308
      %v1323 = vpack.c.b16 %v1311, %v1310
      %v1324 = vpack.c.b16 %v1313, %v1312
      %v1325 = vpack.c.b16 %v1315, %v1314
      %v1326 = vpack.c.b16 %v1317, %v1316
      %v1327 = vpack.c.b16 %v1319, %v1318
      %1336 = vmatprep.subr.bf16.mxu0 0
      %1337 = vmatpush1.bf16.msra.mxu0 %v1327
      %1338 = vmatprep.subr.bf16.mxu0 0
      %1339 = vmatpush1.bf16.msra.mxu0 %v1326
      %1340 = vmatprep.subr.bf16.mxu0 0
      %1341 = vmatpush1.bf16.msra.mxu0 %v1325
      %1342 = vmatprep.subr.bf16.mxu0 0
      %1343 = vmatpush1.bf16.msra.mxu0 %v1324
      %1344 = vmatprep.subr.bf16.mxu0 0
      %1345 = vmatpush1.bf16.msra.mxu0 %v1323
      %1346 = vmatprep.subr.bf16.mxu0 0
      %1347 = vmatpush1.bf16.msra.mxu0 %v1322
      %1348 = vmatprep.subr.bf16.mxu0 0
      %1349 = vmatpush1.bf16.msra.mxu0 %v1321
      %1350 = vmatprep.subr.bf16.mxu0 0
      %1351 = vmatpush1.bf16.msra.mxu0 %v1320
      %1352 = vmatprep.subr.bf16.mxu0 0
      %1353 = vmatpush2.bf16.msra.mxu0 0
      %1354 = vmatprep.subr.bf16.mxu0 0
      %1355 = vmatpush2.bf16.msra.mxu0 0
      %1356 = vmatprep.subr.bf16.mxu0 0
      %1357 = vmatpush2.bf16.msra.mxu0 0
      %1358 = vmatprep.subr.bf16.mxu0 0
      %1359 = vmatpush2.bf16.msra.mxu0 0
      %1360 = vmatprep.subr.bf16.mxu0 0
      %1361 = vmatpush2.bf16.msra.mxu0 0
      %1362 = vmatprep.subr.bf16.mxu0 0
      %1363 = vmatpush2.bf16.msra.mxu0 0
      %1364 = vmatprep.subr.bf16.mxu0 0
      %1365 = vmatpush2.bf16.msra.mxu0 0
      %1366 = vmatprep.subr.bf16.mxu0 0
      %1367 = vmatpush2.bf16.msra.mxu0 0
      %1368 = vmatprep.mubr.bf16.mxu0 0
      %1369 = vmatmul.mubr.bf16.gmra.mxu0 %v1233
      %v1370 = vpop.f32.mrf.mxu0
      %v1371 = vadd.f32 %v1286, %v1370
      %v1372 = vpop.f32.mrf.mxu0
      %v1373 = vpop.f32.mrf.mxu0
      %v1374 = vadd.f32 %v1286, %v1373
      %v1375 = vpop.f32.mrf.mxu0
      %1376 = vmatprep.mubr.bf16.mxu0 0
      %1377 = vmatmul.mubr.bf16.gmra.mxu0 %v1234
      %v1378 = vpop.f32.mrf.mxu0
      %v1379 = vadd.f32 %v1286, %v1378
      %v1380 = vpop.f32.mrf.mxu0
      %v1381 = vpop.f32.mrf.mxu0
      %v1382 = vadd.f32 %v1286, %v1381
      %v1383 = vpop.f32.mrf.mxu0
      %1384 = vmatprep.mubr.bf16.mxu0 0
      %1385 = vmatmul.mubr.bf16.gmra.mxu0 %v1235
      %v1386 = vpop.f32.mrf.mxu0
      %v1387 = vadd.f32 %v1286, %v1386
      %v1388 = vpop.f32.mrf.mxu0
      %v1389 = vpop.f32.mrf.mxu0
      %v1390 = vadd.f32 %v1286, %v1389
      %v1391 = vpop.f32.mrf.mxu0
      %1392 = vmatprep.mubr.bf16.mxu0 0
      %1393 = vmatmul.mubr.bf16.gmra.mxu0 %v1236
      %v1394 = vpop.f32.mrf.mxu0
      %v1395 = vadd.f32 %v1286, %v1394
      %v1396 = vpop.f32.mrf.mxu0
      %v1397 = vpop.f32.mrf.mxu0
      %v1398 = vadd.f32 %v1286, %v1397
      %v1399 = vpop.f32.mrf.mxu0
      %1400 = vmatprep.mubr.bf16.mxu0 0
      %1401 = vmatmul.mubr.bf16.gmra.mxu0 %v1237
      %v1402 = vpop.f32.mrf.mxu0
      %v1403 = vadd.f32 %v1286, %v1402
      %v1404 = vpop.f32.mrf.mxu0
      %v1405 = vpop.f32.mrf.mxu0
      %v1406 = vadd.f32 %v1286, %v1405
      %v1407 = vpop.f32.mrf.mxu0
      %1408 = vmatprep.mubr.bf16.mxu0 0
      %1409 = vmatmul.mubr.bf16.gmra.mxu0 %v1238
      %v1410 = vpop.f32.mrf.mxu0
      %v1411 = vadd.f32 %v1286, %v1410
      %v1412 = vpop.f32.mrf.mxu0
      %v1413 = vpop.f32.mrf.mxu0
      %v1414 = vadd.f32 %v1286, %v1413
      %v1415 = vpop.f32.mrf.mxu0
      %1416 = vmatprep.mubr.bf16.mxu0 0
      %1417 = vmatmul.mubr.bf16.gmra.mxu0 %v1239
      %v1418 = vpop.f32.mrf.mxu0
      %v1419 = vadd.f32 %v1286, %v1418
      %v1420 = vpop.f32.mrf.mxu0
      %v1421 = vpop.f32.mrf.mxu0
      %v1422 = vadd.f32 %v1286, %v1421
      %v1423 = vpop.f32.mrf.mxu0
      %1424 = vmatprep.mubr.bf16.mxu0 0
      %1425 = vmatmul.mubr.bf16.gmra.mxu0 %v1240
      %v1426 = vpop.f32.mrf.mxu0
      %v1427 = vadd.f32 %v1286, %v1426
      %v1428 = vpop.f32.mrf.mxu0
      %v1429 = vpop.f32.mrf.mxu0
      %v1430 = vadd.f32 %v1286, %v1429
      %v1431 = vpop.f32.mrf.mxu0
      %1432 = vmatprep.mubr.bf16.mxu0 0
      %1433 = vmatmul.mubr.bf16.gmra.mxu0 %v1241
      %v1434 = vpop.f32.mrf.mxu0
      %v1435 = vadd.f32 %v1286, %v1434
      %v1436 = vpop.f32.mrf.mxu0
      %v1437 = vpop.f32.mrf.mxu0
      %v1438 = vadd.f32 %v1286, %v1437
      %v1439 = vpop.f32.mrf.mxu0
      %1440 = vmatprep.mubr.bf16.mxu0 0
      %1441 = vmatmul.mubr.bf16.gmra.mxu0 %v1242
      %v1442 = vpop.f32.mrf.mxu0
      %v1443 = vadd.f32 %v1286, %v1442
      %v1444 = vpop.f32.mrf.mxu0
      %v1445 = vpop.f32.mrf.mxu0
      %v1446 = vadd.f32 %v1286, %v1445
      %v1447 = vpop.f32.mrf.mxu0
      %1448 = vmatprep.mubr.bf16.mxu0 0
      %1449 = vmatmul.mubr.bf16.gmra.mxu0 %v1243
      %v1450 = vpop.f32.mrf.mxu0
      %v1451 = vadd.f32 %v1286, %v1450
      %v1452 = vpop.f32.mrf.mxu0
      %v1453 = vpop.f32.mrf.mxu0
      %v1454 = vadd.f32 %v1286, %v1453
      %v1455 = vpop.f32.mrf.mxu0
      %1456 = vmatprep.mubr.bf16.mxu0 0
      %1457 = vmatmul.mubr.bf16.gmra.mxu0 %v1244
      %v1458 = vpop.f32.mrf.mxu0
      %v1459 = vadd.f32 %v1286, %v1458
      %v1460 = vpop.f32.mrf.mxu0
      %v1461 = vpop.f32.mrf.mxu0
      %v1462 = vadd.f32 %v1286, %v1461
      %v1463 = vpop.f32.mrf.mxu0
      %1464 = vmatprep.mubr.bf16.mxu0 0
      %1465 = vmatmul.mubr.bf16.gmra.mxu0 %v1245
      %v1466 = vpop.f32.mrf.mxu0
      %v1467 = vadd.f32 %v1286, %v1466
      %v1468 = vpop.f32.mrf.mxu0
      %v1469 = vpop.f32.mrf.mxu0
      %v1470 = vadd.f32 %v1286, %v1469
      %v1471 = vpop.f32.mrf.mxu0
      %1472 = vmatprep.mubr.bf16.mxu0 0
      %1473 = vmatmul.mubr.bf16.gmra.mxu0 %v1246
      %v1474 = vpop.f32.mrf.mxu0
      %v1475 = vadd.f32 %v1286, %v1474
      %v1476 = vpop.f32.mrf.mxu0
      %v1477 = vpop.f32.mrf.mxu0
      %v1478 = vadd.f32 %v1286, %v1477
      %v1479 = vpop.f32.mrf.mxu0
      %1480 = vmatprep.mubr.bf16.mxu0 0
      %1481 = vmatmul.mubr.bf16.gmra.mxu0 %v1247
      %v1482 = vpop.f32.mrf.mxu0
      %v1483 = vadd.f32 %v1286, %v1482
      %v1484 = vpop.f32.mrf.mxu0
      %v1485 = vpop.f32.mrf.mxu0
      %v1486 = vadd.f32 %v1286, %v1485
      %v1487 = vpop.f32.mrf.mxu0
      %1488 = vmatprep.mubr.bf16.mxu0 0
      %1489 = vmatmul.mubr.bf16.gmra.mxu0 %v1248
      %v1490 = vpop.f32.mrf.mxu0
      %v1491 = vadd.f32 %v1286, %v1490
      %v1492 = vpop.f32.mrf.mxu0
      %v1493 = vpop.f32.mrf.mxu0
      %v1494 = vadd.f32 %v1286, %v1493
      %v1495 = vpop.f32.mrf.mxu0
      %1496 = vmatprep.mubr.bf16.mxu0 0
      %1497 = vmatmul.mubr.bf16.gmra.mxu0 %v1249
      %v1498 = vpop.f32.mrf.mxu0
      %v1499 = vadd.f32 %v1286, %v1498
      %v1500 = vpop.f32.mrf.mxu0
      %v1501 = vpop.f32.mrf.mxu0
      %v1502 = vadd.f32 %v1286, %v1501
      %v1503 = vpop.f32.mrf.mxu0
      %1504 = vmatprep.mubr.bf16.mxu0 0
      %1505 = vmatmul.mubr.bf16.gmra.mxu0 %v1250
      %v1506 = vpop.f32.mrf.mxu0
      %v1507 = vadd.f32 %v1286, %v1506
      %v1508 = vpop.f32.mrf.mxu0
      %v1509 = vpop.f32.mrf.mxu0
      %v1510 = vadd.f32 %v1286, %v1509
      %v1511 = vpop.f32.mrf.mxu0
      %1512 = vmatprep.mubr.bf16.mxu0 0
      %1513 = vmatmul.mubr.bf16.gmra.mxu0 %v1251
      %v1514 = vpop.f32.mrf.mxu0
      %v1515 = vadd.f32 %v1286, %v1514
      %v1516 = vpop.f32.mrf.mxu0
      %v1517 = vpop.f32.mrf.mxu0
      %v1518 = vadd.f32 %v1286, %v1517
      %v1519 = vpop.f32.mrf.mxu0
      %1520 = vmatprep.mubr.bf16.mxu0 0
      %1521 = vmatmul.mubr.bf16.gmra.mxu0 %v1252
      %v1522 = vpop.f32.mrf.mxu0
      %v1523 = vadd.f32 %v1286, %v1522
      %v1524 = vpop.f32.mrf.mxu0
      %v1525 = vpop.f32.mrf.mxu0
      %v1526 = vadd.f32 %v1286, %v1525
      %v1527 = vpop.f32.mrf.mxu0
      %1528 = vmatprep.mubr.bf16.mxu0 0
      %1529 = vmatmul.mubr.bf16.gmra.mxu0 %v1253
      %v1530 = vpop.f32.mrf.mxu0
      %v1531 = vadd.f32 %v1286, %v1530
      %v1532 = vpop.f32.mrf.mxu0
      %v1533 = vpop.f32.mrf.mxu0
      %v1534 = vadd.f32 %v1286, %v1533
      %v1535 = vpop.f32.mrf.mxu0
      %1536 = vmatprep.mubr.bf16.mxu0 0
      %1537 = vmatmul.mubr.bf16.gmra.mxu0 %v1254
      %v1538 = vpop.f32.mrf.mxu0
      %v1539 = vadd.f32 %v1286, %v1538
      %v1540 = vpop.f32.mrf.mxu0
      %v1541 = vpop.f32.mrf.mxu0
      %v1542 = vadd.f32 %v1286, %v1541
      %v1543 = vpop.f32.mrf.mxu0
      %1544 = vmatprep.mubr.bf16.mxu0 0
      %1545 = vmatmul.mubr.bf16.gmra.mxu0 %v1255
      %v1546 = vpop.f32.mrf.mxu0
      %v1547 = vadd.f32 %v1286, %v1546
      %v1548 = vpop.f32.mrf.mxu0
      %v1549 = vpop.f32.mrf.mxu0
      %v1550 = vadd.f32 %v1286, %v1549
      %v1551 = vpop.f32.mrf.mxu0
      %1552 = vmatprep.mubr.bf16.mxu0 0
      %1553 = vmatmul.mubr.bf16.gmra.mxu0 %v1256
      %v1554 = vpop.f32.mrf.mxu0
      %v1555 = vadd.f32 %v1286, %v1554
      %v1556 = vpop.f32.mrf.mxu0
      %v1557 = vpop.f32.mrf.mxu0
      %v1558 = vadd.f32 %v1286, %v1557
      %v1559 = vpop.f32.mrf.mxu0
      %1560 = vmatprep.mubr.bf16.mxu0 0
      %1561 = vmatmul.mubr.bf16.gmra.mxu0 %v1257
      %v1562 = vpop.f32.mrf.mxu0
      %v1563 = vadd.f32 %v1286, %v1562
      %v1564 = vpop.f32.mrf.mxu0
      %v1565 = vpop.f32.mrf.mxu0
      %v1566 = vadd.f32 %v1286, %v1565
      %v1567 = vpop.f32.mrf.mxu0
      %1568 = vmatprep.mubr.bf16.mxu0 0
      %1569 = vmatmul.mubr.bf16.gmra.mxu0 %v1258
      %v1570 = vpop.f32.mrf.mxu0
      %v1571 = vadd.f32 %v1286, %v1570
      %v1572 = vpop.f32.mrf.mxu0
      %v1573 = vpop.f32.mrf.mxu0
      %v1574 = vadd.f32 %v1286, %v1573
      %v1575 = vpop.f32.mrf.mxu0
      %1576 = vmatprep.mubr.bf16.mxu0 0
      %1577 = vmatmul.mubr.bf16.gmra.mxu0 %v1259
      %v1578 = vpop.f32.mrf.mxu0
      %v1579 = vadd.f32 %v1286, %v1578
      %v1580 = vpop.f32.mrf.mxu0
      %v1581 = vpop.f32.mrf.mxu0
      %v1582 = vadd.f32 %v1286, %v1581
      %v1583 = vpop.f32.mrf.mxu0
      %1584 = vmatprep.mubr.bf16.mxu0 0
      %1585 = vmatmul.mubr.bf16.gmra.mxu0 %v1260
      %v1586 = vpop.f32.mrf.mxu0
      %v1587 = vadd.f32 %v1286, %v1586
      %v1588 = vpop.f32.mrf.mxu0
      %v1589 = vpop.f32.mrf.mxu0
      %v1590 = vadd.f32 %v1286, %v1589
      %v1591 = vpop.f32.mrf.mxu0
      %1592 = vmatprep.mubr.bf16.mxu0 0
      %1593 = vmatmul.mubr.bf16.gmra.mxu0 %v1261
      %v1594 = vpop.f32.mrf.mxu0
      %v1595 = vadd.f32 %v1286, %v1594
      %v1596 = vpop.f32.mrf.mxu0
      %v1597 = vpop.f32.mrf.mxu0
      %v1598 = vadd.f32 %v1286, %v1597
      %v1599 = vpop.f32.mrf.mxu0
      %1600 = vmatprep.mubr.bf16.mxu0 0
      %1601 = vmatmul.mubr.bf16.gmra.mxu0 %v1262
      %v1602 = vpop.f32.mrf.mxu0
      %v1603 = vadd.f32 %v1286, %v1602
      %v1604 = vpop.f32.mrf.mxu0
      %v1605 = vpop.f32.mrf.mxu0
      %v1606 = vadd.f32 %v1286, %v1605
      %v1607 = vpop.f32.mrf.mxu0
      %1608 = vmatprep.mubr.bf16.mxu0 0
      %1609 = vmatmul.mubr.bf16.gmra.mxu0 %v1263
      %v1610 = vpop.f32.mrf.mxu0
      %v1611 = vadd.f32 %v1286, %v1610
      %v1612 = vpop.f32.mrf.mxu0
      %v1613 = vpop.f32.mrf.mxu0
      %v1614 = vadd.f32 %v1286, %v1613
      %v1615 = vpop.f32.mrf.mxu0
      %1616 = vmatprep.mubr.bf16.mxu0 0
      %1617 = vmatmul.mubr.bf16.gmra.mxu0 %v1264
      %v1618 = vpop.f32.mrf.mxu0
      %v1619 = vadd.f32 %v1286, %v1618
      %v1620 = vpop.f32.mrf.mxu0
      %v1621 = vpop.f32.mrf.mxu0
      %v1622 = vadd.f32 %v1286, %v1621
      %v1623 = vpop.f32.mrf.mxu0
      %1624 = vdwg.mxu0
      %v1625 = vtanh.pop %v1371
      %v1626 = vtanh.pop %v1374
      %v1627 = vtanh.pop %v1379
      %v1628 = vtanh.pop %v1382
      %v1629 = vtanh.pop %v1387
      %v1630 = vtanh.pop %v1390
      %v1631 = vtanh.pop %v1395
      %v1632 = vtanh.pop %v1398
      %v1633 = vtanh.pop %v1403
      %v1634 = vtanh.pop %v1406
      %v1635 = vtanh.pop %v1411
      %v1636 = vtanh.pop %v1414
      %v1637 = vtanh.pop %v1419
      %v1638 = vtanh.pop %v1422
      %v1639 = vtanh.pop %v1427
      %v1640 = vtanh.pop %v1430
      %v1641 = vtanh.pop %v1435
      %v1642 = vtanh.pop %v1438
      %v1643 = vtanh.pop %v1443
      %v1644 = vtanh.pop %v1446
      %v1645 = vtanh.pop %v1451
      %v1646 = vtanh.pop %v1454
      %v1647 = vtanh.pop %v1459
      %v1648 = vtanh.pop %v1462
      %v1649 = vtanh.pop %v1467
      %v1650 = vtanh.pop %v1470
      %v1651 = vtanh.pop %v1475
      %v1652 = vtanh.pop %v1478
      %v1653 = vtanh.pop %v1483
      %v1654 = vtanh.pop %v1486
      %v1655 = vtanh.pop %v1491
      %v1656 = vtanh.pop %v1494
      %v1657 = vtanh.pop %v1499
      %v1658 = vtanh.pop %v1502
      %v1659 = vtanh.pop %v1507
      %v1660 = vtanh.pop %v1510
      %v1661 = vtanh.pop %v1515
      %v1662 = vtanh.pop %v1518
      %v1663 = vtanh.pop %v1523
      %v1664 = vtanh.pop %v1526
      %v1665 = vtanh.pop %v1531
      %v1666 = vtanh.pop %v1534
      %v1667 = vtanh.pop %v1539
      %v1668 = vtanh.pop %v1542
      %v1669 = vtanh.pop %v1547
      %v1670 = vtanh.pop %v1550
      %v1671 = vtanh.pop %v1555
      %v1672 = vtanh.pop %v1558
      %v1673 = vtanh.pop %v1563
      %v1674 = vtanh.pop %v1566
      %v1675 = vtanh.pop %v1571
      %v1676 = vtanh.pop %v1574
      %v1677 = vtanh.pop %v1579
      %v1678 = vtanh.pop %v1582
      %v1679 = vtanh.pop %v1587
      %v1680 = vtanh.pop %v1590
      %v1681 = vtanh.pop %v1595
      %v1682 = vtanh.pop %v1598
      %v1683 = vtanh.pop %v1603
      %v1684 = vtanh.pop %v1606
      %v1685 = vtanh.pop %v1611
      %v1686 = vtanh.pop %v1614
      %v1687 = vtanh.pop %v1619
      %v1688 = vtanh.pop %v1622
      %v1689 = vpack.c.bf16 %v1626, %v1625
      %v1690 = vpack.c.bf16 %v1628, %v1627
      %v1691 = vpack.c.bf16 %v1630, %v1629
      %v1692 = vpack.c.bf16 %v1632, %v1631
      %v1693 = vpack.c.bf16 %v1634, %v1633
      %v1694 = vpack.c.bf16 %v1636, %v1635
      %v1695 = vpack.c.bf16 %v1638, %v1637
      %v1696 = vpack.c.bf16 %v1640, %v1639
      %v1697 = vpack.c.bf16 %v1642, %v1641
      %v1698 = vpack.c.bf16 %v1644, %v1643
      %v1699 = vpack.c.bf16 %v1646, %v1645
      %v1700 = vpack.c.bf16 %v1648, %v1647
      %v1701 = vpack.c.bf16 %v1650, %v1649
      %v1702 = vpack.c.bf16 %v1652, %v1651
      %v1703 = vpack.c.bf16 %v1654, %v1653
      %v1704 = vpack.c.bf16 %v1656, %v1655
      %v1705 = vpack.c.bf16 %v1658, %v1657
      %v1706 = vpack.c.bf16 %v1660, %v1659
      %v1707 = vpack.c.bf16 %v1662, %v1661
      %v1708 = vpack.c.bf16 %v1664, %v1663
      %v1709 = vpack.c.bf16 %v1666, %v1665
      %v1710 = vpack.c.bf16 %v1668, %v1667
      %v1711 = vpack.c.bf16 %v1670, %v1669
      %v1712 = vpack.c.bf16 %v1672, %v1671
      %v1713 = vpack.c.bf16 %v1674, %v1673
      %v1714 = vpack.c.bf16 %v1676, %v1675
      %v1715 = vpack.c.bf16 %v1678, %v1677
      %v1716 = vpack.c.bf16 %v1680, %v1679
      %v1717 = vpack.c.bf16 %v1682, %v1681
      %v1718 = vpack.c.bf16 %v1684, %v1683
      %v1719 = vpack.c.bf16 %v1686, %v1685
      %v1720 = vpack.c.bf16 %v1688, %v1687
      %s1721 = scalar_lea.vmem %s3, 64
      %v1722 = vld [vmem:[%s1721] sm:$0xf]
      %v1723 = vld [vmem:[%s1721 + $0x4] sm:$0xf]
      %v1724 = vld [vmem:[%s1721 + $0x8] sm:$0xf]
      %v1725 = vld [vmem:[%s1721 + $0xc] sm:$0xf]
      %v1726 = vld [vmem:[%s1721 + $0x10] sm:$0xf]
      %v1727 = vld [vmem:[%s1721 + $0x14] sm:$0xf]
      %v1728 = vld [vmem:[%s1721 + $0x18] sm:$0xf]
      %v1729 = vld [vmem:[%s1721 + $0x1c] sm:$0xf]
      %v1730 = vld [vmem:[%s1721 + $0x20] sm:$0xf]
      %v1731 = vld [vmem:[%s1721 + $0x24] sm:$0xf]
      %v1732 = vld [vmem:[%s1721 + $0x28] sm:$0xf]
      %v1733 = vld [vmem:[%s1721 + $0x2c] sm:$0xf]
      %v1734 = vld [vmem:[%s1721 + $0x30] sm:$0xf]
      %v1735 = vld [vmem:[%s1721 + $0x34] sm:$0xf]
      %v1736 = vld [vmem:[%s1721 + $0x38] sm:$0xf]
      %v1737 = vld [vmem:[%s1721 + $0x3c] sm:$0xf]
      %s1738 = scalar_lea.vmem %s4, 1
      %v1739 = vld [vmem:[%s1738] sm:$0x1]
      %v1741 = vlaneseq
      %v1742 = vshrl.u32 %v1741, 7
      %v1743 = vsub.s32 0, %v1742
      %v1744 = vrot.slane %v1739, %v1743
      %v1762 = vunpack.c.l.b16 %v1722
      %v1763 = vunpack.c.l.b16 %v1723
      %v1764 = vunpack.c.l.b16 %v1724
      %v1765 = vunpack.c.l.b16 %v1725
      %v1766 = vunpack.c.l.b16 %v1726
      %v1767 = vunpack.c.l.b16 %v1727
      %v1768 = vunpack.c.l.b16 %v1728
      %v1769 = vunpack.c.l.b16 %v1729
      %v1770 = vunpack.c.l.b16 %v1730
      %v1771 = vunpack.c.l.b16 %v1731
      %v1772 = vunpack.c.l.b16 %v1732
      %v1773 = vunpack.c.l.b16 %v1733
      %v1774 = vunpack.c.l.b16 %v1734
      %v1775 = vunpack.c.l.b16 %v1735
      %v1776 = vunpack.c.l.b16 %v1736
      %v1777 = vunpack.c.l.b16 %v1737
      %v1778 = vpack.c.b16 %v1763, %v1762
      %v1779 = vpack.c.b16 %v1765, %v1764
      %v1780 = vpack.c.b16 %v1767, %v1766
      %v1781 = vpack.c.b16 %v1769, %v1768
      %v1782 = vpack.c.b16 %v1771, %v1770
      %v1783 = vpack.c.b16 %v1773, %v1772
      %v1784 = vpack.c.b16 %v1775, %v1774
      %v1785 = vpack.c.b16 %v1777, %v1776
      %1794 = vmatprep.subr.bf16.mxu0 0
      %1795 = vmatpush1.bf16.msra.mxu0 %v1785
      %1796 = vmatprep.subr.bf16.mxu0 0
      %1797 = vmatpush1.bf16.msra.mxu0 %v1784
      %1798 = vmatprep.subr.bf16.mxu0 0
      %1799 = vmatpush1.bf16.msra.mxu0 %v1783
      %1800 = vmatprep.subr.bf16.mxu0 0
      %1801 = vmatpush1.bf16.msra.mxu0 %v1782
      %1802 = vmatprep.subr.bf16.mxu0 0
      %1803 = vmatpush1.bf16.msra.mxu0 %v1781
      %1804 = vmatprep.subr.bf16.mxu0 0
      %1805 = vmatpush1.bf16.msra.mxu0 %v1780
      %1806 = vmatprep.subr.bf16.mxu0 0
      %1807 = vmatpush1.bf16.msra.mxu0 %v1779
      %1808 = vmatprep.subr.bf16.mxu0 0
      %1809 = vmatpush1.bf16.msra.mxu0 %v1778
      %1810 = vmatprep.subr.bf16.mxu0 0
      %1811 = vmatpush2.bf16.msra.mxu0 0
      %1812 = vmatprep.subr.bf16.mxu0 0
      %1813 = vmatpush2.bf16.msra.mxu0 0
      %1814 = vmatprep.subr.bf16.mxu0 0
      %1815 = vmatpush2.bf16.msra.mxu0 0
      %1816 = vmatprep.subr.bf16.mxu0 0
      %1817 = vmatpush2.bf16.msra.mxu0 0
      %1818 = vmatprep.subr.bf16.mxu0 0
      %1819 = vmatpush2.bf16.msra.mxu0 0
      %1820 = vmatprep.subr.bf16.mxu0 0
      %1821 = vmatpush2.bf16.msra.mxu0 0
      %1822 = vmatprep.subr.bf16.mxu0 0
      %1823 = vmatpush2.bf16.msra.mxu0 0
      %1824 = vmatprep.subr.bf16.mxu0 0
      %1825 = vmatpush2.bf16.msra.mxu0 0
      %1826 = vmatprep.mubr.bf16.mxu0 0
      %1827 = vmatmul.mubr.bf16.gmra.mxu0 %v1689
      %v1828 = vpop.f32.mrf.mxu0
      %v1829 = vadd.f32 %v1744, %v1828
      %v1830 = vpop.f32.mrf.mxu0
      %v1831 = vpop.f32.mrf.mxu0
      %v1832 = vadd.f32 %v1744, %v1831
      %v1833 = vpop.f32.mrf.mxu0
      %1834 = vmatprep.mubr.bf16.mxu0 0
      %1835 = vmatmul.mubr.bf16.gmra.mxu0 %v1690
      %v1836 = vpop.f32.mrf.mxu0
      %v1837 = vadd.f32 %v1744, %v1836
      %v1838 = vpop.f32.mrf.mxu0
      %v1839 = vpop.f32.mrf.mxu0
      %v1840 = vadd.f32 %v1744, %v1839
      %v1841 = vpop.f32.mrf.mxu0
      %1842 = vmatprep.mubr.bf16.mxu0 0
      %1843 = vmatmul.mubr.bf16.gmra.mxu0 %v1691
      %v1844 = vpop.f32.mrf.mxu0
      %v1845 = vadd.f32 %v1744, %v1844
      %v1846 = vpop.f32.mrf.mxu0
      %v1847 = vpop.f32.mrf.mxu0
      %v1848 = vadd.f32 %v1744, %v1847
      %v1849 = vpop.f32.mrf.mxu0
      %1850 = vmatprep.mubr.bf16.mxu0 0
      %1851 = vmatmul.mubr.bf16.gmra.mxu0 %v1692
      %v1852 = vpop.f32.mrf.mxu0
      %v1853 = vadd.f32 %v1744, %v1852
      %v1854 = vpop.f32.mrf.mxu0
      %v1855 = vpop.f32.mrf.mxu0
      %v1856 = vadd.f32 %v1744, %v1855
      %v1857 = vpop.f32.mrf.mxu0
      %1858 = vmatprep.mubr.bf16.mxu0 0
      %1859 = vmatmul.mubr.bf16.gmra.mxu0 %v1693
      %v1860 = vpop.f32.mrf.mxu0
      %v1861 = vadd.f32 %v1744, %v1860
      %v1862 = vpop.f32.mrf.mxu0
      %v1863 = vpop.f32.mrf.mxu0
      %v1864 = vadd.f32 %v1744, %v1863
      %v1865 = vpop.f32.mrf.mxu0
      %1866 = vmatprep.mubr.bf16.mxu0 0
      %1867 = vmatmul.mubr.bf16.gmra.mxu0 %v1694
      %v1868 = vpop.f32.mrf.mxu0
      %v1869 = vadd.f32 %v1744, %v1868
      %v1870 = vpop.f32.mrf.mxu0
      %v1871 = vpop.f32.mrf.mxu0
      %v1872 = vadd.f32 %v1744, %v1871
      %v1873 = vpop.f32.mrf.mxu0
      %1874 = vmatprep.mubr.bf16.mxu0 0
      %1875 = vmatmul.mubr.bf16.gmra.mxu0 %v1695
      %v1876 = vpop.f32.mrf.mxu0
      %v1877 = vadd.f32 %v1744, %v1876
      %v1878 = vpop.f32.mrf.mxu0
      %v1879 = vpop.f32.mrf.mxu0
      %v1880 = vadd.f32 %v1744, %v1879
      %v1881 = vpop.f32.mrf.mxu0
      %1882 = vmatprep.mubr.bf16.mxu0 0
      %1883 = vmatmul.mubr.bf16.gmra.mxu0 %v1696
      %v1884 = vpop.f32.mrf.mxu0
      %v1885 = vadd.f32 %v1744, %v1884
      %v1886 = vpop.f32.mrf.mxu0
      %v1887 = vpop.f32.mrf.mxu0
      %v1888 = vadd.f32 %v1744, %v1887
      %v1889 = vpop.f32.mrf.mxu0
      %1890 = vmatprep.mubr.bf16.mxu0 0
      %1891 = vmatmul.mubr.bf16.gmra.mxu0 %v1697
      %v1892 = vpop.f32.mrf.mxu0
      %v1893 = vadd.f32 %v1744, %v1892
      %v1894 = vpop.f32.mrf.mxu0
      %v1895 = vpop.f32.mrf.mxu0
      %v1896 = vadd.f32 %v1744, %v1895
      %v1897 = vpop.f32.mrf.mxu0
      %1898 = vmatprep.mubr.bf16.mxu0 0
      %1899 = vmatmul.mubr.bf16.gmra.mxu0 %v1698
      %v1900 = vpop.f32.mrf.mxu0
      %v1901 = vadd.f32 %v1744, %v1900
      %v1902 = vpop.f32.mrf.mxu0
      %v1903 = vpop.f32.mrf.mxu0
      %v1904 = vadd.f32 %v1744, %v1903
      %v1905 = vpop.f32.mrf.mxu0
      %1906 = vmatprep.mubr.bf16.mxu0 0
      %1907 = vmatmul.mubr.bf16.gmra.mxu0 %v1699
      %v1908 = vpop.f32.mrf.mxu0
      %v1909 = vadd.f32 %v1744, %v1908
      %v1910 = vpop.f32.mrf.mxu0
      %v1911 = vpop.f32.mrf.mxu0
      %v1912 = vadd.f32 %v1744, %v1911
      %v1913 = vpop.f32.mrf.mxu0
      %1914 = vmatprep.mubr.bf16.mxu0 0
      %1915 = vmatmul.mubr.bf16.gmra.mxu0 %v1700
      %v1916 = vpop.f32.mrf.mxu0
      %v1917 = vadd.f32 %v1744, %v1916
      %v1918 = vpop.f32.mrf.mxu0
      %v1919 = vpop.f32.mrf.mxu0
      %v1920 = vadd.f32 %v1744, %v1919
      %v1921 = vpop.f32.mrf.mxu0
      %1922 = vmatprep.mubr.bf16.mxu0 0
      %1923 = vmatmul.mubr.bf16.gmra.mxu0 %v1701
      %v1924 = vpop.f32.mrf.mxu0
      %v1925 = vadd.f32 %v1744, %v1924
      %v1926 = vpop.f32.mrf.mxu0
      %v1927 = vpop.f32.mrf.mxu0
      %v1928 = vadd.f32 %v1744, %v1927
      %v1929 = vpop.f32.mrf.mxu0
      %1930 = vmatprep.mubr.bf16.mxu0 0
      %1931 = vmatmul.mubr.bf16.gmra.mxu0 %v1702
      %v1932 = vpop.f32.mrf.mxu0
      %v1933 = vadd.f32 %v1744, %v1932
      %v1934 = vpop.f32.mrf.mxu0
      %v1935 = vpop.f32.mrf.mxu0
      %v1936 = vadd.f32 %v1744, %v1935
      %v1937 = vpop.f32.mrf.mxu0
      %1938 = vmatprep.mubr.bf16.mxu0 0
      %1939 = vmatmul.mubr.bf16.gmra.mxu0 %v1703
      %v1940 = vpop.f32.mrf.mxu0
      %v1941 = vadd.f32 %v1744, %v1940
      %v1942 = vpop.f32.mrf.mxu0
      %v1943 = vpop.f32.mrf.mxu0
      %v1944 = vadd.f32 %v1744, %v1943
      %v1945 = vpop.f32.mrf.mxu0
      %1946 = vmatprep.mubr.bf16.mxu0 0
      %1947 = vmatmul.mubr.bf16.gmra.mxu0 %v1704
      %v1948 = vpop.f32.mrf.mxu0
      %v1949 = vadd.f32 %v1744, %v1948
      %v1950 = vpop.f32.mrf.mxu0
      %v1951 = vpop.f32.mrf.mxu0
      %v1952 = vadd.f32 %v1744, %v1951
      %v1953 = vpop.f32.mrf.mxu0
      %1954 = vmatprep.mubr.bf16.mxu0 0
      %1955 = vmatmul.mubr.bf16.gmra.mxu0 %v1705
      %v1956 = vpop.f32.mrf.mxu0
      %v1957 = vadd.f32 %v1744, %v1956
      %v1958 = vpop.f32.mrf.mxu0
      %v1959 = vpop.f32.mrf.mxu0
      %v1960 = vadd.f32 %v1744, %v1959
      %v1961 = vpop.f32.mrf.mxu0
      %1962 = vmatprep.mubr.bf16.mxu0 0
      %1963 = vmatmul.mubr.bf16.gmra.mxu0 %v1706
      %v1964 = vpop.f32.mrf.mxu0
      %v1965 = vadd.f32 %v1744, %v1964
      %v1966 = vpop.f32.mrf.mxu0
      %v1967 = vpop.f32.mrf.mxu0
      %v1968 = vadd.f32 %v1744, %v1967
      %v1969 = vpop.f32.mrf.mxu0
      %1970 = vmatprep.mubr.bf16.mxu0 0
      %1971 = vmatmul.mubr.bf16.gmra.mxu0 %v1707
      %v1972 = vpop.f32.mrf.mxu0
      %v1973 = vadd.f32 %v1744, %v1972
      %v1974 = vpop.f32.mrf.mxu0
      %v1975 = vpop.f32.mrf.mxu0
      %v1976 = vadd.f32 %v1744, %v1975
      %v1977 = vpop.f32.mrf.mxu0
      %1978 = vmatprep.mubr.bf16.mxu0 0
      %1979 = vmatmul.mubr.bf16.gmra.mxu0 %v1708
      %v1980 = vpop.f32.mrf.mxu0
      %v1981 = vadd.f32 %v1744, %v1980
      %v1982 = vpop.f32.mrf.mxu0
      %v1983 = vpop.f32.mrf.mxu0
      %v1984 = vadd.f32 %v1744, %v1983
      %v1985 = vpop.f32.mrf.mxu0
      %1986 = vmatprep.mubr.bf16.mxu0 0
      %1987 = vmatmul.mubr.bf16.gmra.mxu0 %v1709
      %v1988 = vpop.f32.mrf.mxu0
      %v1989 = vadd.f32 %v1744, %v1988
      %v1990 = vpop.f32.mrf.mxu0
      %v1991 = vpop.f32.mrf.mxu0
      %v1992 = vadd.f32 %v1744, %v1991
      %v1993 = vpop.f32.mrf.mxu0
      %1994 = vmatprep.mubr.bf16.mxu0 0
      %1995 = vmatmul.mubr.bf16.gmra.mxu0 %v1710
      %v1996 = vpop.f32.mrf.mxu0
      %v1997 = vadd.f32 %v1744, %v1996
      %v1998 = vpop.f32.mrf.mxu0
      %v1999 = vpop.f32.mrf.mxu0
      %v2000 = vadd.f32 %v1744, %v1999
      %v2001 = vpop.f32.mrf.mxu0
      %2002 = vmatprep.mubr.bf16.mxu0 0
      %2003 = vmatmul.mubr.bf16.gmra.mxu0 %v1711
      %v2004 = vpop.f32.mrf.mxu0
      %v2005 = vadd.f32 %v1744, %v2004
      %v2006 = vpop.f32.mrf.mxu0
      %v2007 = vpop.f32.mrf.mxu0
      %v2008 = vadd.f32 %v1744, %v2007
      %v2009 = vpop.f32.mrf.mxu0
      %2010 = vmatprep.mubr.bf16.mxu0 0
      %2011 = vmatmul.mubr.bf16.gmra.mxu0 %v1712
      %v2012 = vpop.f32.mrf.mxu0
      %v2013 = vadd.f32 %v1744, %v2012
      %v2014 = vpop.f32.mrf.mxu0
      %v2015 = vpop.f32.mrf.mxu0
      %v2016 = vadd.f32 %v1744, %v2015
      %v2017 = vpop.f32.mrf.mxu0
      %2018 = vmatprep.mubr.bf16.mxu0 0
      %2019 = vmatmul.mubr.bf16.gmra.mxu0 %v1713
      %v2020 = vpop.f32.mrf.mxu0
      %v2021 = vadd.f32 %v1744, %v2020
      %v2022 = vpop.f32.mrf.mxu0
      %v2023 = vpop.f32.mrf.mxu0
      %v2024 = vadd.f32 %v1744, %v2023
      %v2025 = vpop.f32.mrf.mxu0
      %2026 = vmatprep.mubr.bf16.mxu0 0
      %2027 = vmatmul.mubr.bf16.gmra.mxu0 %v1714
      %v2028 = vpop.f32.mrf.mxu0
      %v2029 = vadd.f32 %v1744, %v2028
      %v2030 = vpop.f32.mrf.mxu0
      %v2031 = vpop.f32.mrf.mxu0
      %v2032 = vadd.f32 %v1744, %v2031
      %v2033 = vpop.f32.mrf.mxu0
      %2034 = vmatprep.mubr.bf16.mxu0 0
      %2035 = vmatmul.mubr.bf16.gmra.mxu0 %v1715
      %v2036 = vpop.f32.mrf.mxu0
      %v2037 = vadd.f32 %v1744, %v2036
      %v2038 = vpop.f32.mrf.mxu0
      %v2039 = vpop.f32.mrf.mxu0
      %v2040 = vadd.f32 %v1744, %v2039
      %v2041 = vpop.f32.mrf.mxu0
      %2042 = vmatprep.mubr.bf16.mxu0 0
      %2043 = vmatmul.mubr.bf16.gmra.mxu0 %v1716
      %v2044 = vpop.f32.mrf.mxu0
      %v2045 = vadd.f32 %v1744, %v2044
      %v2046 = vpop.f32.mrf.mxu0
      %v2047 = vpop.f32.mrf.mxu0
      %v2048 = vadd.f32 %v1744, %v2047
      %v2049 = vpop.f32.mrf.mxu0
      %2050 = vmatprep.mubr.bf16.mxu0 0
      %2051 = vmatmul.mubr.bf16.gmra.mxu0 %v1717
      %v2052 = vpop.f32.mrf.mxu0
      %v2053 = vadd.f32 %v1744, %v2052
      %v2054 = vpop.f32.mrf.mxu0
      %v2055 = vpop.f32.mrf.mxu0
      %v2056 = vadd.f32 %v1744, %v2055
      %v2057 = vpop.f32.mrf.mxu0
      %2058 = vmatprep.mubr.bf16.mxu0 0
      %2059 = vmatmul.mubr.bf16.gmra.mxu0 %v1718
      %v2060 = vpop.f32.mrf.mxu0
      %v2061 = vadd.f32 %v1744, %v2060
      %v2062 = vpop.f32.mrf.mxu0
      %v2063 = vpop.f32.mrf.mxu0
      %v2064 = vadd.f32 %v1744, %v2063
      %v2065 = vpop.f32.mrf.mxu0
      %2066 = vmatprep.mubr.bf16.mxu0 0
      %2067 = vmatmul.mubr.bf16.gmra.mxu0 %v1719
      %v2068 = vpop.f32.mrf.mxu0
      %v2069 = vadd.f32 %v1744, %v2068
      %v2070 = vpop.f32.mrf.mxu0
      %v2071 = vpop.f32.mrf.mxu0
      %v2072 = vadd.f32 %v1744, %v2071
      %v2073 = vpop.f32.mrf.mxu0
      %2074 = vmatprep.mubr.bf16.mxu0 0
      %2075 = vmatmul.mubr.bf16.gmra.mxu0 %v1720
      %v2076 = vpop.f32.mrf.mxu0
      %v2077 = vadd.f32 %v1744, %v2076
      %v2078 = vpop.f32.mrf.mxu0
      %v2079 = vpop.f32.mrf.mxu0
      %v2080 = vadd.f32 %v1744, %v2079
      %v2081 = vpop.f32.mrf.mxu0
      %2082 = vdwg.mxu0
      %v2083 = vtanh.pop %v1829
      %v2084 = vtanh.pop %v1832
      %v2085 = vtanh.pop %v1837
      %v2086 = vtanh.pop %v1840
      %v2087 = vtanh.pop %v1845
      %v2088 = vtanh.pop %v1848
      %v2089 = vtanh.pop %v1853
      %v2090 = vtanh.pop %v1856
      %v2091 = vtanh.pop %v1861
      %v2092 = vtanh.pop %v1864
      %v2093 = vtanh.pop %v1869
      %v2094 = vtanh.pop %v1872
      %v2095 = vtanh.pop %v1877
      %v2096 = vtanh.pop %v1880
      %v2097 = vtanh.pop %v1885
      %v2098 = vtanh.pop %v1888
      %v2099 = vtanh.pop %v1893
      %v2100 = vtanh.pop %v1896
      %v2101 = vtanh.pop %v1901
      %v2102 = vtanh.pop %v1904
      %v2103 = vtanh.pop %v1909
      %v2104 = vtanh.pop %v1912
      %v2105 = vtanh.pop %v1917
      %v2106 = vtanh.pop %v1920
      %v2107 = vtanh.pop %v1925
      %v2108 = vtanh.pop %v1928
      %v2109 = vtanh.pop %v1933
      %v2110 = vtanh.pop %v1936
      %v2111 = vtanh.pop %v1941
      %v2112 = vtanh.pop %v1944
      %v2113 = vtanh.pop %v1949
      %v2114 = vtanh.pop %v1952
      %v2115 = vtanh.pop %v1957
      %v2116 = vtanh.pop %v1960
      %v2117 = vtanh.pop %v1965
      %v2118 = vtanh.pop %v1968
      %v2119 = vtanh.pop %v1973
      %v2120 = vtanh.pop %v1976
      %v2121 = vtanh.pop %v1981
      %v2122 = vtanh.pop %v1984
      %v2123 = vtanh.pop %v1989
      %v2124 = vtanh.pop %v1992
      %v2125 = vtanh.pop %v1997
      %v2126 = vtanh.pop %v2000
      %v2127 = vtanh.pop %v2005
      %v2128 = vtanh.pop %v2008
      %v2129 = vtanh.pop %v2013
      %v2130 = vtanh.pop %v2016
      %v2131 = vtanh.pop %v2021
      %v2132 = vtanh.pop %v2024
      %v2133 = vtanh.pop %v2029
      %v2134 = vtanh.pop %v2032
      %v2135 = vtanh.pop %v2037
      %v2136 = vtanh.pop %v2040
      %v2137 = vtanh.pop %v2045
      %v2138 = vtanh.pop %v2048
      %v2139 = vtanh.pop %v2053
      %v2140 = vtanh.pop %v2056
      %v2141 = vtanh.pop %v2061
      %v2142 = vtanh.pop %v2064
      %v2143 = vtanh.pop %v2069
      %v2144 = vtanh.pop %v2072
      %v2145 = vtanh.pop %v2077
      %v2146 = vtanh.pop %v2080
      %v2147 = vpack.c.bf16 %v2084, %v2083
      %v2148 = vpack.c.bf16 %v2086, %v2085
      %v2149 = vpack.c.bf16 %v2088, %v2087
      %v2150 = vpack.c.bf16 %v2090, %v2089
      %v2151 = vpack.c.bf16 %v2092, %v2091
      %v2152 = vpack.c.bf16 %v2094, %v2093
      %v2153 = vpack.c.bf16 %v2096, %v2095
      %v2154 = vpack.c.bf16 %v2098, %v2097
      %v2155 = vpack.c.bf16 %v2100, %v2099
      %v2156 = vpack.c.bf16 %v2102, %v2101
      %v2157 = vpack.c.bf16 %v2104, %v2103
      %v2158 = vpack.c.bf16 %v2106, %v2105
      %v2159 = vpack.c.bf16 %v2108, %v2107
      %v2160 = vpack.c.bf16 %v2110, %v2109
      %v2161 = vpack.c.bf16 %v2112, %v2111
      %v2162 = vpack.c.bf16 %v2114, %v2113
      %v2163 = vpack.c.bf16 %v2116, %v2115
      %v2164 = vpack.c.bf16 %v2118, %v2117
      %v2165 = vpack.c.bf16 %v2120, %v2119
      %v2166 = vpack.c.bf16 %v2122, %v2121
      %v2167 = vpack.c.bf16 %v2124, %v2123
      %v2168 = vpack.c.bf16 %v2126, %v2125
      %v2169 = vpack.c.bf16 %v2128, %v2127
      %v2170 = vpack.c.bf16 %v2130, %v2129
      %v2171 = vpack.c.bf16 %v2132, %v2131
      %v2172 = vpack.c.bf16 %v2134, %v2133
      %v2173 = vpack.c.bf16 %v2136, %v2135
      %v2174 = vpack.c.bf16 %v2138, %v2137
      %v2175 = vpack.c.bf16 %v2140, %v2139
      %v2176 = vpack.c.bf16 %v2142, %v2141
      %v2177 = vpack.c.bf16 %v2144, %v2143
      %v2178 = vpack.c.bf16 %v2146, %v2145
      %s2179 = scalar_lea.vmem %s3, 128
      %v2180 = vld [vmem:[%s2179] sm:$0xf]
      %v2181 = vld [vmem:[%s2179 + $0x4] sm:$0xf]
      %v2182 = vld [vmem:[%s2179 + $0x8] sm:$0xf]
      %v2183 = vld [vmem:[%s2179 + $0xc] sm:$0xf]
      %v2184 = vld [vmem:[%s2179 + $0x10] sm:$0xf]
      %v2185 = vld [vmem:[%s2179 + $0x14] sm:$0xf]
      %v2186 = vld [vmem:[%s2179 + $0x18] sm:$0xf]
      %v2187 = vld [vmem:[%s2179 + $0x1c] sm:$0xf]
      %v2188 = vld [vmem:[%s2179 + $0x20] sm:$0xf]
      %v2189 = vld [vmem:[%s2179 + $0x24] sm:$0xf]
      %v2190 = vld [vmem:[%s2179 + $0x28] sm:$0xf]
      %v2191 = vld [vmem:[%s2179 + $0x2c] sm:$0xf]
      %v2192 = vld [vmem:[%s2179 + $0x30] sm:$0xf]
      %v2193 = vld [vmem:[%s2179 + $0x34] sm:$0xf]
      %v2194 = vld [vmem:[%s2179 + $0x38] sm:$0xf]
      %v2195 = vld [vmem:[%s2179 + $0x3c] sm:$0xf]
      %s2196 = scalar_lea.vmem %s4, 2
      %v2197 = vld [vmem:[%s2196] sm:$0x1]
      %v2199 = vlaneseq
      %v2200 = vshrl.u32 %v2199, 7
      %v2201 = vsub.s32 0, %v2200
      %v2202 = vrot.slane %v2197, %v2201
      %v2220 = vunpack.c.l.b16 %v2180
      %v2221 = vunpack.c.l.b16 %v2181
      %v2222 = vunpack.c.l.b16 %v2182
      %v2223 = vunpack.c.l.b16 %v2183
      %v2224 = vunpack.c.l.b16 %v2184
      %v2225 = vunpack.c.l.b16 %v2185
      %v2226 = vunpack.c.l.b16 %v2186
      %v2227 = vunpack.c.l.b16 %v2187
      %v2228 = vunpack.c.l.b16 %v2188
      %v2229 = vunpack.c.l.b16 %v2189
      %v2230 = vunpack.c.l.b16 %v2190
      %v2231 = vunpack.c.l.b16 %v2191
      %v2232 = vunpack.c.l.b16 %v2192
      %v2233 = vunpack.c.l.b16 %v2193
      %v2234 = vunpack.c.l.b16 %v2194
      %v2235 = vunpack.c.l.b16 %v2195
      %v2236 = vpack.c.b16 %v2221, %v2220
      %v2237 = vpack.c.b16 %v2223, %v2222
      %v2238 = vpack.c.b16 %v2225, %v2224
      %v2239 = vpack.c.b16 %v2227, %v2226
      %v2240 = vpack.c.b16 %v2229, %v2228
      %v2241 = vpack.c.b16 %v2231, %v2230
      %v2242 = vpack.c.b16 %v2233, %v2232
      %v2243 = vpack.c.b16 %v2235, %v2234
      %2252 = vmatprep.subr.bf16.mxu0 0
      %2253 = vmatpush1.bf16.msra.mxu0 %v2243
      %2254 = vmatprep.subr.bf16.mxu0 0
      %2255 = vmatpush1.bf16.msra.mxu0 %v2242
      %2256 = vmatprep.subr.bf16.mxu0 0
      %2257 = vmatpush1.bf16.msra.mxu0 %v2241
      %2258 = vmatprep.subr.bf16.mxu0 0
      %2259 = vmatpush1.bf16.msra.mxu0 %v2240
      %2260 = vmatprep.subr.bf16.mxu0 0
      %2261 = vmatpush1.bf16.msra.mxu0 %v2239
      %2262 = vmatprep.subr.bf16.mxu0 0
      %2263 = vmatpush1.bf16.msra.mxu0 %v2238
      %2264 = vmatprep.subr.bf16.mxu0 0
      %2265 = vmatpush1.bf16.msra.mxu0 %v2237
      %2266 = vmatprep.subr.bf16.mxu0 0
      %2267 = vmatpush1.bf16.msra.mxu0 %v2236
      %2268 = vmatprep.subr.bf16.mxu0 0
      %2269 = vmatpush2.bf16.msra.mxu0 0
      %2270 = vmatprep.subr.bf16.mxu0 0
      %2271 = vmatpush2.bf16.msra.mxu0 0
      %2272 = vmatprep.subr.bf16.mxu0 0
      %2273 = vmatpush2.bf16.msra.mxu0 0
      %2274 = vmatprep.subr.bf16.mxu0 0
      %2275 = vmatpush2.bf16.msra.mxu0 0
      %2276 = vmatprep.subr.bf16.mxu0 0
      %2277 = vmatpush2.bf16.msra.mxu0 0
      %2278 = vmatprep.subr.bf16.mxu0 0
      %2279 = vmatpush2.bf16.msra.mxu0 0
      %2280 = vmatprep.subr.bf16.mxu0 0
      %2281 = vmatpush2.bf16.msra.mxu0 0
      %2282 = vmatprep.subr.bf16.mxu0 0
      %2283 = vmatpush2.bf16.msra.mxu0 0
      %2284 = vmatprep.mubr.bf16.mxu0 0
      %2285 = vmatmul.mubr.bf16.gmra.mxu0 %v2147
      %v2286 = vpop.f32.mrf.mxu0
      %v2287 = vadd.f32 %v2202, %v2286
      %v2288 = vpop.f32.mrf.mxu0
      %v2289 = vpop.f32.mrf.mxu0
      %v2290 = vadd.f32 %v2202, %v2289
      %v2291 = vpop.f32.mrf.mxu0
      %2292 = vmatprep.mubr.bf16.mxu0 0
      %2293 = vmatmul.mubr.bf16.gmra.mxu0 %v2148
      %v2294 = vpop.f32.mrf.mxu0
      %v2295 = vadd.f32 %v2202, %v2294
      %v2296 = vpop.f32.mrf.mxu0
      %v2297 = vpop.f32.mrf.mxu0
      %v2298 = vadd.f32 %v2202, %v2297
      %v2299 = vpop.f32.mrf.mxu0
      %2300 = vmatprep.mubr.bf16.mxu0 0
      %2301 = vmatmul.mubr.bf16.gmra.mxu0 %v2149
      %v2302 = vpop.f32.mrf.mxu0
      %v2303 = vadd.f32 %v2202, %v2302
      %v2304 = vpop.f32.mrf.mxu0
      %v2305 = vpop.f32.mrf.mxu0
      %v2306 = vadd.f32 %v2202, %v2305
      %v2307 = vpop.f32.mrf.mxu0
      %2308 = vmatprep.mubr.bf16.mxu0 0
      %2309 = vmatmul.mubr.bf16.gmra.mxu0 %v2150
      %v2310 = vpop.f32.mrf.mxu0
      %v2311 = vadd.f32 %v2202, %v2310
      %v2312 = vpop.f32.mrf.mxu0
      %v2313 = vpop.f32.mrf.mxu0
      %v2314 = vadd.f32 %v2202, %v2313
      %v2315 = vpop.f32.mrf.mxu0
      %2316 = vmatprep.mubr.bf16.mxu0 0
      %2317 = vmatmul.mubr.bf16.gmra.mxu0 %v2151
      %v2318 = vpop.f32.mrf.mxu0
      %v2319 = vadd.f32 %v2202, %v2318
      %v2320 = vpop.f32.mrf.mxu0
      %v2321 = vpop.f32.mrf.mxu0
      %v2322 = vadd.f32 %v2202, %v2321
      %v2323 = vpop.f32.mrf.mxu0
      %2324 = vmatprep.mubr.bf16.mxu0 0
      %2325 = vmatmul.mubr.bf16.gmra.mxu0 %v2152
      %v2326 = vpop.f32.mrf.mxu0
      %v2327 = vadd.f32 %v2202, %v2326
      %v2328 = vpop.f32.mrf.mxu0
      %v2329 = vpop.f32.mrf.mxu0
      %v2330 = vadd.f32 %v2202, %v2329
      %v2331 = vpop.f32.mrf.mxu0
      %2332 = vmatprep.mubr.bf16.mxu0 0
      %2333 = vmatmul.mubr.bf16.gmra.mxu0 %v2153
      %v2334 = vpop.f32.mrf.mxu0
      %v2335 = vadd.f32 %v2202, %v2334
      %v2336 = vpop.f32.mrf.mxu0
      %v2337 = vpop.f32.mrf.mxu0
      %v2338 = vadd.f32 %v2202, %v2337
      %v2339 = vpop.f32.mrf.mxu0
      %2340 = vmatprep.mubr.bf16.mxu0 0
      %2341 = vmatmul.mubr.bf16.gmra.mxu0 %v2154
      %v2342 = vpop.f32.mrf.mxu0
      %v2343 = vadd.f32 %v2202, %v2342
      %v2344 = vpop.f32.mrf.mxu0
      %v2345 = vpop.f32.mrf.mxu0
      %v2346 = vadd.f32 %v2202, %v2345
      %v2347 = vpop.f32.mrf.mxu0
      %2348 = vmatprep.mubr.bf16.mxu0 0
      %2349 = vmatmul.mubr.bf16.gmra.mxu0 %v2155
      %v2350 = vpop.f32.mrf.mxu0
      %v2351 = vadd.f32 %v2202, %v2350
      %v2352 = vpop.f32.mrf.mxu0
      %v2353 = vpop.f32.mrf.mxu0
      %v2354 = vadd.f32 %v2202, %v2353
      %v2355 = vpop.f32.mrf.mxu0
      %2356 = vmatprep.mubr.bf16.mxu0 0
      %2357 = vmatmul.mubr.bf16.gmra.mxu0 %v2156
      %v2358 = vpop.f32.mrf.mxu0
      %v2359 = vadd.f32 %v2202, %v2358
      %v2360 = vpop.f32.mrf.mxu0
      %v2361 = vpop.f32.mrf.mxu0
      %v2362 = vadd.f32 %v2202, %v2361
      %v2363 = vpop.f32.mrf.mxu0
      %2364 = vmatprep.mubr.bf16.mxu0 0
      %2365 = vmatmul.mubr.bf16.gmra.mxu0 %v2157
      %v2366 = vpop.f32.mrf.mxu0
      %v2367 = vadd.f32 %v2202, %v2366
      %v2368 = vpop.f32.mrf.mxu0
      %v2369 = vpop.f32.mrf.mxu0
      %v2370 = vadd.f32 %v2202, %v2369
      %v2371 = vpop.f32.mrf.mxu0
      %2372 = vmatprep.mubr.bf16.mxu0 0
      %2373 = vmatmul.mubr.bf16.gmra.mxu0 %v2158
      %v2374 = vpop.f32.mrf.mxu0
      %v2375 = vadd.f32 %v2202, %v2374
      %v2376 = vpop.f32.mrf.mxu0
      %v2377 = vpop.f32.mrf.mxu0
      %v2378 = vadd.f32 %v2202, %v2377
      %v2379 = vpop.f32.mrf.mxu0
      %2380 = vmatprep.mubr.bf16.mxu0 0
      %2381 = vmatmul.mubr.bf16.gmra.mxu0 %v2159
      %v2382 = vpop.f32.mrf.mxu0
      %v2383 = vadd.f32 %v2202, %v2382
      %v2384 = vpop.f32.mrf.mxu0
      %v2385 = vpop.f32.mrf.mxu0
      %v2386 = vadd.f32 %v2202, %v2385
      %v2387 = vpop.f32.mrf.mxu0
      %2388 = vmatprep.mubr.bf16.mxu0 0
      %2389 = vmatmul.mubr.bf16.gmra.mxu0 %v2160
      %v2390 = vpop.f32.mrf.mxu0
      %v2391 = vadd.f32 %v2202, %v2390
      %v2392 = vpop.f32.mrf.mxu0
      %v2393 = vpop.f32.mrf.mxu0
      %v2394 = vadd.f32 %v2202, %v2393
      %v2395 = vpop.f32.mrf.mxu0
      %2396 = vmatprep.mubr.bf16.mxu0 0
      %2397 = vmatmul.mubr.bf16.gmra.mxu0 %v2161
      %v2398 = vpop.f32.mrf.mxu0
      %v2399 = vadd.f32 %v2202, %v2398
      %v2400 = vpop.f32.mrf.mxu0
      %v2401 = vpop.f32.mrf.mxu0
      %v2402 = vadd.f32 %v2202, %v2401
      %v2403 = vpop.f32.mrf.mxu0
      %2404 = vmatprep.mubr.bf16.mxu0 0
      %2405 = vmatmul.mubr.bf16.gmra.mxu0 %v2162
      %v2406 = vpop.f32.mrf.mxu0
      %v2407 = vadd.f32 %v2202, %v2406
      %v2408 = vpop.f32.mrf.mxu0
      %v2409 = vpop.f32.mrf.mxu0
      %v2410 = vadd.f32 %v2202, %v2409
      %v2411 = vpop.f32.mrf.mxu0
      %2412 = vmatprep.mubr.bf16.mxu0 0
      %2413 = vmatmul.mubr.bf16.gmra.mxu0 %v2163
      %v2414 = vpop.f32.mrf.mxu0
      %v2415 = vadd.f32 %v2202, %v2414
      %v2416 = vpop.f32.mrf.mxu0
      %v2417 = vpop.f32.mrf.mxu0
      %v2418 = vadd.f32 %v2202, %v2417
      %v2419 = vpop.f32.mrf.mxu0
      %2420 = vmatprep.mubr.bf16.mxu0 0
      %2421 = vmatmul.mubr.bf16.gmra.mxu0 %v2164
      %v2422 = vpop.f32.mrf.mxu0
      %v2423 = vadd.f32 %v2202, %v2422
      %v2424 = vpop.f32.mrf.mxu0
      %v2425 = vpop.f32.mrf.mxu0
      %v2426 = vadd.f32 %v2202, %v2425
      %v2427 = vpop.f32.mrf.mxu0
      %2428 = vmatprep.mubr.bf16.mxu0 0
      %2429 = vmatmul.mubr.bf16.gmra.mxu0 %v2165
      %v2430 = vpop.f32.mrf.mxu0
      %v2431 = vadd.f32 %v2202, %v2430
      %v2432 = vpop.f32.mrf.mxu0
      %v2433 = vpop.f32.mrf.mxu0
      %v2434 = vadd.f32 %v2202, %v2433
      %v2435 = vpop.f32.mrf.mxu0
      %2436 = vmatprep.mubr.bf16.mxu0 0
      %2437 = vmatmul.mubr.bf16.gmra.mxu0 %v2166
      %v2438 = vpop.f32.mrf.mxu0
      %v2439 = vadd.f32 %v2202, %v2438
      %v2440 = vpop.f32.mrf.mxu0
      %v2441 = vpop.f32.mrf.mxu0
      %v2442 = vadd.f32 %v2202, %v2441
      %v2443 = vpop.f32.mrf.mxu0
      %2444 = vmatprep.mubr.bf16.mxu0 0
      %2445 = vmatmul.mubr.bf16.gmra.mxu0 %v2167
      %v2446 = vpop.f32.mrf.mxu0
      %v2447 = vadd.f32 %v2202, %v2446
      %v2448 = vpop.f32.mrf.mxu0
      %v2449 = vpop.f32.mrf.mxu0
      %v2450 = vadd.f32 %v2202, %v2449
      %v2451 = vpop.f32.mrf.mxu0
      %2452 = vmatprep.mubr.bf16.mxu0 0
      %2453 = vmatmul.mubr.bf16.gmra.mxu0 %v2168
      %v2454 = vpop.f32.mrf.mxu0
      %v2455 = vadd.f32 %v2202, %v2454
      %v2456 = vpop.f32.mrf.mxu0
      %v2457 = vpop.f32.mrf.mxu0
      %v2458 = vadd.f32 %v2202, %v2457
      %v2459 = vpop.f32.mrf.mxu0
      %2460 = vmatprep.mubr.bf16.mxu0 0
      %2461 = vmatmul.mubr.bf16.gmra.mxu0 %v2169
      %v2462 = vpop.f32.mrf.mxu0
      %v2463 = vadd.f32 %v2202, %v2462
      %v2464 = vpop.f32.mrf.mxu0
      %v2465 = vpop.f32.mrf.mxu0
      %v2466 = vadd.f32 %v2202, %v2465
      %v2467 = vpop.f32.mrf.mxu0
      %2468 = vmatprep.mubr.bf16.mxu0 0
      %2469 = vmatmul.mubr.bf16.gmra.mxu0 %v2170
      %v2470 = vpop.f32.mrf.mxu0
      %v2471 = vadd.f32 %v2202, %v2470
      %v2472 = vpop.f32.mrf.mxu0
      %v2473 = vpop.f32.mrf.mxu0
      %v2474 = vadd.f32 %v2202, %v2473
      %v2475 = vpop.f32.mrf.mxu0
      %2476 = vmatprep.mubr.bf16.mxu0 0
      %2477 = vmatmul.mubr.bf16.gmra.mxu0 %v2171
      %v2478 = vpop.f32.mrf.mxu0
      %v2479 = vadd.f32 %v2202, %v2478
      %v2480 = vpop.f32.mrf.mxu0
      %v2481 = vpop.f32.mrf.mxu0
      %v2482 = vadd.f32 %v2202, %v2481
      %v2483 = vpop.f32.mrf.mxu0
      %2484 = vmatprep.mubr.bf16.mxu0 0
      %2485 = vmatmul.mubr.bf16.gmra.mxu0 %v2172
      %v2486 = vpop.f32.mrf.mxu0
      %v2487 = vadd.f32 %v2202, %v2486
      %v2488 = vpop.f32.mrf.mxu0
      %v2489 = vpop.f32.mrf.mxu0
      %v2490 = vadd.f32 %v2202, %v2489
      %v2491 = vpop.f32.mrf.mxu0
      %2492 = vmatprep.mubr.bf16.mxu0 0
      %2493 = vmatmul.mubr.bf16.gmra.mxu0 %v2173
      %v2494 = vpop.f32.mrf.mxu0
      %v2495 = vadd.f32 %v2202, %v2494
      %v2496 = vpop.f32.mrf.mxu0
      %v2497 = vpop.f32.mrf.mxu0
      %v2498 = vadd.f32 %v2202, %v2497
      %v2499 = vpop.f32.mrf.mxu0
      %2500 = vmatprep.mubr.bf16.mxu0 0
      %2501 = vmatmul.mubr.bf16.gmra.mxu0 %v2174
      %v2502 = vpop.f32.mrf.mxu0
      %v2503 = vadd.f32 %v2202, %v2502
      %v2504 = vpop.f32.mrf.mxu0
      %v2505 = vpop.f32.mrf.mxu0
      %v2506 = vadd.f32 %v2202, %v2505
      %v2507 = vpop.f32.mrf.mxu0
      %2508 = vmatprep.mubr.bf16.mxu0 0
      %2509 = vmatmul.mubr.bf16.gmra.mxu0 %v2175
      %v2510 = vpop.f32.mrf.mxu0
      %v2511 = vadd.f32 %v2202, %v2510
      %v2512 = vpop.f32.mrf.mxu0
      %v2513 = vpop.f32.mrf.mxu0
      %v2514 = vadd.f32 %v2202, %v2513
      %v2515 = vpop.f32.mrf.mxu0
      %2516 = vmatprep.mubr.bf16.mxu0 0
      %2517 = vmatmul.mubr.bf16.gmra.mxu0 %v2176
      %v2518 = vpop.f32.mrf.mxu0
      %v2519 = vadd.f32 %v2202, %v2518
      %v2520 = vpop.f32.mrf.mxu0
      %v2521 = vpop.f32.mrf.mxu0
      %v2522 = vadd.f32 %v2202, %v2521
      %v2523 = vpop.f32.mrf.mxu0
      %2524 = vmatprep.mubr.bf16.mxu0 0
      %2525 = vmatmul.mubr.bf16.gmra.mxu0 %v2177
      %v2526 = vpop.f32.mrf.mxu0
      %v2527 = vadd.f32 %v2202, %v2526
      %v2528 = vpop.f32.mrf.mxu0
      %v2529 = vpop.f32.mrf.mxu0
      %v2530 = vadd.f32 %v2202, %v2529
      %v2531 = vpop.f32.mrf.mxu0
      %2532 = vmatprep.mubr.bf16.mxu0 0
      %2533 = vmatmul.mubr.bf16.gmra.mxu0 %v2178
      %v2534 = vpop.f32.mrf.mxu0
      %v2535 = vadd.f32 %v2202, %v2534
      %v2536 = vpop.f32.mrf.mxu0
      %v2537 = vpop.f32.mrf.mxu0
      %v2538 = vadd.f32 %v2202, %v2537
      %v2539 = vpop.f32.mrf.mxu0
      %2540 = vdwg.mxu0
      %v2541 = vtanh.pop %v2287
      %v2542 = vtanh.pop %v2290
      %v2543 = vtanh.pop %v2295
      %v2544 = vtanh.pop %v2298
      %v2545 = vtanh.pop %v2303
      %v2546 = vtanh.pop %v2306
      %v2547 = vtanh.pop %v2311
      %v2548 = vtanh.pop %v2314
      %v2549 = vtanh.pop %v2319
      %v2550 = vtanh.pop %v2322
      %v2551 = vtanh.pop %v2327
      %v2552 = vtanh.pop %v2330
      %v2553 = vtanh.pop %v2335
      %v2554 = vtanh.pop %v2338
      %v2555 = vtanh.pop %v2343
      %v2556 = vtanh.pop %v2346
      %v2557 = vtanh.pop %v2351
      %v2558 = vtanh.pop %v2354
      %v2559 = vtanh.pop %v2359
      %v2560 = vtanh.pop %v2362
      %v2561 = vtanh.pop %v2367
      %v2562 = vtanh.pop %v2370
      %v2563 = vtanh.pop %v2375
      %v2564 = vtanh.pop %v2378
      %v2565 = vtanh.pop %v2383
      %v2566 = vtanh.pop %v2386
      %v2567 = vtanh.pop %v2391
      %v2568 = vtanh.pop %v2394
      %v2569 = vtanh.pop %v2399
      %v2570 = vtanh.pop %v2402
      %v2571 = vtanh.pop %v2407
      %v2572 = vtanh.pop %v2410
      %v2573 = vtanh.pop %v2415
      %v2574 = vtanh.pop %v2418
      %v2575 = vtanh.pop %v2423
      %v2576 = vtanh.pop %v2426
      %v2577 = vtanh.pop %v2431
      %v2578 = vtanh.pop %v2434
      %v2579 = vtanh.pop %v2439
      %v2580 = vtanh.pop %v2442
      %v2581 = vtanh.pop %v2447
      %v2582 = vtanh.pop %v2450
      %v2583 = vtanh.pop %v2455
      %v2584 = vtanh.pop %v2458
      %v2585 = vtanh.pop %v2463
      %v2586 = vtanh.pop %v2466
      %v2587 = vtanh.pop %v2471
      %v2588 = vtanh.pop %v2474
      %v2589 = vtanh.pop %v2479
      %v2590 = vtanh.pop %v2482
      %v2591 = vtanh.pop %v2487
      %v2592 = vtanh.pop %v2490
      %v2593 = vtanh.pop %v2495
      %v2594 = vtanh.pop %v2498
      %v2595 = vtanh.pop %v2503
      %v2596 = vtanh.pop %v2506
      %v2597 = vtanh.pop %v2511
      %v2598 = vtanh.pop %v2514
      %v2599 = vtanh.pop %v2519
      %v2600 = vtanh.pop %v2522
      %v2601 = vtanh.pop %v2527
      %v2602 = vtanh.pop %v2530
      %v2603 = vtanh.pop %v2535
      %v2604 = vtanh.pop %v2538
      %v2605 = vpack.c.bf16 %v2542, %v2541
      %v2606 = vpack.c.bf16 %v2544, %v2543
      %v2607 = vpack.c.bf16 %v2546, %v2545
      %v2608 = vpack.c.bf16 %v2548, %v2547
      %v2609 = vpack.c.bf16 %v2550, %v2549
      %v2610 = vpack.c.bf16 %v2552, %v2551
      %v2611 = vpack.c.bf16 %v2554, %v2553
      %v2612 = vpack.c.bf16 %v2556, %v2555
      %v2613 = vpack.c.bf16 %v2558, %v2557
      %v2614 = vpack.c.bf16 %v2560, %v2559
      %v2615 = vpack.c.bf16 %v2562, %v2561
      %v2616 = vpack.c.bf16 %v2564, %v2563
      %v2617 = vpack.c.bf16 %v2566, %v2565
      %v2618 = vpack.c.bf16 %v2568, %v2567
      %v2619 = vpack.c.bf16 %v2570, %v2569
      %v2620 = vpack.c.bf16 %v2572, %v2571
      %v2621 = vpack.c.bf16 %v2574, %v2573
      %v2622 = vpack.c.bf16 %v2576, %v2575
      %v2623 = vpack.c.bf16 %v2578, %v2577
      %v2624 = vpack.c.bf16 %v2580, %v2579
      %v2625 = vpack.c.bf16 %v2582, %v2581
      %v2626 = vpack.c.bf16 %v2584, %v2583
      %v2627 = vpack.c.bf16 %v2586, %v2585
      %v2628 = vpack.c.bf16 %v2588, %v2587
      %v2629 = vpack.c.bf16 %v2590, %v2589
      %v2630 = vpack.c.bf16 %v2592, %v2591
      %v2631 = vpack.c.bf16 %v2594, %v2593
      %v2632 = vpack.c.bf16 %v2596, %v2595
      %v2633 = vpack.c.bf16 %v2598, %v2597
      %v2634 = vpack.c.bf16 %v2600, %v2599
      %v2635 = vpack.c.bf16 %v2602, %v2601
      %v2636 = vpack.c.bf16 %v2604, %v2603
      %s2637 = scalar_lea.vmem %s3, 192
      %v2638 = vld [vmem:[%s2637] sm:$0xf]
      %v2639 = vld [vmem:[%s2637 + $0x4] sm:$0xf]
      %v2640 = vld [vmem:[%s2637 + $0x8] sm:$0xf]
      %v2641 = vld [vmem:[%s2637 + $0xc] sm:$0xf]
      %v2642 = vld [vmem:[%s2637 + $0x10] sm:$0xf]
      %v2643 = vld [vmem:[%s2637 + $0x14] sm:$0xf]
      %v2644 = vld [vmem:[%s2637 + $0x18] sm:$0xf]
      %v2645 = vld [vmem:[%s2637 + $0x1c] sm:$0xf]
      %v2646 = vld [vmem:[%s2637 + $0x20] sm:$0xf]
      %v2647 = vld [vmem:[%s2637 + $0x24] sm:$0xf]
      %v2648 = vld [vmem:[%s2637 + $0x28] sm:$0xf]
      %v2649 = vld [vmem:[%s2637 + $0x2c] sm:$0xf]
      %v2650 = vld [vmem:[%s2637 + $0x30] sm:$0xf]
      %v2651 = vld [vmem:[%s2637 + $0x34] sm:$0xf]
      %v2652 = vld [vmem:[%s2637 + $0x38] sm:$0xf]
      %v2653 = vld [vmem:[%s2637 + $0x3c] sm:$0xf]
      %s2654 = scalar_lea.vmem %s4, 3
      %v2655 = vld [vmem:[%s2654] sm:$0x1]
      %v2657 = vlaneseq
      %v2658 = vshrl.u32 %v2657, 7
      %v2659 = vsub.s32 0, %v2658
      %v2660 = vrot.slane %v2655, %v2659
      %v2678 = vunpack.c.l.b16 %v2638
      %v2679 = vunpack.c.l.b16 %v2639
      %v2680 = vunpack.c.l.b16 %v2640
      %v2681 = vunpack.c.l.b16 %v2641
      %v2682 = vunpack.c.l.b16 %v2642
      %v2683 = vunpack.c.l.b16 %v2643
      %v2684 = vunpack.c.l.b16 %v2644
      %v2685 = vunpack.c.l.b16 %v2645
      %v2686 = vunpack.c.l.b16 %v2646
      %v2687 = vunpack.c.l.b16 %v2647
      %v2688 = vunpack.c.l.b16 %v2648
      %v2689 = vunpack.c.l.b16 %v2649
      %v2690 = vunpack.c.l.b16 %v2650
      %v2691 = vunpack.c.l.b16 %v2651
      %v2692 = vunpack.c.l.b16 %v2652
      %v2693 = vunpack.c.l.b16 %v2653
      %v2694 = vpack.c.b16 %v2679, %v2678
      %v2695 = vpack.c.b16 %v2681, %v2680
      %v2696 = vpack.c.b16 %v2683, %v2682
      %v2697 = vpack.c.b16 %v2685, %v2684
      %v2698 = vpack.c.b16 %v2687, %v2686
      %v2699 = vpack.c.b16 %v2689, %v2688
      %v2700 = vpack.c.b16 %v2691, %v2690
      %v2701 = vpack.c.b16 %v2693, %v2692
      %2710 = vmatprep.subr.bf16.mxu0 0
      %2711 = vmatpush1.bf16.msra.mxu0 %v2701
      %2712 = vmatprep.subr.bf16.mxu0 0
      %2713 = vmatpush1.bf16.msra.mxu0 %v2700
      %2714 = vmatprep.subr.bf16.mxu0 0
      %2715 = vmatpush1.bf16.msra.mxu0 %v2699
      %2716 = vmatprep.subr.bf16.mxu0 0
      %2717 = vmatpush1.bf16.msra.mxu0 %v2698
      %2718 = vmatprep.subr.bf16.mxu0 0
      %2719 = vmatpush1.bf16.msra.mxu0 %v2697
      %2720 = vmatprep.subr.bf16.mxu0 0
      %2721 = vmatpush1.bf16.msra.mxu0 %v2696
      %2722 = vmatprep.subr.bf16.mxu0 0
      %2723 = vmatpush1.bf16.msra.mxu0 %v2695
      %2724 = vmatprep.subr.bf16.mxu0 0
      %2725 = vmatpush1.bf16.msra.mxu0 %v2694
      %2726 = vmatprep.subr.bf16.mxu0 0
      %2727 = vmatpush2.bf16.msra.mxu0 0
      %2728 = vmatprep.subr.bf16.mxu0 0
      %2729 = vmatpush2.bf16.msra.mxu0 0
      %2730 = vmatprep.subr.bf16.mxu0 0
      %2731 = vmatpush2.bf16.msra.mxu0 0
      %2732 = vmatprep.subr.bf16.mxu0 0
      %2733 = vmatpush2.bf16.msra.mxu0 0
      %2734 = vmatprep.subr.bf16.mxu0 0
      %2735 = vmatpush2.bf16.msra.mxu0 0
      %2736 = vmatprep.subr.bf16.mxu0 0
      %2737 = vmatpush2.bf16.msra.mxu0 0
      %2738 = vmatprep.subr.bf16.mxu0 0
      %2739 = vmatpush2.bf16.msra.mxu0 0
      %2740 = vmatprep.subr.bf16.mxu0 0
      %2741 = vmatpush2.bf16.msra.mxu0 0
      %2742 = vmatprep.mubr.bf16.mxu0 0
      %2743 = vmatmul.mubr.bf16.gmra.mxu0 %v2605
      %v2744 = vpop.f32.mrf.mxu0
      %v2745 = vadd.f32 %v2660, %v2744
      %v2746 = vpop.f32.mrf.mxu0
      %v2747 = vpop.f32.mrf.mxu0
      %v2748 = vadd.f32 %v2660, %v2747
      %v2749 = vpop.f32.mrf.mxu0
      %2750 = vmatprep.mubr.bf16.mxu0 0
      %2751 = vmatmul.mubr.bf16.gmra.mxu0 %v2606
      %v2752 = vpop.f32.mrf.mxu0
      %v2753 = vadd.f32 %v2660, %v2752
      %v2754 = vpop.f32.mrf.mxu0
      %v2755 = vpop.f32.mrf.mxu0
      %v2756 = vadd.f32 %v2660, %v2755
      %v2757 = vpop.f32.mrf.mxu0
      %2758 = vmatprep.mubr.bf16.mxu0 0
      %2759 = vmatmul.mubr.bf16.gmra.mxu0 %v2607
      %v2760 = vpop.f32.mrf.mxu0
      %v2761 = vadd.f32 %v2660, %v2760
      %v2762 = vpop.f32.mrf.mxu0
      %v2763 = vpop.f32.mrf.mxu0
      %v2764 = vadd.f32 %v2660, %v2763
      %v2765 = vpop.f32.mrf.mxu0
      %2766 = vmatprep.mubr.bf16.mxu0 0
      %2767 = vmatmul.mubr.bf16.gmra.mxu0 %v2608
      %v2768 = vpop.f32.mrf.mxu0
      %v2769 = vadd.f32 %v2660, %v2768
      %v2770 = vpop.f32.mrf.mxu0
      %v2771 = vpop.f32.mrf.mxu0
      %v2772 = vadd.f32 %v2660, %v2771
      %v2773 = vpop.f32.mrf.mxu0
      %2774 = vmatprep.mubr.bf16.mxu0 0
      %2775 = vmatmul.mubr.bf16.gmra.mxu0 %v2609
      %v2776 = vpop.f32.mrf.mxu0
      %v2777 = vadd.f32 %v2660, %v2776
      %v2778 = vpop.f32.mrf.mxu0
      %v2779 = vpop.f32.mrf.mxu0
      %v2780 = vadd.f32 %v2660, %v2779
      %v2781 = vpop.f32.mrf.mxu0
      %2782 = vmatprep.mubr.bf16.mxu0 0
      %2783 = vmatmul.mubr.bf16.gmra.mxu0 %v2610
      %v2784 = vpop.f32.mrf.mxu0
      %v2785 = vadd.f32 %v2660, %v2784
      %v2786 = vpop.f32.mrf.mxu0
      %v2787 = vpop.f32.mrf.mxu0
      %v2788 = vadd.f32 %v2660, %v2787
      %v2789 = vpop.f32.mrf.mxu0
      %2790 = vmatprep.mubr.bf16.mxu0 0
      %2791 = vmatmul.mubr.bf16.gmra.mxu0 %v2611
      %v2792 = vpop.f32.mrf.mxu0
      %v2793 = vadd.f32 %v2660, %v2792
      %v2794 = vpop.f32.mrf.mxu0
      %v2795 = vpop.f32.mrf.mxu0
      %v2796 = vadd.f32 %v2660, %v2795
      %v2797 = vpop.f32.mrf.mxu0
      %2798 = vmatprep.mubr.bf16.mxu0 0
      %2799 = vmatmul.mubr.bf16.gmra.mxu0 %v2612
      %v2800 = vpop.f32.mrf.mxu0
      %v2801 = vadd.f32 %v2660, %v2800
      %v2802 = vpop.f32.mrf.mxu0
      %v2803 = vpop.f32.mrf.mxu0
      %v2804 = vadd.f32 %v2660, %v2803
      %v2805 = vpop.f32.mrf.mxu0
      %2806 = vmatprep.mubr.bf16.mxu0 0
      %2807 = vmatmul.mubr.bf16.gmra.mxu0 %v2613
      %v2808 = vpop.f32.mrf.mxu0
      %v2809 = vadd.f32 %v2660, %v2808
      %v2810 = vpop.f32.mrf.mxu0
      %v2811 = vpop.f32.mrf.mxu0
      %v2812 = vadd.f32 %v2660, %v2811
      %v2813 = vpop.f32.mrf.mxu0
      %2814 = vmatprep.mubr.bf16.mxu0 0
      %2815 = vmatmul.mubr.bf16.gmra.mxu0 %v2614
      %v2816 = vpop.f32.mrf.mxu0
      %v2817 = vadd.f32 %v2660, %v2816
      %v2818 = vpop.f32.mrf.mxu0
      %v2819 = vpop.f32.mrf.mxu0
      %v2820 = vadd.f32 %v2660, %v2819
      %v2821 = vpop.f32.mrf.mxu0
      %2822 = vmatprep.mubr.bf16.mxu0 0
      %2823 = vmatmul.mubr.bf16.gmra.mxu0 %v2615
      %v2824 = vpop.f32.mrf.mxu0
      %v2825 = vadd.f32 %v2660, %v2824
      %v2826 = vpop.f32.mrf.mxu0
      %v2827 = vpop.f32.mrf.mxu0
      %v2828 = vadd.f32 %v2660, %v2827
      %v2829 = vpop.f32.mrf.mxu0
      %2830 = vmatprep.mubr.bf16.mxu0 0
      %2831 = vmatmul.mubr.bf16.gmra.mxu0 %v2616
      %v2832 = vpop.f32.mrf.mxu0
      %v2833 = vadd.f32 %v2660, %v2832
      %v2834 = vpop.f32.mrf.mxu0
      %v2835 = vpop.f32.mrf.mxu0
      %v2836 = vadd.f32 %v2660, %v2835
      %v2837 = vpop.f32.mrf.mxu0
      %2838 = vmatprep.mubr.bf16.mxu0 0
      %2839 = vmatmul.mubr.bf16.gmra.mxu0 %v2617
      %v2840 = vpop.f32.mrf.mxu0
      %v2841 = vadd.f32 %v2660, %v2840
      %v2842 = vpop.f32.mrf.mxu0
      %v2843 = vpop.f32.mrf.mxu0
      %v2844 = vadd.f32 %v2660, %v2843
      %v2845 = vpop.f32.mrf.mxu0
      %2846 = vmatprep.mubr.bf16.mxu0 0
      %2847 = vmatmul.mubr.bf16.gmra.mxu0 %v2618
      %v2848 = vpop.f32.mrf.mxu0
      %v2849 = vadd.f32 %v2660, %v2848
      %v2850 = vpop.f32.mrf.mxu0
      %v2851 = vpop.f32.mrf.mxu0
      %v2852 = vadd.f32 %v2660, %v2851
      %v2853 = vpop.f32.mrf.mxu0
      %2854 = vmatprep.mubr.bf16.mxu0 0
      %2855 = vmatmul.mubr.bf16.gmra.mxu0 %v2619
      %v2856 = vpop.f32.mrf.mxu0
      %v2857 = vadd.f32 %v2660, %v2856
      %v2858 = vpop.f32.mrf.mxu0
      %v2859 = vpop.f32.mrf.mxu0
      %v2860 = vadd.f32 %v2660, %v2859
      %v2861 = vpop.f32.mrf.mxu0
      %2862 = vmatprep.mubr.bf16.mxu0 0
      %2863 = vmatmul.mubr.bf16.gmra.mxu0 %v2620
      %v2864 = vpop.f32.mrf.mxu0
      %v2865 = vadd.f32 %v2660, %v2864
      %v2866 = vpop.f32.mrf.mxu0
      %v2867 = vpop.f32.mrf.mxu0
      %v2868 = vadd.f32 %v2660, %v2867
      %v2869 = vpop.f32.mrf.mxu0
      %2870 = vmatprep.mubr.bf16.mxu0 0
      %2871 = vmatmul.mubr.bf16.gmra.mxu0 %v2621
      %v2872 = vpop.f32.mrf.mxu0
      %v2873 = vadd.f32 %v2660, %v2872
      %v2874 = vpop.f32.mrf.mxu0
      %v2875 = vpop.f32.mrf.mxu0
      %v2876 = vadd.f32 %v2660, %v2875
      %v2877 = vpop.f32.mrf.mxu0
      %2878 = vmatprep.mubr.bf16.mxu0 0
      %2879 = vmatmul.mubr.bf16.gmra.mxu0 %v2622
      %v2880 = vpop.f32.mrf.mxu0
      %v2881 = vadd.f32 %v2660, %v2880
      %v2882 = vpop.f32.mrf.mxu0
      %v2883 = vpop.f32.mrf.mxu0
      %v2884 = vadd.f32 %v2660, %v2883
      %v2885 = vpop.f32.mrf.mxu0
      %2886 = vmatprep.mubr.bf16.mxu0 0
      %2887 = vmatmul.mubr.bf16.gmra.mxu0 %v2623
      %v2888 = vpop.f32.mrf.mxu0
      %v2889 = vadd.f32 %v2660, %v2888
      %v2890 = vpop.f32.mrf.mxu0
      %v2891 = vpop.f32.mrf.mxu0
      %v2892 = vadd.f32 %v2660, %v2891
      %v2893 = vpop.f32.mrf.mxu0
      %2894 = vmatprep.mubr.bf16.mxu0 0
      %2895 = vmatmul.mubr.bf16.gmra.mxu0 %v2624
      %v2896 = vpop.f32.mrf.mxu0
      %v2897 = vadd.f32 %v2660, %v2896
      %v2898 = vpop.f32.mrf.mxu0
      %v2899 = vpop.f32.mrf.mxu0
      %v2900 = vadd.f32 %v2660, %v2899
      %v2901 = vpop.f32.mrf.mxu0
      %2902 = vmatprep.mubr.bf16.mxu0 0
      %2903 = vmatmul.mubr.bf16.gmra.mxu0 %v2625
      %v2904 = vpop.f32.mrf.mxu0
      %v2905 = vadd.f32 %v2660, %v2904
      %v2906 = vpop.f32.mrf.mxu0
      %v2907 = vpop.f32.mrf.mxu0
      %v2908 = vadd.f32 %v2660, %v2907
      %v2909 = vpop.f32.mrf.mxu0
      %2910 = vmatprep.mubr.bf16.mxu0 0
      %2911 = vmatmul.mubr.bf16.gmra.mxu0 %v2626
      %v2912 = vpop.f32.mrf.mxu0
      %v2913 = vadd.f32 %v2660, %v2912
      %v2914 = vpop.f32.mrf.mxu0
      %v2915 = vpop.f32.mrf.mxu0
      %v2916 = vadd.f32 %v2660, %v2915
      %v2917 = vpop.f32.mrf.mxu0
      %2918 = vmatprep.mubr.bf16.mxu0 0
      %2919 = vmatmul.mubr.bf16.gmra.mxu0 %v2627
      %v2920 = vpop.f32.mrf.mxu0
      %v2921 = vadd.f32 %v2660, %v2920
      %v2922 = vpop.f32.mrf.mxu0
      %v2923 = vpop.f32.mrf.mxu0
      %v2924 = vadd.f32 %v2660, %v2923
      %v2925 = vpop.f32.mrf.mxu0
      %2926 = vmatprep.mubr.bf16.mxu0 0
      %2927 = vmatmul.mubr.bf16.gmra.mxu0 %v2628
      %v2928 = vpop.f32.mrf.mxu0
      %v2929 = vadd.f32 %v2660, %v2928
      %v2930 = vpop.f32.mrf.mxu0
      %v2931 = vpop.f32.mrf.mxu0
      %v2932 = vadd.f32 %v2660, %v2931
      %v2933 = vpop.f32.mrf.mxu0
      %2934 = vmatprep.mubr.bf16.mxu0 0
      %2935 = vmatmul.mubr.bf16.gmra.mxu0 %v2629
      %v2936 = vpop.f32.mrf.mxu0
      %v2937 = vadd.f32 %v2660, %v2936
      %v2938 = vpop.f32.mrf.mxu0
      %v2939 = vpop.f32.mrf.mxu0
      %v2940 = vadd.f32 %v2660, %v2939
      %v2941 = vpop.f32.mrf.mxu0
      %2942 = vmatprep.mubr.bf16.mxu0 0
      %2943 = vmatmul.mubr.bf16.gmra.mxu0 %v2630
      %v2944 = vpop.f32.mrf.mxu0
      %v2945 = vadd.f32 %v2660, %v2944
      %v2946 = vpop.f32.mrf.mxu0
      %v2947 = vpop.f32.mrf.mxu0
      %v2948 = vadd.f32 %v2660, %v2947
      %v2949 = vpop.f32.mrf.mxu0
      %2950 = vmatprep.mubr.bf16.mxu0 0
      %2951 = vmatmul.mubr.bf16.gmra.mxu0 %v2631
      %v2952 = vpop.f32.mrf.mxu0
      %v2953 = vadd.f32 %v2660, %v2952
      %v2954 = vpop.f32.mrf.mxu0
      %v2955 = vpop.f32.mrf.mxu0
      %v2956 = vadd.f32 %v2660, %v2955
      %v2957 = vpop.f32.mrf.mxu0
      %2958 = vmatprep.mubr.bf16.mxu0 0
      %2959 = vmatmul.mubr.bf16.gmra.mxu0 %v2632
      %v2960 = vpop.f32.mrf.mxu0
      %v2961 = vadd.f32 %v2660, %v2960
      %v2962 = vpop.f32.mrf.mxu0
      %v2963 = vpop.f32.mrf.mxu0
      %v2964 = vadd.f32 %v2660, %v2963
      %v2965 = vpop.f32.mrf.mxu0
      %2966 = vmatprep.mubr.bf16.mxu0 0
      %2967 = vmatmul.mubr.bf16.gmra.mxu0 %v2633
      %v2968 = vpop.f32.mrf.mxu0
      %v2969 = vadd.f32 %v2660, %v2968
      %v2970 = vpop.f32.mrf.mxu0
      %v2971 = vpop.f32.mrf.mxu0
      %v2972 = vadd.f32 %v2660, %v2971
      %v2973 = vpop.f32.mrf.mxu0
      %2974 = vmatprep.mubr.bf16.mxu0 0
      %2975 = vmatmul.mubr.bf16.gmra.mxu0 %v2634
      %v2976 = vpop.f32.mrf.mxu0
      %v2977 = vadd.f32 %v2660, %v2976
      %v2978 = vpop.f32.mrf.mxu0
      %v2979 = vpop.f32.mrf.mxu0
      %v2980 = vadd.f32 %v2660, %v2979
      %v2981 = vpop.f32.mrf.mxu0
      %2982 = vmatprep.mubr.bf16.mxu0 0
      %2983 = vmatmul.mubr.bf16.gmra.mxu0 %v2635
      %v2984 = vpop.f32.mrf.mxu0
      %v2985 = vadd.f32 %v2660, %v2984
      %v2986 = vpop.f32.mrf.mxu0
      %v2987 = vpop.f32.mrf.mxu0
      %v2988 = vadd.f32 %v2660, %v2987
      %v2989 = vpop.f32.mrf.mxu0
      %2990 = vmatprep.mubr.bf16.mxu0 0
      %2991 = vmatmul.mubr.bf16.gmra.mxu0 %v2636
      %v2992 = vpop.f32.mrf.mxu0
      %v2993 = vadd.f32 %v2660, %v2992
      %v2994 = vpop.f32.mrf.mxu0
      %v2995 = vpop.f32.mrf.mxu0
      %v2996 = vadd.f32 %v2660, %v2995
      %v2997 = vpop.f32.mrf.mxu0
      %2998 = vdwg.mxu0
      %v2999 = vtanh.pop %v2745
      %v3000 = vtanh.pop %v2748
      %v3001 = vtanh.pop %v2753
      %v3002 = vtanh.pop %v2756
      %v3003 = vtanh.pop %v2761
      %v3004 = vtanh.pop %v2764
      %v3005 = vtanh.pop %v2769
      %v3006 = vtanh.pop %v2772
      %v3007 = vtanh.pop %v2777
      %v3008 = vtanh.pop %v2780
      %v3009 = vtanh.pop %v2785
      %v3010 = vtanh.pop %v2788
      %v3011 = vtanh.pop %v2793
      %v3012 = vtanh.pop %v2796
      %v3013 = vtanh.pop %v2801
      %v3014 = vtanh.pop %v2804
      %v3015 = vtanh.pop %v2809
      %v3016 = vtanh.pop %v2812
      %v3017 = vtanh.pop %v2817
      %v3018 = vtanh.pop %v2820
      %v3019 = vtanh.pop %v2825
      %v3020 = vtanh.pop %v2828
      %v3021 = vtanh.pop %v2833
      %v3022 = vtanh.pop %v2836
      %v3023 = vtanh.pop %v2841
      %v3024 = vtanh.pop %v2844
      %v3025 = vtanh.pop %v2849
      %v3026 = vtanh.pop %v2852
      %v3027 = vtanh.pop %v2857
      %v3028 = vtanh.pop %v2860
      %v3029 = vtanh.pop %v2865
      %v3030 = vtanh.pop %v2868
      %v3031 = vtanh.pop %v2873
      %v3032 = vtanh.pop %v2876
      %v3033 = vtanh.pop %v2881
      %v3034 = vtanh.pop %v2884
      %v3035 = vtanh.pop %v2889
      %v3036 = vtanh.pop %v2892
      %v3037 = vtanh.pop %v2897
      %v3038 = vtanh.pop %v2900
      %v3039 = vtanh.pop %v2905
      %v3040 = vtanh.pop %v2908
      %v3041 = vtanh.pop %v2913
      %v3042 = vtanh.pop %v2916
      %v3043 = vtanh.pop %v2921
      %v3044 = vtanh.pop %v2924
      %v3045 = vtanh.pop %v2929
      %v3046 = vtanh.pop %v2932
      %v3047 = vtanh.pop %v2937
      %v3048 = vtanh.pop %v2940
      %v3049 = vtanh.pop %v2945
      %v3050 = vtanh.pop %v2948
      %v3051 = vtanh.pop %v2953
      %v3052 = vtanh.pop %v2956
      %v3053 = vtanh.pop %v2961
      %v3054 = vtanh.pop %v2964
      %v3055 = vtanh.pop %v2969
      %v3056 = vtanh.pop %v2972
      %v3057 = vtanh.pop %v2977
      %v3058 = vtanh.pop %v2980
      %v3059 = vtanh.pop %v2985
      %v3060 = vtanh.pop %v2988
      %v3061 = vtanh.pop %v2993
      %v3062 = vtanh.pop %v2996
      %v3063 = vpack.c.bf16 %v3000, %v2999
      %v3064 = vpack.c.bf16 %v3002, %v3001
      %v3065 = vpack.c.bf16 %v3004, %v3003
      %v3066 = vpack.c.bf16 %v3006, %v3005
      %v3067 = vpack.c.bf16 %v3008, %v3007
      %v3068 = vpack.c.bf16 %v3010, %v3009
      %v3069 = vpack.c.bf16 %v3012, %v3011
      %v3070 = vpack.c.bf16 %v3014, %v3013
      %v3071 = vpack.c.bf16 %v3016, %v3015
      %v3072 = vpack.c.bf16 %v3018, %v3017
      %v3073 = vpack.c.bf16 %v3020, %v3019
      %v3074 = vpack.c.bf16 %v3022, %v3021
      %v3075 = vpack.c.bf16 %v3024, %v3023
      %v3076 = vpack.c.bf16 %v3026, %v3025
      %v3077 = vpack.c.bf16 %v3028, %v3027
      %v3078 = vpack.c.bf16 %v3030, %v3029
      %v3079 = vpack.c.bf16 %v3032, %v3031
      %v3080 = vpack.c.bf16 %v3034, %v3033
      %v3081 = vpack.c.bf16 %v3036, %v3035
      %v3082 = vpack.c.bf16 %v3038, %v3037
      %v3083 = vpack.c.bf16 %v3040, %v3039
      %v3084 = vpack.c.bf16 %v3042, %v3041
      %v3085 = vpack.c.bf16 %v3044, %v3043
      %v3086 = vpack.c.bf16 %v3046, %v3045
      %v3087 = vpack.c.bf16 %v3048, %v3047
      %v3088 = vpack.c.bf16 %v3050, %v3049
      %v3089 = vpack.c.bf16 %v3052, %v3051
      %v3090 = vpack.c.bf16 %v3054, %v3053
      %v3091 = vpack.c.bf16 %v3056, %v3055
      %v3092 = vpack.c.bf16 %v3058, %v3057
      %v3093 = vpack.c.bf16 %v3060, %v3059
      %v3094 = vpack.c.bf16 %v3062, %v3061
      %v3095 = vunpack.c.l.bf16 %v3063
      %v3096 = vunpack.c.h.bf16 %v3063
      %v3097 = vunpack.c.l.bf16 %v3064
      %v3098 = vunpack.c.h.bf16 %v3064
      %v3099 = vunpack.c.l.bf16 %v3065
      %v3100 = vunpack.c.h.bf16 %v3065
      %v3101 = vunpack.c.l.bf16 %v3066
      %v3102 = vunpack.c.h.bf16 %v3066
      %v3103 = vunpack.c.l.bf16 %v3067
      %v3104 = vunpack.c.h.bf16 %v3067
      %v3105 = vunpack.c.l.bf16 %v3068
      %v3106 = vunpack.c.h.bf16 %v3068
      %v3107 = vunpack.c.l.bf16 %v3069
      %v3108 = vunpack.c.h.bf16 %v3069
      %v3109 = vunpack.c.l.bf16 %v3070
      %v3110 = vunpack.c.h.bf16 %v3070
      %v3111 = vunpack.c.l.bf16 %v3071
      %v3112 = vunpack.c.h.bf16 %v3071
      %v3113 = vunpack.c.l.bf16 %v3072
      %v3114 = vunpack.c.h.bf16 %v3072
      %v3115 = vunpack.c.l.bf16 %v3073
      %v3116 = vunpack.c.h.bf16 %v3073
      %v3117 = vunpack.c.l.bf16 %v3074
      %v3118 = vunpack.c.h.bf16 %v3074
      %v3119 = vunpack.c.l.bf16 %v3075
      %v3120 = vunpack.c.h.bf16 %v3075
      %v3121 = vunpack.c.l.bf16 %v3076
      %v3122 = vunpack.c.h.bf16 %v3076
      %v3123 = vunpack.c.l.bf16 %v3077
      %v3124 = vunpack.c.h.bf16 %v3077
      %v3125 = vunpack.c.l.bf16 %v3078
      %v3126 = vunpack.c.h.bf16 %v3078
      %v3127 = vunpack.c.l.bf16 %v3079
      %v3128 = vunpack.c.h.bf16 %v3079
      %v3129 = vunpack.c.l.bf16 %v3080
      %v3130 = vunpack.c.h.bf16 %v3080
      %v3131 = vunpack.c.l.bf16 %v3081
      %v3132 = vunpack.c.h.bf16 %v3081
      %v3133 = vunpack.c.l.bf16 %v3082
      %v3134 = vunpack.c.h.bf16 %v3082
      %v3135 = vunpack.c.l.bf16 %v3083
      %v3136 = vunpack.c.h.bf16 %v3083
      %v3137 = vunpack.c.l.bf16 %v3084
      %v3138 = vunpack.c.h.bf16 %v3084
      %v3139 = vunpack.c.l.bf16 %v3085
      %v3140 = vunpack.c.h.bf16 %v3085
      %v3141 = vunpack.c.l.bf16 %v3086
      %v3142 = vunpack.c.h.bf16 %v3086
      %v3143 = vunpack.c.l.bf16 %v3087
      %v3144 = vunpack.c.h.bf16 %v3087
      %v3145 = vunpack.c.l.bf16 %v3088
      %v3146 = vunpack.c.h.bf16 %v3088
      %v3147 = vunpack.c.l.bf16 %v3089
      %v3148 = vunpack.c.h.bf16 %v3089
      %v3149 = vunpack.c.l.bf16 %v3090
      %v3150 = vunpack.c.h.bf16 %v3090
      %v3151 = vunpack.c.l.bf16 %v3091
      %v3152 = vunpack.c.h.bf16 %v3091
      %v3153 = vunpack.c.l.bf16 %v3092
      %v3154 = vunpack.c.h.bf16 %v3092
      %v3155 = vunpack.c.l.bf16 %v3093
      %v3156 = vunpack.c.h.bf16 %v3093
      %v3157 = vunpack.c.l.bf16 %v3094
      %v3158 = vunpack.c.h.bf16 %v3094
      %v3159 = vld [vmem:[%s5] sm:$0x1]
      %v3161 = vlaneseq
      %v3162 = vshrl.u32 %v3161, 7
      %v3163 = vsub.s32 0, %v3162
      %v3164 = vrot.slane %v3159, %v3163
      %v3166 = vmul.f32 %v3095, %v3164
      %v3167 = vmul.f32 %v3096, %v3164
      %v3168 = vmul.f32 %v3097, %v3164
      %v3169 = vmul.f32 %v3098, %v3164
      %v3170 = vmul.f32 %v3099, %v3164
      %v3171 = vmul.f32 %v3100, %v3164
      %v3172 = vmul.f32 %v3101, %v3164
      %v3173 = vmul.f32 %v3102, %v3164
      %v3174 = vmul.f32 %v3103, %v3164
      %v3175 = vmul.f32 %v3104, %v3164
      %v3176 = vmul.f32 %v3105, %v3164
      %v3177 = vmul.f32 %v3106, %v3164
      %v3178 = vmul.f32 %v3107, %v3164
      %v3179 = vmul.f32 %v3108, %v3164
      %v3180 = vmul.f32 %v3109, %v3164
      %v3181 = vmul.f32 %v3110, %v3164
      %v3182 = vmul.f32 %v3111, %v3164
      %v3183 = vmul.f32 %v3112, %v3164
      %v3184 = vmul.f32 %v3113, %v3164
      %v3185 = vmul.f32 %v3114, %v3164
      %v3186 = vmul.f32 %v3115, %v3164
      %v3187 = vmul.f32 %v3116, %v3164
      %v3188 = vmul.f32 %v3117, %v3164
      %v3189 = vmul.f32 %v3118, %v3164
      %v3190 = vmul.f32 %v3119, %v3164
      %v3191 = vmul.f32 %v3120, %v3164
      %v3192 = vmul.f32 %v3121, %v3164
      %v3193 = vmul.f32 %v3122, %v3164
      %v3194 = vmul.f32 %v3123, %v3164
      %v3195 = vmul.f32 %v3124, %v3164
      %v3196 = vmul.f32 %v3125, %v3164
      %v3197 = vmul.f32 %v3126, %v3164
      %v3198 = vmul.f32 %v3127, %v3164
      %v3199 = vmul.f32 %v3128, %v3164
      %v3200 = vmul.f32 %v3129, %v3164
      %v3201 = vmul.f32 %v3130, %v3164
      %v3202 = vmul.f32 %v3131, %v3164
      %v3203 = vmul.f32 %v3132, %v3164
      %v3204 = vmul.f32 %v3133, %v3164
      %v3205 = vmul.f32 %v3134, %v3164
      %v3206 = vmul.f32 %v3135, %v3164
      %v3207 = vmul.f32 %v3136, %v3164
      %v3208 = vmul.f32 %v3137, %v3164
      %v3209 = vmul.f32 %v3138, %v3164
      %v3210 = vmul.f32 %v3139, %v3164
      %v3211 = vmul.f32 %v3140, %v3164
      %v3212 = vmul.f32 %v3141, %v3164
      %v3213 = vmul.f32 %v3142, %v3164
      %v3214 = vmul.f32 %v3143, %v3164
      %v3215 = vmul.f32 %v3144, %v3164
      %v3216 = vmul.f32 %v3145, %v3164
      %v3217 = vmul.f32 %v3146, %v3164
      %v3218 = vmul.f32 %v3147, %v3164
      %v3219 = vmul.f32 %v3148, %v3164
      %v3220 = vmul.f32 %v3149, %v3164
      %v3221 = vmul.f32 %v3150, %v3164
      %v3222 = vmul.f32 %v3151, %v3164
      %v3223 = vmul.f32 %v3152, %v3164
      %v3224 = vmul.f32 %v3153, %v3164
      %v3225 = vmul.f32 %v3154, %v3164
      %v3226 = vmul.f32 %v3155, %v3164
      %v3227 = vmul.f32 %v3156, %v3164
      %v3228 = vmul.f32 %v3157, %v3164
      %v3229 = vmul.f32 %v3158, %v3164
      %3230 = vadd.xlane.f32.xlu0 %v3166
      %v3231 = vpop.xlane.xlu0 %3230
      %3232 = vadd.xlane.f32.xlu0 %v3167
      %v3233 = vpop.xlane.xlu0 %3232
      %3234 = vadd.xlane.f32.xlu0 %v3168
      %v3235 = vpop.xlane.xlu0 %3234
      %3236 = vadd.xlane.f32.xlu0 %v3169
      %v3237 = vpop.xlane.xlu0 %3236
      %3238 = vadd.xlane.f32.xlu0 %v3170
      %v3239 = vpop.xlane.xlu0 %3238
      %3240 = vadd.xlane.f32.xlu0 %v3171
      %v3241 = vpop.xlane.xlu0 %3240
      %3242 = vadd.xlane.f32.xlu0 %v3172
      %v3243 = vpop.xlane.xlu0 %3242
      %3244 = vadd.xlane.f32.xlu0 %v3173
      %v3245 = vpop.xlane.xlu0 %3244
      %3246 = vadd.xlane.f32.xlu0 %v3174
      %v3247 = vpop.xlane.xlu0 %3246
      %3248 = vadd.xlane.f32.xlu0 %v3175
      %v3249 = vpop.xlane.xlu0 %3248
      %3250 = vadd.xlane.f32.xlu0 %v3176
      %v3251 = vpop.xlane.xlu0 %3250
      %3252 = vadd.xlane.f32.xlu0 %v3177
      %v3253 = vpop.xlane.xlu0 %3252
      %3254 = vadd.xlane.f32.xlu0 %v3178
      %v3255 = vpop.xlane.xlu0 %3254
      %3256 = vadd.xlane.f32.xlu0 %v3179
      %v3257 = vpop.xlane.xlu0 %3256
      %3258 = vadd.xlane.f32.xlu0 %v3180
      %v3259 = vpop.xlane.xlu0 %3258
      %3260 = vadd.xlane.f32.xlu0 %v3181
      %v3261 = vpop.xlane.xlu0 %3260
      %3262 = vadd.xlane.f32.xlu0 %v3182
      %v3263 = vpop.xlane.xlu0 %3262
      %3264 = vadd.xlane.f32.xlu0 %v3183
      %v3265 = vpop.xlane.xlu0 %3264
      %3266 = vadd.xlane.f32.xlu0 %v3184
      %v3267 = vpop.xlane.xlu0 %3266
      %3268 = vadd.xlane.f32.xlu0 %v3185
      %v3269 = vpop.xlane.xlu0 %3268
      %3270 = vadd.xlane.f32.xlu0 %v3186
      %v3271 = vpop.xlane.xlu0 %3270
      %3272 = vadd.xlane.f32.xlu0 %v3187
      %v3273 = vpop.xlane.xlu0 %3272
      %3274 = vadd.xlane.f32.xlu0 %v3188
      %v3275 = vpop.xlane.xlu0 %3274
      %3276 = vadd.xlane.f32.xlu0 %v3189
      %v3277 = vpop.xlane.xlu0 %3276
      %3278 = vadd.xlane.f32.xlu0 %v3190
      %v3279 = vpop.xlane.xlu0 %3278
      %3280 = vadd.xlane.f32.xlu0 %v3191
      %v3281 = vpop.xlane.xlu0 %3280
      %3282 = vadd.xlane.f32.xlu0 %v3192
      %v3283 = vpop.xlane.xlu0 %3282
      %3284 = vadd.xlane.f32.xlu0 %v3193
      %v3285 = vpop.xlane.xlu0 %3284
      %3286 = vadd.xlane.f32.xlu0 %v3194
      %v3287 = vpop.xlane.xlu0 %3286
      %3288 = vadd.xlane.f32.xlu0 %v3195
      %v3289 = vpop.xlane.xlu0 %3288
      %3290 = vadd.xlane.f32.xlu0 %v3196
      %v3291 = vpop.xlane.xlu0 %3290
      %3292 = vadd.xlane.f32.xlu0 %v3197
      %v3293 = vpop.xlane.xlu0 %3292
      %3294 = vadd.xlane.f32.xlu0 %v3198
      %v3295 = vpop.xlane.xlu0 %3294
      %3296 = vadd.xlane.f32.xlu0 %v3199
      %v3297 = vpop.xlane.xlu0 %3296
      %3298 = vadd.xlane.f32.xlu0 %v3200
      %v3299 = vpop.xlane.xlu0 %3298
      %3300 = vadd.xlane.f32.xlu0 %v3201
      %v3301 = vpop.xlane.xlu0 %3300
      %3302 = vadd.xlane.f32.xlu0 %v3202
      %v3303 = vpop.xlane.xlu0 %3302
      %3304 = vadd.xlane.f32.xlu0 %v3203
      %v3305 = vpop.xlane.xlu0 %3304
      %3306 = vadd.xlane.f32.xlu0 %v3204
      %v3307 = vpop.xlane.xlu0 %3306
      %3308 = vadd.xlane.f32.xlu0 %v3205
      %v3309 = vpop.xlane.xlu0 %3308
      %3310 = vadd.xlane.f32.xlu0 %v3206
      %v3311 = vpop.xlane.xlu0 %3310
      %3312 = vadd.xlane.f32.xlu0 %v3207
      %v3313 = vpop.xlane.xlu0 %3312
      %3314 = vadd.xlane.f32.xlu0 %v3208
      %v3315 = vpop.xlane.xlu0 %3314
      %3316 = vadd.xlane.f32.xlu0 %v3209
      %v3317 = vpop.xlane.xlu0 %3316
      %3318 = vadd.xlane.f32.xlu0 %v3210
      %v3319 = vpop.xlane.xlu0 %3318
      %3320 = vadd.xlane.f32.xlu0 %v3211
      %v3321 = vpop.xlane.xlu0 %3320
      %3322 = vadd.xlane.f32.xlu0 %v3212
      %v3323 = vpop.xlane.xlu0 %3322
      %3324 = vadd.xlane.f32.xlu0 %v3213
      %v3325 = vpop.xlane.xlu0 %3324
      %3326 = vadd.xlane.f32.xlu0 %v3214
      %v3327 = vpop.xlane.xlu0 %3326
      %3328 = vadd.xlane.f32.xlu0 %v3215
      %v3329 = vpop.xlane.xlu0 %3328
      %3330 = vadd.xlane.f32.xlu0 %v3216
      %v3331 = vpop.xlane.xlu0 %3330
      %3332 = vadd.xlane.f32.xlu0 %v3217
      %v3333 = vpop.xlane.xlu0 %3332
      %3334 = vadd.xlane.f32.xlu0 %v3218
      %v3335 = vpop.xlane.xlu0 %3334
      %3336 = vadd.xlane.f32.xlu0 %v3219
      %v3337 = vpop.xlane.xlu0 %3336
      %3338 = vadd.xlane.f32.xlu0 %v3220
      %v3339 = vpop.xlane.xlu0 %3338
      %3340 = vadd.xlane.f32.xlu0 %v3221
      %v3341 = vpop.xlane.xlu0 %3340
      %3342 = vadd.xlane.f32.xlu0 %v3222
      %v3343 = vpop.xlane.xlu0 %3342
      %3344 = vadd.xlane.f32.xlu0 %v3223
      %v3345 = vpop.xlane.xlu0 %3344
      %3346 = vadd.xlane.f32.xlu0 %v3224
      %v3347 = vpop.xlane.xlu0 %3346
      %3348 = vadd.xlane.f32.xlu0 %v3225
      %v3349 = vpop.xlane.xlu0 %3348
      %3350 = vadd.xlane.f32.xlu0 %v3226
      %v3351 = vpop.xlane.xlu0 %3350
      %3352 = vadd.xlane.f32.xlu0 %v3227
      %v3353 = vpop.xlane.xlu0 %3352
      %3354 = vadd.xlane.f32.xlu0 %v3228
      %v3355 = vpop.xlane.xlu0 %3354
      %3356 = vadd.xlane.f32.xlu0 %v3229
      %v3357 = vpop.xlane.xlu0 %3356
      %vm3358 = vcmask 7168
      %3359 = vst.msk [vmem:[%s253] sm:$0xff] %vm3358, %v3231
      %3360 = vst.msk [vmem:[%s253 + $0x8] sm:$0xff] %vm3358, %v3233
      %3361 = vst.msk [vmem:[%s253 + $0x10] sm:$0xff] %vm3358, %v3235
      %3362 = vst.msk [vmem:[%s253 + $0x18] sm:$0xff] %vm3358, %v3237
      %3363 = vst.msk [vmem:[%s253 + $0x20] sm:$0xff] %vm3358, %v3239
      %3364 = vst.msk [vmem:[%s253 + $0x28] sm:$0xff] %vm3358, %v3241
      %3365 = vst.msk [vmem:[%s253 + $0x30] sm:$0xff] %vm3358, %v3243
      %3366 = vst.msk [vmem:[%s253 + $0x38] sm:$0xff] %vm3358, %v3245
      %3367 = vst.msk [vmem:[%s253 + $0x40] sm:$0xff] %vm3358, %v3247
      %3368 = vst.msk [vmem:[%s253 + $0x48] sm:$0xff] %vm3358, %v3249
      %3369 = vst.msk [vmem:[%s253 + $0x50] sm:$0xff] %vm3358, %v3251
      %3370 = vst.msk [vmem:[%s253 + $0x58] sm:$0xff] %vm3358, %v3253
      %3371 = vst.msk [vmem:[%s253 + $0x60] sm:$0xff] %vm3358, %v3255
      %3372 = vst.msk [vmem:[%s253 + $0x68] sm:$0xff] %vm3358, %v3257
      %3373 = vst.msk [vmem:[%s253 + $0x70] sm:$0xff] %vm3358, %v3259
      %3374 = vst.msk [vmem:[%s253 + $0x78] sm:$0xff] %vm3358, %v3261
      %3375 = vst.msk [vmem:[%s253 + $0x80] sm:$0xff] %vm3358, %v3263
      %3376 = vst.msk [vmem:[%s253 + $0x88] sm:$0xff] %vm3358, %v3265
      %3377 = vst.msk [vmem:[%s253 + $0x90] sm:$0xff] %vm3358, %v3267
      %3378 = vst.msk [vmem:[%s253 + $0x98] sm:$0xff] %vm3358, %v3269
      %3379 = vst.msk [vmem:[%s253 + $0xa0] sm:$0xff] %vm3358, %v3271
      %3380 = vst.msk [vmem:[%s253 + $0xa8] sm:$0xff] %vm3358, %v3273
      %3381 = vst.msk [vmem:[%s253 + $0xb0] sm:$0xff] %vm3358, %v3275
      %3382 = vst.msk [vmem:[%s253 + $0xb8] sm:$0xff] %vm3358, %v3277
      %3383 = vst.msk [vmem:[%s253 + $0xc0] sm:$0xff] %vm3358, %v3279
      %3384 = vst.msk [vmem:[%s253 + $0xc8] sm:$0xff] %vm3358, %v3281
      %3385 = vst.msk [vmem:[%s253 + $0xd0] sm:$0xff] %vm3358, %v3283
      %3386 = vst.msk [vmem:[%s253 + $0xd8] sm:$0xff] %vm3358, %v3285
      %3387 = vst.msk [vmem:[%s253 + $0xe0] sm:$0xff] %vm3358, %v3287
      %3388 = vst.msk [vmem:[%s253 + $0xe8] sm:$0xff] %vm3358, %v3289
      %3389 = vst.msk [vmem:[%s253 + $0xf0] sm:$0xff] %vm3358, %v3291
      %3390 = vst.msk [vmem:[%s253 + $0xf8] sm:$0xff] %vm3358, %v3293
      %3391 = vst.msk [vmem:[%s253 + $0x100] sm:$0xff] %vm3358, %v3295
      %3392 = vst.msk [vmem:[%s253 + $0x108] sm:$0xff] %vm3358, %v3297
      %3393 = vst.msk [vmem:[%s253 + $0x110] sm:$0xff] %vm3358, %v3299
      %3394 = vst.msk [vmem:[%s253 + $0x118] sm:$0xff] %vm3358, %v3301
      %3395 = vst.msk [vmem:[%s253 + $0x120] sm:$0xff] %vm3358, %v3303
      %3396 = vst.msk [vmem:[%s253 + $0x128] sm:$0xff] %vm3358, %v3305
      %3397 = vst.msk [vmem:[%s253 + $0x130] sm:$0xff] %vm3358, %v3307
      %3398 = vst.msk [vmem:[%s253 + $0x138] sm:$0xff] %vm3358, %v3309
      %3399 = vst.msk [vmem:[%s253 + $0x140] sm:$0xff] %vm3358, %v3311
      %3400 = vst.msk [vmem:[%s253 + $0x148] sm:$0xff] %vm3358, %v3313
      %3401 = vst.msk [vmem:[%s253 + $0x150] sm:$0xff] %vm3358, %v3315
      %3402 = vst.msk [vmem:[%s253 + $0x158] sm:$0xff] %vm3358, %v3317
      %3403 = vst.msk [vmem:[%s253 + $0x160] sm:$0xff] %vm3358, %v3319
      %3404 = vst.msk [vmem:[%s253 + $0x168] sm:$0xff] %vm3358, %v3321
      %3405 = vst.msk [vmem:[%s253 + $0x170] sm:$0xff] %vm3358, %v3323
      %3406 = vst.msk [vmem:[%s253 + $0x178] sm:$0xff] %vm3358, %v3325
      %3407 = vst.msk [vmem:[%s253 + $0x180] sm:$0xff] %vm3358, %v3327
      %3408 = vst.msk [vmem:[%s253 + $0x188] sm:$0xff] %vm3358, %v3329
      %3409 = vst.msk [vmem:[%s253 + $0x190] sm:$0xff] %vm3358, %v3331
      %3410 = vst.msk [vmem:[%s253 + $0x198] sm:$0xff] %vm3358, %v3333
      %3411 = vst.msk [vmem:[%s253 + $0x1a0] sm:$0xff] %vm3358, %v3335
      %3412 = vst.msk [vmem:[%s253 + $0x1a8] sm:$0xff] %vm3358, %v3337
      %3413 = vst.msk [vmem:[%s253 + $0x1b0] sm:$0xff] %vm3358, %v3339
      %3414 = vst.msk [vmem:[%s253 + $0x1b8] sm:$0xff] %vm3358, %v3341
      %3415 = vst.msk [vmem:[%s253 + $0x1c0] sm:$0xff] %vm3358, %v3343
      %3416 = vst.msk [vmem:[%s253 + $0x1c8] sm:$0xff] %vm3358, %v3345
      %3417 = vst.msk [vmem:[%s253 + $0x1d0] sm:$0xff] %vm3358, %v3347
      %3418 = vst.msk [vmem:[%s253 + $0x1d8] sm:$0xff] %vm3358, %v3349
      %3419 = vst.msk [vmem:[%s253 + $0x1e0] sm:$0xff] %vm3358, %v3351
      %3420 = vst.msk [vmem:[%s253 + $0x1e8] sm:$0xff] %vm3358, %v3353
      %3421 = vst.msk [vmem:[%s253 + $0x1f0] sm:$0xff] %vm3358, %v3355
      %3422 = vst.msk [vmem:[%s253 + $0x1f8] sm:$0xff] %vm3358, %v3357
      %s3423 = smul.u32 64, %s17
      %p3424 = scmp.lt.s32.totalorder %s3423, 127
      %s3425 = scalar_select %p3424, %s3423, 127
      %s3426 = smul.addr %s3425, 8
      %s3427 = scalar_lea.vmem %s6, %s3426
      // Predicated region
      $region45: #{tpu_custom_call.1} parent=43 // pred_check
        %p3428 = pneg %p166
      $region46: #{tpu_custom_call.1} parent=43 // pred_check_branch
        %3430 = sbr.rel (%p3428) target = $region48
      $region47: #{tpu_custom_call.1} parent=43 // pred_region
        %s3431 = smul.u32 64, %s17
      $region48: #{tpu_custom_call.1} parent=43 // pred_fallthru
        _
    $region44: #{tpu_custom_call.1} parent=5 // pred_fallthru
      _
    %p3432 = scmp.le.s32.totalorder 2, %s12
    // Predicated region
    $region49: #{tpu_custom_call.1} parent=5 // pred_check
      %p3433 = pneg %p3432
    $region50: #{tpu_custom_call.1} parent=5 // pred_check_branch
      %3435 = sbr.rel (%p3433) target = $region52
    $region51: #{tpu_custom_call.1} parent=5 // pred_region
      %s3436 = ssub.s32 %s12, 2
      // Predicated region
      $region53: #{tpu_custom_call.1} parent=51 // pred_check
        %p3437 = pneg %p172
      $region54: #{tpu_custom_call.1} parent=51 // pred_check_branch
        %3439 = sbr.rel (%p3437) target = $region56
      $region55: #{tpu_custom_call.1} parent=51 // pred_region
        %s3440 = smul.u32 64, %s18
        %p3441 = scmp.lt.s32.totalorder %s3440, 127
        %s3442 = scalar_select %p3441, %s3440, 127
        %s3443 = smul.addr %s3442, 8
        %s3444 = scalar_lea.vmem %s6, %s3443
      $region56: #{tpu_custom_call.1} parent=51 // pred_fallthru
        _
    $region52: #{tpu_custom_call.1} parent=5 // pred_fallthru
      _
  $region6: #{tpu_custom_call.1} parent=0 // loop_footer
    %s16 = sadd.s32 1, %s12
  $region7: #{tpu_custom_call.1} parent=0 // loop_footer_branch
    %11 = sbr.rel target = $region3
  $region8: #{tpu_custom_call.1} parent=0 // loop_exit
    _

</llo_original>
